<compile_context>
chip_gen: v7x
topology: tpu7x:2x2x1
jax: 0.10.0
libtpu: 0.0.40
codegen_flags: <defaults>
</compile_context>

<pallas_src>
import jax
import jax.numpy as jnp
from jax import lax
from jax.experimental import pallas as pl
from jax.experimental.pallas import tpu as pltpu

INPUT_SIZE = 28
HIDDEN = 64
NUM_LAYERS = 4
OUT_DIM = 10

# kernel gate positions -> PyTorch gate slots (PyTorch order is i, f, g, o)
GATE_ORDER = (0, 1, 3, 2)  # packed as [i, f, o, g]


def lstm_kernel(x_ref, wih_ref, whh_ref, b_ref, wout_ref, bout_ref,
                out_ref, seq_scr, gates_scr):
    """4-layer LSTM + final Linear, all in VMEM.

    x_ref    : (T, B, 64)       time-major, feature-padded input
    wih_ref  : (L, 64, 256)     fused input->gate weights  (in, 4H), gates [i,f,o,g]
    whh_ref  : (L, 64, 256)     fused hidden->gate weights (H, 4H),  gates [i,f,o,g]
    b_ref    : (L, 1, 256)      fused combined bias (b_ih + b_hh)
    wout_ref : (64, 10)         final linear weight (transposed)
    bout_ref : (1, 10)          final linear bias
    out_ref  : (B, 10)
    seq_scr  : (T, B, 64)       current layer's input sequence, overwritten in
                                place with its output (slot t never re-read
                                within a layer).
    gates_scr: (T, B, 256)      hoisted input-projection (x_t @ Wx + b) per layer
    """
    T, B, H = x_ref.shape
    G4 = 4 * H

    # Load the (padded) input sequence into the working scratch buffer.
    seq_scr[...] = x_ref[...]

    for layer in range(NUM_LAYERS):
        w_x = wih_ref[layer]   # (64, 256)
        w_h = whh_ref[layer]   # (64, 256)
        b = b_ref[layer]       # (1, 256)

        # Hoist input projection out of the recurrence:
        # one well-filled (T*B, 64) x (64, 256) matmul + bias.
        seq_flat = seq_scr[...].reshape(T * B, H)
        gx = jnp.dot(seq_flat, w_x, preferred_element_type=jnp.float32) + b
        gates_scr[...] = gx.reshape(T, B, G4)

        def step(t, carry):
            h, c = carry
            # Only the h -> gates matmul stays on the serial chain.
            gates = gates_scr[t] + jnp.dot(
                h, w_h, preferred_element_type=jnp.float32)   # (B, 256)

            # gate layout [i, f, o, g]: one dense sigmoid, one dense tanh.
            sig = jax.nn.sigmoid(gates[:, :3 * H])             # (B, 192)
            i = sig[:, :H]
            f = sig[:, H:2 * H]
            o = sig[:, 2 * H:3 * H]
            g = jnp.tanh(gates[:, 3 * H:])                     # (B, 64)

            c_new = f * c + i * g
            h_new = o * jnp.tanh(c_new)

            # Overwrite in place: becomes next layer's input at time t.
            seq_scr[t] = h_new
            return (h_new, c_new)

        lax.fori_loop(
            0, T, step,
            (jnp.zeros((B, H), jnp.float32), jnp.zeros((B, H), jnp.float32)),
            unroll=True)

    # r_out[:, -1, :] of the top layer -> Linear(64, 10)
    h_last = seq_scr[T - 1]  # (B, 64)
    out_ref[...] = (jnp.dot(h_last, wout_ref[...],
                            preferred_element_type=jnp.float32)
                    + bout_ref[...])


def make_params(key):
    """PyTorch-style LSTM/Linear params, uniform(-1/sqrt(H), 1/sqrt(H))."""
    H = HIDDEN
    stdv = 1.0 / float(H) ** 0.5
    keys = jax.random.split(key, NUM_LAYERS * 4 + 2)
    layers = []
    for l in range(NUM_LAYERS):
        in_dim = INPUT_SIZE if l == 0 else H
        k_ih, k_hh, k_bih, k_bhh = keys[4 * l:4 * l + 4]
        w_ih = jax.random.uniform(k_ih, (4 * H, in_dim), jnp.float32, -stdv, stdv)
        w_hh = jax.random.uniform(k_hh, (4 * H, H), jnp.float32, -stdv, stdv)
        b_ih = jax.random.uniform(k_bih, (4 * H,), jnp.float32, -stdv, stdv)
        b_hh = jax.random.uniform(k_bhh, (4 * H,), jnp.float32, -stdv, stdv)
        layers.append((w_ih, w_hh, b_ih, b_hh))
    w_out = jax.random.uniform(keys[-2], (OUT_DIM, H), jnp.float32, -stdv, stdv)
    b_out = jax.random.uniform(keys[-1], (OUT_DIM,), jnp.float32, -stdv, stdv)
    return {"layers": layers, "w_out": w_out, "b_out": b_out}


def to_kernel_params(params):
    """Repack PyTorch-layout params into fused, padded, transposed layout.

    Per layer, gates are packed along the output axis in order [i, f, o, g]:
      wih_k : (L, 64, 256)   zero-padded 28->64 input rows for layer 0
      whh_k : (L, 64, 256)
      b_k   : (L, 1, 256)    combined b_ih + b_hh
    """
    H = HIDDEN
    wih_k = jnp.zeros((NUM_LAYERS, H, 4 * H), jnp.float32)
    whh_k = jnp.zeros((NUM_LAYERS, H, 4 * H), jnp.float32)
    b_k = jnp.zeros((NUM_LAYERS, 1, 4 * H), jnp.float32)
    for l, (w_ih, w_hh, b_ih, b_hh) in enumerate(params["layers"]):
        in_dim = w_ih.shape[1]
        for pos, g in enumerate(GATE_ORDER):
            wih_k = wih_k.at[l, :in_dim, pos * H:(pos + 1) * H].set(
                w_ih[g * H:(g + 1) * H, :].T)
            whh_k = whh_k.at[l, :, pos * H:(pos + 1) * H].set(
                w_hh[g * H:(g + 1) * H, :].T)
            b_k = b_k.at[l, 0, pos * H:(pos + 1) * H].set(
                b_ih[g * H:(g + 1) * H] + b_hh[g * H:(g + 1) * H])
    wout_k = params["w_out"].T            # (64, 10)
    bout_k = params["b_out"][None, :]     # (1, 10)
    return wih_k, whh_k, b_k, wout_k, bout_k


def rnn_forward(x, kernel_params):
    """x: (B, T, 28) float32  ->  (B, 10) float32."""
    B, T, _ = x.shape
    # time-major + zero-pad features 28 -> 64
    x_pad = jnp.zeros((T, B, HIDDEN), jnp.float32)
    x_pad = x_pad.at[:, :, :INPUT_SIZE].set(jnp.transpose(x, (1, 0, 2)))
    wih_k, whh_k, b_k, wout_k, bout_k = kernel_params
    return pl.pallas_call(
        lstm_kernel,
        out_shape=jax.ShapeDtypeStruct((B, OUT_DIM), jnp.float32),
        in_specs=[pl.BlockSpec(memory_space=pltpu.MemorySpace.VMEM)] * 6,
        out_specs=pl.BlockSpec(memory_space=pltpu.MemorySpace.VMEM),
        scratch_shapes=[pltpu.VMEM((T, B, HIDDEN), jnp.float32),
                        pltpu.VMEM((T, B, 4 * HIDDEN), jnp.float32)],
    )(x_pad, wih_k, whh_k, b_k, wout_k, bout_k)


def rnn_forward_ref(x, params):
    """Pure-JAX reference matching torch.nn.LSTM / nn.Linear semantics."""
    B, T, _ = x.shape
    seq = x
    for (w_ih, w_hh, b_ih, b_hh) in params["layers"]:
        h = jnp.zeros((B, HIDDEN), jnp.float32)
        c = jnp.zeros((B, HIDDEN), jnp.float32)
        outs = []
        for t in range(T):
            gates = seq[:, t, :] @ w_ih.T + h @ w_hh.T + b_ih + b_hh
            i, f, g, o = jnp.split(gates, 4, axis=-1)
            i = jax.nn.sigmoid(i)
            f = jax.nn.sigmoid(f)
            g = jnp.tanh(g)
            o = jax.nn.sigmoid(o)
            c = f * c + i * g
            h = o * jnp.tanh(c)
            outs.append(h)
        seq = jnp.stack(outs, axis=1)
    return seq[:, -1, :] @ params["w_out"].T + params["b_out"]


if __name__ == "__main__":
    key = jax.random.PRNGKey(0)
    k_param, k_x = jax.random.split(key)
    params = make_params(k_param)
    kernel_params = to_kernel_params(params)

    B, T = 8, 8
    x = jax.random.normal(k_x, (B, T, INPUT_SIZE), jnp.float32)

    out = rnn_forward(x, kernel_params)
    out = jax.block_until_ready(out)

    ref = jax.block_until_ready(rnn_forward_ref(x, params))
    assert out.shape == (B, OUT_DIM)
    assert jnp.allclose(out, ref, rtol=1e-4, atol=1e-4), (
        f"max abs err {jnp.max(jnp.abs(out - ref))}")
    print("KERNEL_OK")
</pallas_src>

<mosaic_0001>
module attributes {stable_mosaic.version = 11 : i64} {
  func.func @lstm_kernel(%arg0: memref<8x8x64xf32, #tpu.memory_space<vmem>>, %arg1: memref<4x64x256xf32, #tpu.memory_space<vmem>>, %arg2: memref<4x64x256xf32, #tpu.memory_space<vmem>>, %arg3: memref<4x1x256xf32, #tpu.memory_space<vmem>>, %arg4: memref<64x10xf32, #tpu.memory_space<vmem>>, %arg5: memref<1x10xf32, #tpu.memory_space<vmem>>, %arg6: memref<8x10xf32, #tpu.memory_space<vmem>>, %arg7: memref<8x8x64xf32, #tpu.memory_space<vmem>>, %arg8: memref<8x8x256xf32, #tpu.memory_space<vmem>>) attributes {dimension_semantics = [], scalar_prefetch = 0 : i64, scratch_operands = 2 : i64, tpu.core_type = #tpu.core_type<tc>} {
    %c0 = arith.constant 0 : index
    %c0_0 = arith.constant 0 : index
    %c0_1 = arith.constant 0 : index
    %0 = vector.load %arg0[%c0, %c0_0, %c0_1] : memref<8x8x64xf32, #tpu.memory_space<vmem>>, vector<8x8x64xf32>
    %c0_2 = arith.constant 0 : index
    %c0_3 = arith.constant 0 : index
    %c0_4 = arith.constant 0 : index
    %1 = vector.load %arg7[%c0_2, %c0_3, %c0_4] : memref<8x8x64xf32, #tpu.memory_space<vmem>>, vector<8x8x64xf32>
    tpu.vector_store %arg7[%c0_2, %c0_3, %c0_4], %0 {strides = array<i32>} : memref<8x8x64xf32, #tpu.memory_space<vmem>>, vector<8x8x64xf32>,
    %c0_5 = arith.constant 0 : index
    %c0_6 = arith.constant 0 : index
    %c0_7 = arith.constant 0 : index
    %2 = vector.load %arg1[%c0_5, %c0_6, %c0_7] : memref<4x64x256xf32, #tpu.memory_space<vmem>>, vector<1x64x256xf32>
    %3 = vector.shape_cast %2 : vector<1x64x256xf32> to vector<64x256xf32>
    %c0_8 = arith.constant 0 : index
    %c0_9 = arith.constant 0 : index
    %c0_10 = arith.constant 0 : index
    %4 = vector.load %arg2[%c0_8, %c0_9, %c0_10] : memref<4x64x256xf32, #tpu.memory_space<vmem>>, vector<1x64x256xf32>
    %5 = vector.shape_cast %4 : vector<1x64x256xf32> to vector<64x256xf32>
    %c0_11 = arith.constant 0 : index
    %c0_12 = arith.constant 0 : index
    %c0_13 = arith.constant 0 : index
    %6 = vector.load %arg3[%c0_11, %c0_12, %c0_13] : memref<4x1x256xf32, #tpu.memory_space<vmem>>, vector<1x1x256xf32>
    %7 = vector.shape_cast %6 : vector<1x1x256xf32> to vector<1x256xf32>
    %c0_14 = arith.constant 0 : index
    %c0_15 = arith.constant 0 : index
    %c0_16 = arith.constant 0 : index
    %8 = vector.load %arg7[%c0_14, %c0_15, %c0_16] : memref<8x8x64xf32, #tpu.memory_space<vmem>>, vector<8x8x64xf32>
    %9 = vector.shape_cast %8 : vector<8x8x64xf32> to vector<64x64xf32>
    %cst = arith.constant dense<0.000000e+00> : vector<64x256xf32>
    %10 = tpu.matmul %9, %3, %cst {dimension_numbers = #tpu.dot_dimension_numbers<[1], [0], [0], [1], [0, 0, 1, 1], [], []>} : vector<64x64xf32>, vector<64x256xf32>, vector<64x256xf32> -> vector<64x256xf32>
    %11 = vector.broadcast %7 : vector<1x256xf32> to vector<64x256xf32>
    %12 = arith.addf %10, %11 : vector<64x256xf32>
    %13 = vector.shape_cast %12 : vector<64x256xf32> to vector<8x8x256xf32>
    %c0_17 = arith.constant 0 : index
    %c0_18 = arith.constant 0 : index
    %c0_19 = arith.constant 0 : index
    %14 = vector.load %arg8[%c0_17, %c0_18, %c0_19] : memref<8x8x256xf32, #tpu.memory_space<vmem>>, vector<8x8x256xf32>
    tpu.vector_store %arg8[%c0_17, %c0_18, %c0_19], %13 {strides = array<i32>} : memref<8x8x256xf32, #tpu.memory_space<vmem>>, vector<8x8x256xf32>,
    %cst_20 = arith.constant 0.000000e+00 : f32
    %15 = vector.broadcast %cst_20 : f32 to vector<8x64xf32>
    %cst_21 = arith.constant 0.000000e+00 : f32
    %16 = vector.broadcast %cst_21 : f32 to vector<8x64xf32>
    %c0_i32 = arith.constant 0 : i32
    %17 = arith.index_cast %c0_i32 : i32 to index
    %c0_22 = arith.constant 0 : index
    %c0_23 = arith.constant 0 : index
    %18 = vector.load %arg8[%17, %c0_22, %c0_23] : memref<8x8x256xf32, #tpu.memory_space<vmem>>, vector<1x8x256xf32>
    %19 = vector.shape_cast %18 : vector<1x8x256xf32> to vector<8x256xf32>
    %cst_24 = arith.constant dense<0.000000e+00> : vector<8x256xf32>
    %20 = tpu.matmul %15, %5, %cst_24 {dimension_numbers = #tpu.dot_dimension_numbers<[1], [0], [0], [1], [0, 0, 1, 1], [], []>} : vector<8x64xf32>, vector<64x256xf32>, vector<8x256xf32> -> vector<8x256xf32>
    %21 = arith.addf %19, %20 : vector<8x256xf32>
    %22 = vector.extract_strided_slice %21 {offsets = [0, 0], sizes = [8, 192], strides = [1, 1]} : vector<8x256xf32> to vector<8x192xf32>
    %23 = arith.negf %22 : vector<8x192xf32>
    %24 = math.exp %23 : vector<8x192xf32>
    %cst_25 = arith.constant 1.000000e+00 : f32
    %25 = vector.broadcast %cst_25 : f32 to vector<8x192xf32>
    %26 = arith.addf %25, %24 : vector<8x192xf32>
    %27 = arith.divf %25, %26 : vector<8x192xf32>
    %28 = vector.extract_strided_slice %27 {offsets = [0, 0], sizes = [8, 64], strides = [1, 1]} : vector<8x192xf32> to vector<8x64xf32>
    %29 = vector.extract_strided_slice %27 {offsets = [0, 64], sizes = [8, 64], strides = [1, 1]} : vector<8x192xf32> to vector<8x64xf32>
    %30 = vector.extract_strided_slice %27 {offsets = [0, 128], sizes = [8, 64], strides = [1, 1]} : vector<8x192xf32> to vector<8x64xf32>
    %31 = vector.extract_strided_slice %21 {offsets = [0, 192], sizes = [8, 64], strides = [1, 1]} : vector<8x256xf32> to vector<8x64xf32>
    %32 = math.tanh %31 : vector<8x64xf32>
    %33 = arith.mulf %29, %16 : vector<8x64xf32>
    %34 = arith.mulf %28, %32 : vector<8x64xf32>
    %35 = arith.addf %33, %34 : vector<8x64xf32>
    %36 = math.tanh %35 : vector<8x64xf32>
    %37 = arith.mulf %30, %36 : vector<8x64xf32>
    %38 = arith.index_cast %c0_i32 : i32 to index
    %c0_26 = arith.constant 0 : index
    %c0_27 = arith.constant 0 : index
    %39 = vector.load %arg7[%38, %c0_26, %c0_27] : memref<8x8x64xf32, #tpu.memory_space<vmem>>, vector<1x8x64xf32>
    %40 = vector.shape_cast %39 : vector<1x8x64xf32> to vector<8x64xf32>
    %41 = vector.shape_cast %37 : vector<8x64xf32> to vector<1x8x64xf32>
    tpu.vector_store %arg7[%38, %c0_26, %c0_27], %41 {strides = array<i32>} : memref<8x8x64xf32, #tpu.memory_space<vmem>>, vector<1x8x64xf32>,
    %c1_i32 = arith.constant 1 : i32
    %42 = arith.index_cast %c1_i32 : i32 to index
    %c0_28 = arith.constant 0 : index
    %c0_29 = arith.constant 0 : index
    %43 = vector.load %arg8[%42, %c0_28, %c0_29] : memref<8x8x256xf32, #tpu.memory_space<vmem>>, vector<1x8x256xf32>
    %44 = vector.shape_cast %43 : vector<1x8x256xf32> to vector<8x256xf32>
    %cst_30 = arith.constant dense<0.000000e+00> : vector<8x256xf32>
    %45 = tpu.matmul %37, %5, %cst_30 {dimension_numbers = #tpu.dot_dimension_numbers<[1], [0], [0], [1], [0, 0, 1, 1], [], []>} : vector<8x64xf32>, vector<64x256xf32>, vector<8x256xf32> -> vector<8x256xf32>
    %46 = arith.addf %44, %45 : vector<8x256xf32>
    %47 = vector.extract_strided_slice %46 {offsets = [0, 0], sizes = [8, 192], strides = [1, 1]} : vector<8x256xf32> to vector<8x192xf32>
    %48 = arith.negf %47 : vector<8x192xf32>
    %49 = math.exp %48 : vector<8x192xf32>
    %cst_31 = arith.constant 1.000000e+00 : f32
    %50 = vector.broadcast %cst_31 : f32 to vector<8x192xf32>
    %51 = arith.addf %50, %49 : vector<8x192xf32>
    %52 = arith.divf %50, %51 : vector<8x192xf32>
    %53 = vector.extract_strided_slice %52 {offsets = [0, 0], sizes = [8, 64], strides = [1, 1]} : vector<8x192xf32> to vector<8x64xf32>
    %54 = vector.extract_strided_slice %52 {offsets = [0, 64], sizes = [8, 64], strides = [1, 1]} : vector<8x192xf32> to vector<8x64xf32>
    %55 = vector.extract_strided_slice %52 {offsets = [0, 128], sizes = [8, 64], strides = [1, 1]} : vector<8x192xf32> to vector<8x64xf32>
    %56 = vector.extract_strided_slice %46 {offsets = [0, 192], sizes = [8, 64], strides = [1, 1]} : vector<8x256xf32> to vector<8x64xf32>
    %57 = math.tanh %56 : vector<8x64xf32>
    %58 = arith.mulf %54, %35 : vector<8x64xf32>
    %59 = arith.mulf %53, %57 : vector<8x64xf32>
    %60 = arith.addf %58, %59 : vector<8x64xf32>
    %61 = math.tanh %60 : vector<8x64xf32>
    %62 = arith.mulf %55, %61 : vector<8x64xf32>
    %63 = arith.index_cast %c1_i32 : i32 to index
    %c0_32 = arith.constant 0 : index
    %c0_33 = arith.constant 0 : index
    %64 = vector.load %arg7[%63, %c0_32, %c0_33] : memref<8x8x64xf32, #tpu.memory_space<vmem>>, vector<1x8x64xf32>
    %65 = vector.shape_cast %64 : vector<1x8x64xf32> to vector<8x64xf32>
    %66 = vector.shape_cast %62 : vector<8x64xf32> to vector<1x8x64xf32>
    tpu.vector_store %arg7[%63, %c0_32, %c0_33], %66 {strides = array<i32>} : memref<8x8x64xf32, #tpu.memory_space<vmem>>, vector<1x8x64xf32>,
    %c2_i32 = arith.constant 2 : i32
    %67 = arith.index_cast %c2_i32 : i32 to index
    %c0_34 = arith.constant 0 : index
    %c0_35 = arith.constant 0 : index
    %68 = vector.load %arg8[%67, %c0_34, %c0_35] : memref<8x8x256xf32, #tpu.memory_space<vmem>>, vector<1x8x256xf32>
    %69 = vector.shape_cast %68 : vector<1x8x256xf32> to vector<8x256xf32>
    %cst_36 = arith.constant dense<0.000000e+00> : vector<8x256xf32>
    %70 = tpu.matmul %62, %5, %cst_36 {dimension_numbers = #tpu.dot_dimension_numbers<[1], [0], [0], [1], [0, 0, 1, 1], [], []>} : vector<8x64xf32>, vector<64x256xf32>, vector<8x256xf32> -> vector<8x256xf32>
    %71 = arith.addf %69, %70 : vector<8x256xf32>
    %72 = vector.extract_strided_slice %71 {offsets = [0, 0], sizes = [8, 192], strides = [1, 1]} : vector<8x256xf32> to vector<8x192xf32>
    %73 = arith.negf %72 : vector<8x192xf32>
    %74 = math.exp %73 : vector<8x192xf32>
    %cst_37 = arith.constant 1.000000e+00 : f32
    %75 = vector.broadcast %cst_37 : f32 to vector<8x192xf32>
    %76 = arith.addf %75, %74 : vector<8x192xf32>
    %77 = arith.divf %75, %76 : vector<8x192xf32>
    %78 = vector.extract_strided_slice %77 {offsets = [0, 0], sizes = [8, 64], strides = [1, 1]} : vector<8x192xf32> to vector<8x64xf32>
    %79 = vector.extract_strided_slice %77 {offsets = [0, 64], sizes = [8, 64], strides = [1, 1]} : vector<8x192xf32> to vector<8x64xf32>
    %80 = vector.extract_strided_slice %77 {offsets = [0, 128], sizes = [8, 64], strides = [1, 1]} : vector<8x192xf32> to vector<8x64xf32>
    %81 = vector.extract_strided_slice %71 {offsets = [0, 192], sizes = [8, 64], strides = [1, 1]} : vector<8x256xf32> to vector<8x64xf32>
    %82 = math.tanh %81 : vector<8x64xf32>
    %83 = arith.mulf %79, %60 : vector<8x64xf32>
    %84 = arith.mulf %78, %82 : vector<8x64xf32>
    %85 = arith.addf %83, %84 : vector<8x64xf32>
    %86 = math.tanh %85 : vector<8x64xf32>
    %87 = arith.mulf %80, %86 : vector<8x64xf32>
    %88 = arith.index_cast %c2_i32 : i32 to index
    %c0_38 = arith.constant 0 : index
    %c0_39 = arith.constant 0 : index
    %89 = vector.load %arg7[%88, %c0_38, %c0_39] : memref<8x8x64xf32, #tpu.memory_space<vmem>>, vector<1x8x64xf32>
    %90 = vector.shape_cast %89 : vector<1x8x64xf32> to vector<8x64xf32>
    %91 = vector.shape_cast %87 : vector<8x64xf32> to vector<1x8x64xf32>
    tpu.vector_store %arg7[%88, %c0_38, %c0_39], %91 {strides = array<i32>} : memref<8x8x64xf32, #tpu.memory_space<vmem>>, vector<1x8x64xf32>,
    %c3_i32 = arith.constant 3 : i32
    %92 = arith.index_cast %c3_i32 : i32 to index
    %c0_40 = arith.constant 0 : index
    %c0_41 = arith.constant 0 : index
    %93 = vector.load %arg8[%92, %c0_40, %c0_41] : memref<8x8x256xf32, #tpu.memory_space<vmem>>, vector<1x8x256xf32>
    %94 = vector.shape_cast %93 : vector<1x8x256xf32> to vector<8x256xf32>
    %cst_42 = arith.constant dense<0.000000e+00> : vector<8x256xf32>
    %95 = tpu.matmul %87, %5, %cst_42 {dimension_numbers = #tpu.dot_dimension_numbers<[1], [0], [0], [1], [0, 0, 1, 1], [], []>} : vector<8x64xf32>, vector<64x256xf32>, vector<8x256xf32> -> vector<8x256xf32>
    %96 = arith.addf %94, %95 : vector<8x256xf32>
    %97 = vector.extract_strided_slice %96 {offsets = [0, 0], sizes = [8, 192], strides = [1, 1]} : vector<8x256xf32> to vector<8x192xf32>
    %98 = arith.negf %97 : vector<8x192xf32>
    %99 = math.exp %98 : vector<8x192xf32>
    %cst_43 = arith.constant 1.000000e+00 : f32
    %100 = vector.broadcast %cst_43 : f32 to vector<8x192xf32>
    %101 = arith.addf %100, %99 : vector<8x192xf32>
    %102 = arith.divf %100, %101 : vector<8x192xf32>
    %103 = vector.extract_strided_slice %102 {offsets = [0, 0], sizes = [8, 64], strides = [1, 1]} : vector<8x192xf32> to vector<8x64xf32>
    %104 = vector.extract_strided_slice %102 {offsets = [0, 64], sizes = [8, 64], strides = [1, 1]} : vector<8x192xf32> to vector<8x64xf32>
    %105 = vector.extract_strided_slice %102 {offsets = [0, 128], sizes = [8, 64], strides = [1, 1]} : vector<8x192xf32> to vector<8x64xf32>
    %106 = vector.extract_strided_slice %96 {offsets = [0, 192], sizes = [8, 64], strides = [1, 1]} : vector<8x256xf32> to vector<8x64xf32>
    %107 = math.tanh %106 : vector<8x64xf32>
    %108 = arith.mulf %104, %85 : vector<8x64xf32>
    %109 = arith.mulf %103, %107 : vector<8x64xf32>
    %110 = arith.addf %108, %109 : vector<8x64xf32>
    %111 = math.tanh %110 : vector<8x64xf32>
    %112 = arith.mulf %105, %111 : vector<8x64xf32>
    %113 = arith.index_cast %c3_i32 : i32 to index
    %c0_44 = arith.constant 0 : index
    %c0_45 = arith.constant 0 : index
    %114 = vector.load %arg7[%113, %c0_44, %c0_45] : memref<8x8x64xf32, #tpu.memory_space<vmem>>, vector<1x8x64xf32>
    %115 = vector.shape_cast %114 : vector<1x8x64xf32> to vector<8x64xf32>
    %116 = vector.shape_cast %112 : vector<8x64xf32> to vector<1x8x64xf32>
    tpu.vector_store %arg7[%113, %c0_44, %c0_45], %116 {strides = array<i32>} : memref<8x8x64xf32, #tpu.memory_space<vmem>>, vector<1x8x64xf32>,
    %c4_i32 = arith.constant 4 : i32
    %117 = arith.index_cast %c4_i32 : i32 to index
    %c0_46 = arith.constant 0 : index
    %c0_47 = arith.constant 0 : index
    %118 = vector.load %arg8[%117, %c0_46, %c0_47] : memref<8x8x256xf32, #tpu.memory_space<vmem>>, vector<1x8x256xf32>
    %119 = vector.shape_cast %118 : vector<1x8x256xf32> to vector<8x256xf32>
    %cst_48 = arith.constant dense<0.000000e+00> : vector<8x256xf32>
    %120 = tpu.matmul %112, %5, %cst_48 {dimension_numbers = #tpu.dot_dimension_numbers<[1], [0], [0], [1], [0, 0, 1, 1], [], []>} : vector<8x64xf32>, vector<64x256xf32>, vector<8x256xf32> -> vector<8x256xf32>
    %121 = arith.addf %119, %120 : vector<8x256xf32>
    %122 = vector.extract_strided_slice %121 {offsets = [0, 0], sizes = [8, 192], strides = [1, 1]} : vector<8x256xf32> to vector<8x192xf32>
    %123 = arith.negf %122 : vector<8x192xf32>
    %124 = math.exp %123 : vector<8x192xf32>
    %cst_49 = arith.constant 1.000000e+00 : f32
    %125 = vector.broadcast %cst_49 : f32 to vector<8x192xf32>
    %126 = arith.addf %125, %124 : vector<8x192xf32>
    %127 = arith.divf %125, %126 : vector<8x192xf32>
    %128 = vector.extract_strided_slice %127 {offsets = [0, 0], sizes = [8, 64], strides = [1, 1]} : vector<8x192xf32> to vector<8x64xf32>
    %129 = vector.extract_strided_slice %127 {offsets = [0, 64], sizes = [8, 64], strides = [1, 1]} : vector<8x192xf32> to vector<8x64xf32>
    %130 = vector.extract_strided_slice %127 {offsets = [0, 128], sizes = [8, 64], strides = [1, 1]} : vector<8x192xf32> to vector<8x64xf32>
    %131 = vector.extract_strided_slice %121 {offsets = [0, 192], sizes = [8, 64], strides = [1, 1]} : vector<8x256xf32> to vector<8x64xf32>
    %132 = math.tanh %131 : vector<8x64xf32>
    %133 = arith.mulf %129, %110 : vector<8x64xf32>
    %134 = arith.mulf %128, %132 : vector<8x64xf32>
    %135 = arith.addf %133, %134 : vector<8x64xf32>
    %136 = math.tanh %135 : vector<8x64xf32>
    %137 = arith.mulf %130, %136 : vector<8x64xf32>
    %138 = arith.index_cast %c4_i32 : i32 to index
    %c0_50 = arith.constant 0 : index
    %c0_51 = arith.constant 0 : index
    %139 = vector.load %arg7[%138, %c0_50, %c0_51] : memref<8x8x64xf32, #tpu.memory_space<vmem>>, vector<1x8x64xf32>
    %140 = vector.shape_cast %139 : vector<1x8x64xf32> to vector<8x64xf32>
    %141 = vector.shape_cast %137 : vector<8x64xf32> to vector<1x8x64xf32>
    tpu.vector_store %arg7[%138, %c0_50, %c0_51], %141 {strides = array<i32>} : memref<8x8x64xf32, #tpu.memory_space<vmem>>, vector<1x8x64xf32>,
    %c5_i32 = arith.constant 5 : i32
    %142 = arith.index_cast %c5_i32 : i32 to index
    %c0_52 = arith.constant 0 : index
    %c0_53 = arith.constant 0 : index
    %143 = vector.load %arg8[%142, %c0_52, %c0_53] : memref<8x8x256xf32, #tpu.memory_space<vmem>>, vector<1x8x256xf32>
    %144 = vector.shape_cast %143 : vector<1x8x256xf32> to vector<8x256xf32>
    %cst_54 = arith.constant dense<0.000000e+00> : vector<8x256xf32>
    %145 = tpu.matmul %137, %5, %cst_54 {dimension_numbers = #tpu.dot_dimension_numbers<[1], [0], [0], [1], [0, 0, 1, 1], [], []>} : vector<8x64xf32>, vector<64x256xf32>, vector<8x256xf32> -> vector<8x256xf32>
    %146 = arith.addf %144, %145 : vector<8x256xf32>
    %147 = vector.extract_strided_slice %146 {offsets = [0, 0], sizes = [8, 192], strides = [1, 1]} : vector<8x256xf32> to vector<8x192xf32>
    %148 = arith.negf %147 : vector<8x192xf32>
    %149 = math.exp %148 : vector<8x192xf32>
    %cst_55 = arith.constant 1.000000e+00 : f32
    %150 = vector.broadcast %cst_55 : f32 to vector<8x192xf32>
    %151 = arith.addf %150, %149 : vector<8x192xf32>
    %152 = arith.divf %150, %151 : vector<8x192xf32>
    %153 = vector.extract_strided_slice %152 {offsets = [0, 0], sizes = [8, 64], strides = [1, 1]} : vector<8x192xf32> to vector<8x64xf32>
    %154 = vector.extract_strided_slice %152 {offsets = [0, 64], sizes = [8, 64], strides = [1, 1]} : vector<8x192xf32> to vector<8x64xf32>
    %155 = vector.extract_strided_slice %152 {offsets = [0, 128], sizes = [8, 64], strides = [1, 1]} : vector<8x192xf32> to vector<8x64xf32>
    %156 = vector.extract_strided_slice %146 {offsets = [0, 192], sizes = [8, 64], strides = [1, 1]} : vector<8x256xf32> to vector<8x64xf32>
    %157 = math.tanh %156 : vector<8x64xf32>
    %158 = arith.mulf %154, %135 : vector<8x64xf32>
    %159 = arith.mulf %153, %157 : vector<8x64xf32>
    %160 = arith.addf %158, %159 : vector<8x64xf32>
    %161 = math.tanh %160 : vector<8x64xf32>
    %162 = arith.mulf %155, %161 : vector<8x64xf32>
    %163 = arith.index_cast %c5_i32 : i32 to index
    %c0_56 = arith.constant 0 : index
    %c0_57 = arith.constant 0 : index
    %164 = vector.load %arg7[%163, %c0_56, %c0_57] : memref<8x8x64xf32, #tpu.memory_space<vmem>>, vector<1x8x64xf32>
    %165 = vector.shape_cast %164 : vector<1x8x64xf32> to vector<8x64xf32>
    %166 = vector.shape_cast %162 : vector<8x64xf32> to vector<1x8x64xf32>
    tpu.vector_store %arg7[%163, %c0_56, %c0_57], %166 {strides = array<i32>} : memref<8x8x64xf32, #tpu.memory_space<vmem>>, vector<1x8x64xf32>,
    %c6_i32 = arith.constant 6 : i32
    %167 = arith.index_cast %c6_i32 : i32 to index
    %c0_58 = arith.constant 0 : index
    %c0_59 = arith.constant 0 : index
    %168 = vector.load %arg8[%167, %c0_58, %c0_59] : memref<8x8x256xf32, #tpu.memory_space<vmem>>, vector<1x8x256xf32>
    %169 = vector.shape_cast %168 : vector<1x8x256xf32> to vector<8x256xf32>
    %cst_60 = arith.constant dense<0.000000e+00> : vector<8x256xf32>
    %170 = tpu.matmul %162, %5, %cst_60 {dimension_numbers = #tpu.dot_dimension_numbers<[1], [0], [0], [1], [0, 0, 1, 1], [], []>} : vector<8x64xf32>, vector<64x256xf32>, vector<8x256xf32> -> vector<8x256xf32>
    %171 = arith.addf %169, %170 : vector<8x256xf32>
    %172 = vector.extract_strided_slice %171 {offsets = [0, 0], sizes = [8, 192], strides = [1, 1]} : vector<8x256xf32> to vector<8x192xf32>
    %173 = arith.negf %172 : vector<8x192xf32>
    %174 = math.exp %173 : vector<8x192xf32>
    %cst_61 = arith.constant 1.000000e+00 : f32
    %175 = vector.broadcast %cst_61 : f32 to vector<8x192xf32>
    %176 = arith.addf %175, %174 : vector<8x192xf32>
    %177 = arith.divf %175, %176 : vector<8x192xf32>
    %178 = vector.extract_strided_slice %177 {offsets = [0, 0], sizes = [8, 64], strides = [1, 1]} : vector<8x192xf32> to vector<8x64xf32>
    %179 = vector.extract_strided_slice %177 {offsets = [0, 64], sizes = [8, 64], strides = [1, 1]} : vector<8x192xf32> to vector<8x64xf32>
    %180 = vector.extract_strided_slice %177 {offsets = [0, 128], sizes = [8, 64], strides = [1, 1]} : vector<8x192xf32> to vector<8x64xf32>
    %181 = vector.extract_strided_slice %171 {offsets = [0, 192], sizes = [8, 64], strides = [1, 1]} : vector<8x256xf32> to vector<8x64xf32>
    %182 = math.tanh %181 : vector<8x64xf32>
    %183 = arith.mulf %179, %160 : vector<8x64xf32>
    %184 = arith.mulf %178, %182 : vector<8x64xf32>
    %185 = arith.addf %183, %184 : vector<8x64xf32>
    %186 = math.tanh %185 : vector<8x64xf32>
    %187 = arith.mulf %180, %186 : vector<8x64xf32>
    %188 = arith.index_cast %c6_i32 : i32 to index
    %c0_62 = arith.constant 0 : index
    %c0_63 = arith.constant 0 : index
    %189 = vector.load %arg7[%188, %c0_62, %c0_63] : memref<8x8x64xf32, #tpu.memory_space<vmem>>, vector<1x8x64xf32>
    %190 = vector.shape_cast %189 : vector<1x8x64xf32> to vector<8x64xf32>
    %191 = vector.shape_cast %187 : vector<8x64xf32> to vector<1x8x64xf32>
    tpu.vector_store %arg7[%188, %c0_62, %c0_63], %191 {strides = array<i32>} : memref<8x8x64xf32, #tpu.memory_space<vmem>>, vector<1x8x64xf32>,
    %c7_i32 = arith.constant 7 : i32
    %192 = arith.index_cast %c7_i32 : i32 to index
    %c0_64 = arith.constant 0 : index
    %c0_65 = arith.constant 0 : index
    %193 = vector.load %arg8[%192, %c0_64, %c0_65] : memref<8x8x256xf32, #tpu.memory_space<vmem>>, vector<1x8x256xf32>
    %194 = vector.shape_cast %193 : vector<1x8x256xf32> to vector<8x256xf32>
    %cst_66 = arith.constant dense<0.000000e+00> : vector<8x256xf32>
    %195 = tpu.matmul %187, %5, %cst_66 {dimension_numbers = #tpu.dot_dimension_numbers<[1], [0], [0], [1], [0, 0, 1, 1], [], []>} : vector<8x64xf32>, vector<64x256xf32>, vector<8x256xf32> -> vector<8x256xf32>
    %196 = arith.addf %194, %195 : vector<8x256xf32>
    %197 = vector.extract_strided_slice %196 {offsets = [0, 0], sizes = [8, 192], strides = [1, 1]} : vector<8x256xf32> to vector<8x192xf32>
    %198 = arith.negf %197 : vector<8x192xf32>
    %199 = math.exp %198 : vector<8x192xf32>
    %cst_67 = arith.constant 1.000000e+00 : f32
    %200 = vector.broadcast %cst_67 : f32 to vector<8x192xf32>
    %201 = arith.addf %200, %199 : vector<8x192xf32>
    %202 = arith.divf %200, %201 : vector<8x192xf32>
    %203 = vector.extract_strided_slice %202 {offsets = [0, 0], sizes = [8, 64], strides = [1, 1]} : vector<8x192xf32> to vector<8x64xf32>
    %204 = vector.extract_strided_slice %202 {offsets = [0, 64], sizes = [8, 64], strides = [1, 1]} : vector<8x192xf32> to vector<8x64xf32>
    %205 = vector.extract_strided_slice %202 {offsets = [0, 128], sizes = [8, 64], strides = [1, 1]} : vector<8x192xf32> to vector<8x64xf32>
    %206 = vector.extract_strided_slice %196 {offsets = [0, 192], sizes = [8, 64], strides = [1, 1]} : vector<8x256xf32> to vector<8x64xf32>
    %207 = math.tanh %206 : vector<8x64xf32>
    %208 = arith.mulf %204, %185 : vector<8x64xf32>
    %209 = arith.mulf %203, %207 : vector<8x64xf32>
    %210 = arith.addf %208, %209 : vector<8x64xf32>
    %211 = math.tanh %210 : vector<8x64xf32>
    %212 = arith.mulf %205, %211 : vector<8x64xf32>
    %213 = arith.index_cast %c7_i32 : i32 to index
    %c0_68 = arith.constant 0 : index
    %c0_69 = arith.constant 0 : index
    %214 = vector.load %arg7[%213, %c0_68, %c0_69] : memref<8x8x64xf32, #tpu.memory_space<vmem>>, vector<1x8x64xf32>
    %215 = vector.shape_cast %214 : vector<1x8x64xf32> to vector<8x64xf32>
    %216 = vector.shape_cast %212 : vector<8x64xf32> to vector<1x8x64xf32>
    tpu.vector_store %arg7[%213, %c0_68, %c0_69], %216 {strides = array<i32>} : memref<8x8x64xf32, #tpu.memory_space<vmem>>, vector<1x8x64xf32>,
    %c8_i32 = arith.constant 8 : i32
    %c1 = arith.constant 1 : index
    %c0_70 = arith.constant 0 : index
    %c0_71 = arith.constant 0 : index
    %217 = vector.load %arg1[%c1, %c0_70, %c0_71] : memref<4x64x256xf32, #tpu.memory_space<vmem>>, vector<1x64x256xf32>
    %218 = vector.shape_cast %217 : vector<1x64x256xf32> to vector<64x256xf32>
    %c1_72 = arith.constant 1 : index
    %c0_73 = arith.constant 0 : index
    %c0_74 = arith.constant 0 : index
    %219 = vector.load %arg2[%c1_72, %c0_73, %c0_74] : memref<4x64x256xf32, #tpu.memory_space<vmem>>, vector<1x64x256xf32>
    %220 = vector.shape_cast %219 : vector<1x64x256xf32> to vector<64x256xf32>
    %c1_75 = arith.constant 1 : index
    %c0_76 = arith.constant 0 : index
    %c0_77 = arith.constant 0 : index
    %221 = vector.load %arg3[%c1_75, %c0_76, %c0_77] : memref<4x1x256xf32, #tpu.memory_space<vmem>>, vector<1x1x256xf32>
    %222 = vector.shape_cast %221 : vector<1x1x256xf32> to vector<1x256xf32>
    %c0_78 = arith.constant 0 : index
    %c0_79 = arith.constant 0 : index
    %c0_80 = arith.constant 0 : index
    %223 = vector.load %arg7[%c0_78, %c0_79, %c0_80] : memref<8x8x64xf32, #tpu.memory_space<vmem>>, vector<8x8x64xf32>
    %224 = vector.shape_cast %223 : vector<8x8x64xf32> to vector<64x64xf32>
    %cst_81 = arith.constant dense<0.000000e+00> : vector<64x256xf32>
    %225 = tpu.matmul %224, %218, %cst_81 {dimension_numbers = #tpu.dot_dimension_numbers<[1], [0], [0], [1], [0, 0, 1, 1], [], []>} : vector<64x64xf32>, vector<64x256xf32>, vector<64x256xf32> -> vector<64x256xf32>
    %226 = vector.broadcast %222 : vector<1x256xf32> to vector<64x256xf32>
    %227 = arith.addf %225, %226 : vector<64x256xf32>
    %228 = vector.shape_cast %227 : vector<64x256xf32> to vector<8x8x256xf32>
    %c0_82 = arith.constant 0 : index
    %c0_83 = arith.constant 0 : index
    %c0_84 = arith.constant 0 : index
    %229 = vector.load %arg8[%c0_82, %c0_83, %c0_84] : memref<8x8x256xf32, #tpu.memory_space<vmem>>, vector<8x8x256xf32>
    tpu.vector_store %arg8[%c0_82, %c0_83, %c0_84], %228 {strides = array<i32>} : memref<8x8x256xf32, #tpu.memory_space<vmem>>, vector<8x8x256xf32>,
    %cst_85 = arith.constant 0.000000e+00 : f32
    %230 = vector.broadcast %cst_85 : f32 to vector<8x64xf32>
    %cst_86 = arith.constant 0.000000e+00 : f32
    %231 = vector.broadcast %cst_86 : f32 to vector<8x64xf32>
    %c0_i32_87 = arith.constant 0 : i32
    %232 = arith.index_cast %c0_i32_87 : i32 to index
    %c0_88 = arith.constant 0 : index
    %c0_89 = arith.constant 0 : index
    %233 = vector.load %arg8[%232, %c0_88, %c0_89] : memref<8x8x256xf32, #tpu.memory_space<vmem>>, vector<1x8x256xf32>
    %234 = vector.shape_cast %233 : vector<1x8x256xf32> to vector<8x256xf32>
    %cst_90 = arith.constant dense<0.000000e+00> : vector<8x256xf32>
    %235 = tpu.matmul %230, %220, %cst_90 {dimension_numbers = #tpu.dot_dimension_numbers<[1], [0], [0], [1], [0, 0, 1, 1], [], []>} : vector<8x64xf32>, vector<64x256xf32>, vector<8x256xf32> -> vector<8x256xf32>
    %236 = arith.addf %234, %235 : vector<8x256xf32>
    %237 = vector.extract_strided_slice %236 {offsets = [0, 0], sizes = [8, 192], strides = [1, 1]} : vector<8x256xf32> to vector<8x192xf32>
    %238 = arith.negf %237 : vector<8x192xf32>
    %239 = math.exp %238 : vector<8x192xf32>
    %cst_91 = arith.constant 1.000000e+00 : f32
    %240 = vector.broadcast %cst_91 : f32 to vector<8x192xf32>
    %241 = arith.addf %240, %239 : vector<8x192xf32>
    %242 = arith.divf %240, %241 : vector<8x192xf32>
    %243 = vector.extract_strided_slice %242 {offsets = [0, 0], sizes = [8, 64], strides = [1, 1]} : vector<8x192xf32> to vector<8x64xf32>
    %244 = vector.extract_strided_slice %242 {offsets = [0, 64], sizes = [8, 64], strides = [1, 1]} : vector<8x192xf32> to vector<8x64xf32>
    %245 = vector.extract_strided_slice %242 {offsets = [0, 128], sizes = [8, 64], strides = [1, 1]} : vector<8x192xf32> to vector<8x64xf32>
    %246 = vector.extract_strided_slice %236 {offsets = [0, 192], sizes = [8, 64], strides = [1, 1]} : vector<8x256xf32> to vector<8x64xf32>
    %247 = math.tanh %246 : vector<8x64xf32>
    %248 = arith.mulf %244, %231 : vector<8x64xf32>
    %249 = arith.mulf %243, %247 : vector<8x64xf32>
    %250 = arith.addf %248, %249 : vector<8x64xf32>
    %251 = math.tanh %250 : vector<8x64xf32>
    %252 = arith.mulf %245, %251 : vector<8x64xf32>
    %253 = arith.index_cast %c0_i32_87 : i32 to index
    %c0_92 = arith.constant 0 : index
    %c0_93 = arith.constant 0 : index
    %254 = vector.load %arg7[%253, %c0_92, %c0_93] : memref<8x8x64xf32, #tpu.memory_space<vmem>>, vector<1x8x64xf32>
    %255 = vector.shape_cast %254 : vector<1x8x64xf32> to vector<8x64xf32>
    %256 = vector.shape_cast %252 : vector<8x64xf32> to vector<1x8x64xf32>
    tpu.vector_store %arg7[%253, %c0_92, %c0_93], %256 {strides = array<i32>} : memref<8x8x64xf32, #tpu.memory_space<vmem>>, vector<1x8x64xf32>,
    %c1_i32_94 = arith.constant 1 : i32
    %257 = arith.index_cast %c1_i32_94 : i32 to index
    %c0_95 = arith.constant 0 : index
    %c0_96 = arith.constant 0 : index
    %258 = vector.load %arg8[%257, %c0_95, %c0_96] : memref<8x8x256xf32, #tpu.memory_space<vmem>>, vector<1x8x256xf32>
    %259 = vector.shape_cast %258 : vector<1x8x256xf32> to vector<8x256xf32>
    %cst_97 = arith.constant dense<0.000000e+00> : vector<8x256xf32>
    %260 = tpu.matmul %252, %220, %cst_97 {dimension_numbers = #tpu.dot_dimension_numbers<[1], [0], [0], [1], [0, 0, 1, 1], [], []>} : vector<8x64xf32>, vector<64x256xf32>, vector<8x256xf32> -> vector<8x256xf32>
    %261 = arith.addf %259, %260 : vector<8x256xf32>
    %262 = vector.extract_strided_slice %261 {offsets = [0, 0], sizes = [8, 192], strides = [1, 1]} : vector<8x256xf32> to vector<8x192xf32>
    %263 = arith.negf %262 : vector<8x192xf32>
    %264 = math.exp %263 : vector<8x192xf32>
    %cst_98 = arith.constant 1.000000e+00 : f32
    %265 = vector.broadcast %cst_98 : f32 to vector<8x192xf32>
    %266 = arith.addf %265, %264 : vector<8x192xf32>
    %267 = arith.divf %265, %266 : vector<8x192xf32>
    %268 = vector.extract_strided_slice %267 {offsets = [0, 0], sizes = [8, 64], strides = [1, 1]} : vector<8x192xf32> to vector<8x64xf32>
    %269 = vector.extract_strided_slice %267 {offsets = [0, 64], sizes = [8, 64], strides = [1, 1]} : vector<8x192xf32> to vector<8x64xf32>
    %270 = vector.extract_strided_slice %267 {offsets = [0, 128], sizes = [8, 64], strides = [1, 1]} : vector<8x192xf32> to vector<8x64xf32>
    %271 = vector.extract_strided_slice %261 {offsets = [0, 192], sizes = [8, 64], strides = [1, 1]} : vector<8x256xf32> to vector<8x64xf32>
    %272 = math.tanh %271 : vector<8x64xf32>
    %273 = arith.mulf %269, %250 : vector<8x64xf32>
    %274 = arith.mulf %268, %272 : vector<8x64xf32>
    %275 = arith.addf %273, %274 : vector<8x64xf32>
    %276 = math.tanh %275 : vector<8x64xf32>
    %277 = arith.mulf %270, %276 : vector<8x64xf32>
    %278 = arith.index_cast %c1_i32_94 : i32 to index
    %c0_99 = arith.constant 0 : index
    %c0_100 = arith.constant 0 : index
    %279 = vector.load %arg7[%278, %c0_99, %c0_100] : memref<8x8x64xf32, #tpu.memory_space<vmem>>, vector<1x8x64xf32>
    %280 = vector.shape_cast %279 : vector<1x8x64xf32> to vector<8x64xf32>
    %281 = vector.shape_cast %277 : vector<8x64xf32> to vector<1x8x64xf32>
    tpu.vector_store %arg7[%278, %c0_99, %c0_100], %281 {strides = array<i32>} : memref<8x8x64xf32, #tpu.memory_space<vmem>>, vector<1x8x64xf32>,
    %c2_i32_101 = arith.constant 2 : i32
    %282 = arith.index_cast %c2_i32_101 : i32 to index
    %c0_102 = arith.constant 0 : index
    %c0_103 = arith.constant 0 : index
    %283 = vector.load %arg8[%282, %c0_102, %c0_103] : memref<8x8x256xf32, #tpu.memory_space<vmem>>, vector<1x8x256xf32>
    %284 = vector.shape_cast %283 : vector<1x8x256xf32> to vector<8x256xf32>
    %cst_104 = arith.constant dense<0.000000e+00> : vector<8x256xf32>
    %285 = tpu.matmul %277, %220, %cst_104 {dimension_numbers = #tpu.dot_dimension_numbers<[1], [0], [0], [1], [0, 0, 1, 1], [], []>} : vector<8x64xf32>, vector<64x256xf32>, vector<8x256xf32> -> vector<8x256xf32>
    %286 = arith.addf %284, %285 : vector<8x256xf32>
    %287 = vector.extract_strided_slice %286 {offsets = [0, 0], sizes = [8, 192], strides = [1, 1]} : vector<8x256xf32> to vector<8x192xf32>
    %288 = arith.negf %287 : vector<8x192xf32>
    %289 = math.exp %288 : vector<8x192xf32>
    %cst_105 = arith.constant 1.000000e+00 : f32
    %290 = vector.broadcast %cst_105 : f32 to vector<8x192xf32>
    %291 = arith.addf %290, %289 : vector<8x192xf32>
    %292 = arith.divf %290, %291 : vector<8x192xf32>
    %293 = vector.extract_strided_slice %292 {offsets = [0, 0], sizes = [8, 64], strides = [1, 1]} : vector<8x192xf32> to vector<8x64xf32>
    %294 = vector.extract_strided_slice %292 {offsets = [0, 64], sizes = [8, 64], strides = [1, 1]} : vector<8x192xf32> to vector<8x64xf32>
    %295 = vector.extract_strided_slice %292 {offsets = [0, 128], sizes = [8, 64], strides = [1, 1]} : vector<8x192xf32> to vector<8x64xf32>
    %296 = vector.extract_strided_slice %286 {offsets = [0, 192], sizes = [8, 64], strides = [1, 1]} : vector<8x256xf32> to vector<8x64xf32>
    %297 = math.tanh %296 : vector<8x64xf32>
    %298 = arith.mulf %294, %275 : vector<8x64xf32>
    %299 = arith.mulf %293, %297 : vector<8x64xf32>
    %300 = arith.addf %298, %299 : vector<8x64xf32>
    %301 = math.tanh %300 : vector<8x64xf32>
    %302 = arith.mulf %295, %301 : vector<8x64xf32>
    %303 = arith.index_cast %c2_i32_101 : i32 to index
    %c0_106 = arith.constant 0 : index
    %c0_107 = arith.constant 0 : index
    %304 = vector.load %arg7[%303, %c0_106, %c0_107] : memref<8x8x64xf32, #tpu.memory_space<vmem>>, vector<1x8x64xf32>
    %305 = vector.shape_cast %304 : vector<1x8x64xf32> to vector<8x64xf32>
    %306 = vector.shape_cast %302 : vector<8x64xf32> to vector<1x8x64xf32>
    tpu.vector_store %arg7[%303, %c0_106, %c0_107], %306 {strides = array<i32>} : memref<8x8x64xf32, #tpu.memory_space<vmem>>, vector<1x8x64xf32>,
    %c3_i32_108 = arith.constant 3 : i32
    %307 = arith.index_cast %c3_i32_108 : i32 to index
    %c0_109 = arith.constant 0 : index
    %c0_110 = arith.constant 0 : index
    %308 = vector.load %arg8[%307, %c0_109, %c0_110] : memref<8x8x256xf32, #tpu.memory_space<vmem>>, vector<1x8x256xf32>
    %309 = vector.shape_cast %308 : vector<1x8x256xf32> to vector<8x256xf32>
    %cst_111 = arith.constant dense<0.000000e+00> : vector<8x256xf32>
    %310 = tpu.matmul %302, %220, %cst_111 {dimension_numbers = #tpu.dot_dimension_numbers<[1], [0], [0], [1], [0, 0, 1, 1], [], []>} : vector<8x64xf32>, vector<64x256xf32>, vector<8x256xf32> -> vector<8x256xf32>
    %311 = arith.addf %309, %310 : vector<8x256xf32>
    %312 = vector.extract_strided_slice %311 {offsets = [0, 0], sizes = [8, 192], strides = [1, 1]} : vector<8x256xf32> to vector<8x192xf32>
    %313 = arith.negf %312 : vector<8x192xf32>
    %314 = math.exp %313 : vector<8x192xf32>
    %cst_112 = arith.constant 1.000000e+00 : f32
    %315 = vector.broadcast %cst_112 : f32 to vector<8x192xf32>
    %316 = arith.addf %315, %314 : vector<8x192xf32>
    %317 = arith.divf %315, %316 : vector<8x192xf32>
    %318 = vector.extract_strided_slice %317 {offsets = [0, 0], sizes = [8, 64], strides = [1, 1]} : vector<8x192xf32> to vector<8x64xf32>
    %319 = vector.extract_strided_slice %317 {offsets = [0, 64], sizes = [8, 64], strides = [1, 1]} : vector<8x192xf32> to vector<8x64xf32>
    %320 = vector.extract_strided_slice %317 {offsets = [0, 128], sizes = [8, 64], strides = [1, 1]} : vector<8x192xf32> to vector<8x64xf32>
    %321 = vector.extract_strided_slice %311 {offsets = [0, 192], sizes = [8, 64], strides = [1, 1]} : vector<8x256xf32> to vector<8x64xf32>
    %322 = math.tanh %321 : vector<8x64xf32>
    %323 = arith.mulf %319, %300 : vector<8x64xf32>
    %324 = arith.mulf %318, %322 : vector<8x64xf32>
    %325 = arith.addf %323, %324 : vector<8x64xf32>
    %326 = math.tanh %325 : vector<8x64xf32>
    %327 = arith.mulf %320, %326 : vector<8x64xf32>
    %328 = arith.index_cast %c3_i32_108 : i32 to index
    %c0_113 = arith.constant 0 : index
    %c0_114 = arith.constant 0 : index
    %329 = vector.load %arg7[%328, %c0_113, %c0_114] : memref<8x8x64xf32, #tpu.memory_space<vmem>>, vector<1x8x64xf32>
    %330 = vector.shape_cast %329 : vector<1x8x64xf32> to vector<8x64xf32>
    %331 = vector.shape_cast %327 : vector<8x64xf32> to vector<1x8x64xf32>
    tpu.vector_store %arg7[%328, %c0_113, %c0_114], %331 {strides = array<i32>} : memref<8x8x64xf32, #tpu.memory_space<vmem>>, vector<1x8x64xf32>,
    %c4_i32_115 = arith.constant 4 : i32
    %332 = arith.index_cast %c4_i32_115 : i32 to index
    %c0_116 = arith.constant 0 : index
    %c0_117 = arith.constant 0 : index
    %333 = vector.load %arg8[%332, %c0_116, %c0_117] : memref<8x8x256xf32, #tpu.memory_space<vmem>>, vector<1x8x256xf32>
    %334 = vector.shape_cast %333 : vector<1x8x256xf32> to vector<8x256xf32>
    %cst_118 = arith.constant dense<0.000000e+00> : vector<8x256xf32>
    %335 = tpu.matmul %327, %220, %cst_118 {dimension_numbers = #tpu.dot_dimension_numbers<[1], [0], [0], [1], [0, 0, 1, 1], [], []>} : vector<8x64xf32>, vector<64x256xf32>, vector<8x256xf32> -> vector<8x256xf32>
    %336 = arith.addf %334, %335 : vector<8x256xf32>
    %337 = vector.extract_strided_slice %336 {offsets = [0, 0], sizes = [8, 192], strides = [1, 1]} : vector<8x256xf32> to vector<8x192xf32>
    %338 = arith.negf %337 : vector<8x192xf32>
    %339 = math.exp %338 : vector<8x192xf32>
    %cst_119 = arith.constant 1.000000e+00 : f32
    %340 = vector.broadcast %cst_119 : f32 to vector<8x192xf32>
    %341 = arith.addf %340, %339 : vector<8x192xf32>
    %342 = arith.divf %340, %341 : vector<8x192xf32>
    %343 = vector.extract_strided_slice %342 {offsets = [0, 0], sizes = [8, 64], strides = [1, 1]} : vector<8x192xf32> to vector<8x64xf32>
    %344 = vector.extract_strided_slice %342 {offsets = [0, 64], sizes = [8, 64], strides = [1, 1]} : vector<8x192xf32> to vector<8x64xf32>
    %345 = vector.extract_strided_slice %342 {offsets = [0, 128], sizes = [8, 64], strides = [1, 1]} : vector<8x192xf32> to vector<8x64xf32>
    %346 = vector.extract_strided_slice %336 {offsets = [0, 192], sizes = [8, 64], strides = [1, 1]} : vector<8x256xf32> to vector<8x64xf32>
    %347 = math.tanh %346 : vector<8x64xf32>
    %348 = arith.mulf %344, %325 : vector<8x64xf32>
    %349 = arith.mulf %343, %347 : vector<8x64xf32>
    %350 = arith.addf %348, %349 : vector<8x64xf32>
    %351 = math.tanh %350 : vector<8x64xf32>
    %352 = arith.mulf %345, %351 : vector<8x64xf32>
    %353 = arith.index_cast %c4_i32_115 : i32 to index
    %c0_120 = arith.constant 0 : index
    %c0_121 = arith.constant 0 : index
    %354 = vector.load %arg7[%353, %c0_120, %c0_121] : memref<8x8x64xf32, #tpu.memory_space<vmem>>, vector<1x8x64xf32>
    %355 = vector.shape_cast %354 : vector<1x8x64xf32> to vector<8x64xf32>
    %356 = vector.shape_cast %352 : vector<8x64xf32> to vector<1x8x64xf32>
    tpu.vector_store %arg7[%353, %c0_120, %c0_121], %356 {strides = array<i32>} : memref<8x8x64xf32, #tpu.memory_space<vmem>>, vector<1x8x64xf32>,
    %c5_i32_122 = arith.constant 5 : i32
    %357 = arith.index_cast %c5_i32_122 : i32 to index
    %c0_123 = arith.constant 0 : index
    %c0_124 = arith.constant 0 : index
    %358 = vector.load %arg8[%357, %c0_123, %c0_124] : memref<8x8x256xf32, #tpu.memory_space<vmem>>, vector<1x8x256xf32>
    %359 = vector.shape_cast %358 : vector<1x8x256xf32> to vector<8x256xf32>
    %cst_125 = arith.constant dense<0.000000e+00> : vector<8x256xf32>
    %360 = tpu.matmul %352, %220, %cst_125 {dimension_numbers = #tpu.dot_dimension_numbers<[1], [0], [0], [1], [0, 0, 1, 1], [], []>} : vector<8x64xf32>, vector<64x256xf32>, vector<8x256xf32> -> vector<8x256xf32>
    %361 = arith.addf %359, %360 : vector<8x256xf32>
    %362 = vector.extract_strided_slice %361 {offsets = [0, 0], sizes = [8, 192], strides = [1, 1]} : vector<8x256xf32> to vector<8x192xf32>
    %363 = arith.negf %362 : vector<8x192xf32>
    %364 = math.exp %363 : vector<8x192xf32>
    %cst_126 = arith.constant 1.000000e+00 : f32
    %365 = vector.broadcast %cst_126 : f32 to vector<8x192xf32>
    %366 = arith.addf %365, %364 : vector<8x192xf32>
    %367 = arith.divf %365, %366 : vector<8x192xf32>
    %368 = vector.extract_strided_slice %367 {offsets = [0, 0], sizes = [8, 64], strides = [1, 1]} : vector<8x192xf32> to vector<8x64xf32>
    %369 = vector.extract_strided_slice %367 {offsets = [0, 64], sizes = [8, 64], strides = [1, 1]} : vector<8x192xf32> to vector<8x64xf32>
    %370 = vector.extract_strided_slice %367 {offsets = [0, 128], sizes = [8, 64], strides = [1, 1]} : vector<8x192xf32> to vector<8x64xf32>
    %371 = vector.extract_strided_slice %361 {offsets = [0, 192], sizes = [8, 64], strides = [1, 1]} : vector<8x256xf32> to vector<8x64xf32>
    %372 = math.tanh %371 : vector<8x64xf32>
    %373 = arith.mulf %369, %350 : vector<8x64xf32>
    %374 = arith.mulf %368, %372 : vector<8x64xf32>
    %375 = arith.addf %373, %374 : vector<8x64xf32>
    %376 = math.tanh %375 : vector<8x64xf32>
    %377 = arith.mulf %370, %376 : vector<8x64xf32>
    %378 = arith.index_cast %c5_i32_122 : i32 to index
    %c0_127 = arith.constant 0 : index
    %c0_128 = arith.constant 0 : index
    %379 = vector.load %arg7[%378, %c0_127, %c0_128] : memref<8x8x64xf32, #tpu.memory_space<vmem>>, vector<1x8x64xf32>
    %380 = vector.shape_cast %379 : vector<1x8x64xf32> to vector<8x64xf32>
    %381 = vector.shape_cast %377 : vector<8x64xf32> to vector<1x8x64xf32>
    tpu.vector_store %arg7[%378, %c0_127, %c0_128], %381 {strides = array<i32>} : memref<8x8x64xf32, #tpu.memory_space<vmem>>, vector<1x8x64xf32>,
    %c6_i32_129 = arith.constant 6 : i32
    %382 = arith.index_cast %c6_i32_129 : i32 to index
    %c0_130 = arith.constant 0 : index
    %c0_131 = arith.constant 0 : index
    %383 = vector.load %arg8[%382, %c0_130, %c0_131] : memref<8x8x256xf32, #tpu.memory_space<vmem>>, vector<1x8x256xf32>
    %384 = vector.shape_cast %383 : vector<1x8x256xf32> to vector<8x256xf32>
    %cst_132 = arith.constant dense<0.000000e+00> : vector<8x256xf32>
    %385 = tpu.matmul %377, %220, %cst_132 {dimension_numbers = #tpu.dot_dimension_numbers<[1], [0], [0], [1], [0, 0, 1, 1], [], []>} : vector<8x64xf32>, vector<64x256xf32>, vector<8x256xf32> -> vector<8x256xf32>
    %386 = arith.addf %384, %385 : vector<8x256xf32>
    %387 = vector.extract_strided_slice %386 {offsets = [0, 0], sizes = [8, 192], strides = [1, 1]} : vector<8x256xf32> to vector<8x192xf32>
    %388 = arith.negf %387 : vector<8x192xf32>
    %389 = math.exp %388 : vector<8x192xf32>
    %cst_133 = arith.constant 1.000000e+00 : f32
    %390 = vector.broadcast %cst_133 : f32 to vector<8x192xf32>
    %391 = arith.addf %390, %389 : vector<8x192xf32>
    %392 = arith.divf %390, %391 : vector<8x192xf32>
    %393 = vector.extract_strided_slice %392 {offsets = [0, 0], sizes = [8, 64], strides = [1, 1]} : vector<8x192xf32> to vector<8x64xf32>
    %394 = vector.extract_strided_slice %392 {offsets = [0, 64], sizes = [8, 64], strides = [1, 1]} : vector<8x192xf32> to vector<8x64xf32>
    %395 = vector.extract_strided_slice %392 {offsets = [0, 128], sizes = [8, 64], strides = [1, 1]} : vector<8x192xf32> to vector<8x64xf32>
    %396 = vector.extract_strided_slice %386 {offsets = [0, 192], sizes = [8, 64], strides = [1, 1]} : vector<8x256xf32> to vector<8x64xf32>
    %397 = math.tanh %396 : vector<8x64xf32>
    %398 = arith.mulf %394, %375 : vector<8x64xf32>
    %399 = arith.mulf %393, %397 : vector<8x64xf32>
    %400 = arith.addf %398, %399 : vector<8x64xf32>
    %401 = math.tanh %400 : vector<8x64xf32>
    %402 = arith.mulf %395, %401 : vector<8x64xf32>
    %403 = arith.index_cast %c6_i32_129 : i32 to index
    %c0_134 = arith.constant 0 : index
    %c0_135 = arith.constant 0 : index
    %404 = vector.load %arg7[%403, %c0_134, %c0_135] : memref<8x8x64xf32, #tpu.memory_space<vmem>>, vector<1x8x64xf32>
    %405 = vector.shape_cast %404 : vector<1x8x64xf32> to vector<8x64xf32>
    %406 = vector.shape_cast %402 : vector<8x64xf32> to vector<1x8x64xf32>
    tpu.vector_store %arg7[%403, %c0_134, %c0_135], %406 {strides = array<i32>} : memref<8x8x64xf32, #tpu.memory_space<vmem>>, vector<1x8x64xf32>,
    %c7_i32_136 = arith.constant 7 : i32
    %407 = arith.index_cast %c7_i32_136 : i32 to index
    %c0_137 = arith.constant 0 : index
    %c0_138 = arith.constant 0 : index
    %408 = vector.load %arg8[%407, %c0_137, %c0_138] : memref<8x8x256xf32, #tpu.memory_space<vmem>>, vector<1x8x256xf32>
    %409 = vector.shape_cast %408 : vector<1x8x256xf32> to vector<8x256xf32>
    %cst_139 = arith.constant dense<0.000000e+00> : vector<8x256xf32>
    %410 = tpu.matmul %402, %220, %cst_139 {dimension_numbers = #tpu.dot_dimension_numbers<[1], [0], [0], [1], [0, 0, 1, 1], [], []>} : vector<8x64xf32>, vector<64x256xf32>, vector<8x256xf32> -> vector<8x256xf32>
    %411 = arith.addf %409, %410 : vector<8x256xf32>
    %412 = vector.extract_strided_slice %411 {offsets = [0, 0], sizes = [8, 192], strides = [1, 1]} : vector<8x256xf32> to vector<8x192xf32>
    %413 = arith.negf %412 : vector<8x192xf32>
    %414 = math.exp %413 : vector<8x192xf32>
    %cst_140 = arith.constant 1.000000e+00 : f32
    %415 = vector.broadcast %cst_140 : f32 to vector<8x192xf32>
    %416 = arith.addf %415, %414 : vector<8x192xf32>
    %417 = arith.divf %415, %416 : vector<8x192xf32>
    %418 = vector.extract_strided_slice %417 {offsets = [0, 0], sizes = [8, 64], strides = [1, 1]} : vector<8x192xf32> to vector<8x64xf32>
    %419 = vector.extract_strided_slice %417 {offsets = [0, 64], sizes = [8, 64], strides = [1, 1]} : vector<8x192xf32> to vector<8x64xf32>
    %420 = vector.extract_strided_slice %417 {offsets = [0, 128], sizes = [8, 64], strides = [1, 1]} : vector<8x192xf32> to vector<8x64xf32>
    %421 = vector.extract_strided_slice %411 {offsets = [0, 192], sizes = [8, 64], strides = [1, 1]} : vector<8x256xf32> to vector<8x64xf32>
    %422 = math.tanh %421 : vector<8x64xf32>
    %423 = arith.mulf %419, %400 : vector<8x64xf32>
    %424 = arith.mulf %418, %422 : vector<8x64xf32>
    %425 = arith.addf %423, %424 : vector<8x64xf32>
    %426 = math.tanh %425 : vector<8x64xf32>
    %427 = arith.mulf %420, %426 : vector<8x64xf32>
    %428 = arith.index_cast %c7_i32_136 : i32 to index
    %c0_141 = arith.constant 0 : index
    %c0_142 = arith.constant 0 : index
    %429 = vector.load %arg7[%428, %c0_141, %c0_142] : memref<8x8x64xf32, #tpu.memory_space<vmem>>, vector<1x8x64xf32>
    %430 = vector.shape_cast %429 : vector<1x8x64xf32> to vector<8x64xf32>
    %431 = vector.shape_cast %427 : vector<8x64xf32> to vector<1x8x64xf32>
    tpu.vector_store %arg7[%428, %c0_141, %c0_142], %431 {strides = array<i32>} : memref<8x8x64xf32, #tpu.memory_space<vmem>>, vector<1x8x64xf32>,
    %c8_i32_143 = arith.constant 8 : i32
    %c2 = arith.constant 2 : index
    %c0_144 = arith.constant 0 : index
    %c0_145 = arith.constant 0 : index
    %432 = vector.load %arg1[%c2, %c0_144, %c0_145] : memref<4x64x256xf32, #tpu.memory_space<vmem>>, vector<1x64x256xf32>
    %433 = vector.shape_cast %432 : vector<1x64x256xf32> to vector<64x256xf32>
    %c2_146 = arith.constant 2 : index
    %c0_147 = arith.constant 0 : index
    %c0_148 = arith.constant 0 : index
    %434 = vector.load %arg2[%c2_146, %c0_147, %c0_148] : memref<4x64x256xf32, #tpu.memory_space<vmem>>, vector<1x64x256xf32>
    %435 = vector.shape_cast %434 : vector<1x64x256xf32> to vector<64x256xf32>
    %c2_149 = arith.constant 2 : index
    %c0_150 = arith.constant 0 : index
    %c0_151 = arith.constant 0 : index
    %436 = vector.load %arg3[%c2_149, %c0_150, %c0_151] : memref<4x1x256xf32, #tpu.memory_space<vmem>>, vector<1x1x256xf32>
    %437 = vector.shape_cast %436 : vector<1x1x256xf32> to vector<1x256xf32>
    %c0_152 = arith.constant 0 : index
    %c0_153 = arith.constant 0 : index
    %c0_154 = arith.constant 0 : index
    %438 = vector.load %arg7[%c0_152, %c0_153, %c0_154] : memref<8x8x64xf32, #tpu.memory_space<vmem>>, vector<8x8x64xf32>
    %439 = vector.shape_cast %438 : vector<8x8x64xf32> to vector<64x64xf32>
    %cst_155 = arith.constant dense<0.000000e+00> : vector<64x256xf32>
    %440 = tpu.matmul %439, %433, %cst_155 {dimension_numbers = #tpu.dot_dimension_numbers<[1], [0], [0], [1], [0, 0, 1, 1], [], []>} : vector<64x64xf32>, vector<64x256xf32>, vector<64x256xf32> -> vector<64x256xf32>
    %441 = vector.broadcast %437 : vector<1x256xf32> to vector<64x256xf32>
    %442 = arith.addf %440, %441 : vector<64x256xf32>
    %443 = vector.shape_cast %442 : vector<64x256xf32> to vector<8x8x256xf32>
    %c0_156 = arith.constant 0 : index
    %c0_157 = arith.constant 0 : index
    %c0_158 = arith.constant 0 : index
    %444 = vector.load %arg8[%c0_156, %c0_157, %c0_158] : memref<8x8x256xf32, #tpu.memory_space<vmem>>, vector<8x8x256xf32>
    tpu.vector_store %arg8[%c0_156, %c0_157, %c0_158], %443 {strides = array<i32>} : memref<8x8x256xf32, #tpu.memory_space<vmem>>, vector<8x8x256xf32>,
    %cst_159 = arith.constant 0.000000e+00 : f32
    %445 = vector.broadcast %cst_159 : f32 to vector<8x64xf32>
    %cst_160 = arith.constant 0.000000e+00 : f32
    %446 = vector.broadcast %cst_160 : f32 to vector<8x64xf32>
    %c0_i32_161 = arith.constant 0 : i32
    %447 = arith.index_cast %c0_i32_161 : i32 to index
    %c0_162 = arith.constant 0 : index
    %c0_163 = arith.constant 0 : index
    %448 = vector.load %arg8[%447, %c0_162, %c0_163] : memref<8x8x256xf32, #tpu.memory_space<vmem>>, vector<1x8x256xf32>
    %449 = vector.shape_cast %448 : vector<1x8x256xf32> to vector<8x256xf32>
    %cst_164 = arith.constant dense<0.000000e+00> : vector<8x256xf32>
    %450 = tpu.matmul %445, %435, %cst_164 {dimension_numbers = #tpu.dot_dimension_numbers<[1], [0], [0], [1], [0, 0, 1, 1], [], []>} : vector<8x64xf32>, vector<64x256xf32>, vector<8x256xf32> -> vector<8x256xf32>
    %451 = arith.addf %449, %450 : vector<8x256xf32>
    %452 = vector.extract_strided_slice %451 {offsets = [0, 0], sizes = [8, 192], strides = [1, 1]} : vector<8x256xf32> to vector<8x192xf32>
    %453 = arith.negf %452 : vector<8x192xf32>
    %454 = math.exp %453 : vector<8x192xf32>
    %cst_165 = arith.constant 1.000000e+00 : f32
    %455 = vector.broadcast %cst_165 : f32 to vector<8x192xf32>
    %456 = arith.addf %455, %454 : vector<8x192xf32>
    %457 = arith.divf %455, %456 : vector<8x192xf32>
    %458 = vector.extract_strided_slice %457 {offsets = [0, 0], sizes = [8, 64], strides = [1, 1]} : vector<8x192xf32> to vector<8x64xf32>
    %459 = vector.extract_strided_slice %457 {offsets = [0, 64], sizes = [8, 64], strides = [1, 1]} : vector<8x192xf32> to vector<8x64xf32>
    %460 = vector.extract_strided_slice %457 {offsets = [0, 128], sizes = [8, 64], strides = [1, 1]} : vector<8x192xf32> to vector<8x64xf32>
    %461 = vector.extract_strided_slice %451 {offsets = [0, 192], sizes = [8, 64], strides = [1, 1]} : vector<8x256xf32> to vector<8x64xf32>
    %462 = math.tanh %461 : vector<8x64xf32>
    %463 = arith.mulf %459, %446 : vector<8x64xf32>
    %464 = arith.mulf %458, %462 : vector<8x64xf32>
    %465 = arith.addf %463, %464 : vector<8x64xf32>
    %466 = math.tanh %465 : vector<8x64xf32>
    %467 = arith.mulf %460, %466 : vector<8x64xf32>
    %468 = arith.index_cast %c0_i32_161 : i32 to index
    %c0_166 = arith.constant 0 : index
    %c0_167 = arith.constant 0 : index
    %469 = vector.load %arg7[%468, %c0_166, %c0_167] : memref<8x8x64xf32, #tpu.memory_space<vmem>>, vector<1x8x64xf32>
    %470 = vector.shape_cast %469 : vector<1x8x64xf32> to vector<8x64xf32>
    %471 = vector.shape_cast %467 : vector<8x64xf32> to vector<1x8x64xf32>
    tpu.vector_store %arg7[%468, %c0_166, %c0_167], %471 {strides = array<i32>} : memref<8x8x64xf32, #tpu.memory_space<vmem>>, vector<1x8x64xf32>,
    %c1_i32_168 = arith.constant 1 : i32
    %472 = arith.index_cast %c1_i32_168 : i32 to index
    %c0_169 = arith.constant 0 : index
    %c0_170 = arith.constant 0 : index
    %473 = vector.load %arg8[%472, %c0_169, %c0_170] : memref<8x8x256xf32, #tpu.memory_space<vmem>>, vector<1x8x256xf32>
    %474 = vector.shape_cast %473 : vector<1x8x256xf32> to vector<8x256xf32>
    %cst_171 = arith.constant dense<0.000000e+00> : vector<8x256xf32>
    %475 = tpu.matmul %467, %435, %cst_171 {dimension_numbers = #tpu.dot_dimension_numbers<[1], [0], [0], [1], [0, 0, 1, 1], [], []>} : vector<8x64xf32>, vector<64x256xf32>, vector<8x256xf32> -> vector<8x256xf32>
    %476 = arith.addf %474, %475 : vector<8x256xf32>
    %477 = vector.extract_strided_slice %476 {offsets = [0, 0], sizes = [8, 192], strides = [1, 1]} : vector<8x256xf32> to vector<8x192xf32>
    %478 = arith.negf %477 : vector<8x192xf32>
    %479 = math.exp %478 : vector<8x192xf32>
    %cst_172 = arith.constant 1.000000e+00 : f32
    %480 = vector.broadcast %cst_172 : f32 to vector<8x192xf32>
    %481 = arith.addf %480, %479 : vector<8x192xf32>
    %482 = arith.divf %480, %481 : vector<8x192xf32>
    %483 = vector.extract_strided_slice %482 {offsets = [0, 0], sizes = [8, 64], strides = [1, 1]} : vector<8x192xf32> to vector<8x64xf32>
    %484 = vector.extract_strided_slice %482 {offsets = [0, 64], sizes = [8, 64], strides = [1, 1]} : vector<8x192xf32> to vector<8x64xf32>
    %485 = vector.extract_strided_slice %482 {offsets = [0, 128], sizes = [8, 64], strides = [1, 1]} : vector<8x192xf32> to vector<8x64xf32>
    %486 = vector.extract_strided_slice %476 {offsets = [0, 192], sizes = [8, 64], strides = [1, 1]} : vector<8x256xf32> to vector<8x64xf32>
    %487 = math.tanh %486 : vector<8x64xf32>
    %488 = arith.mulf %484, %465 : vector<8x64xf32>
    %489 = arith.mulf %483, %487 : vector<8x64xf32>
    %490 = arith.addf %488, %489 : vector<8x64xf32>
    %491 = math.tanh %490 : vector<8x64xf32>
    %492 = arith.mulf %485, %491 : vector<8x64xf32>
    %493 = arith.index_cast %c1_i32_168 : i32 to index
    %c0_173 = arith.constant 0 : index
    %c0_174 = arith.constant 0 : index
    %494 = vector.load %arg7[%493, %c0_173, %c0_174] : memref<8x8x64xf32, #tpu.memory_space<vmem>>, vector<1x8x64xf32>
    %495 = vector.shape_cast %494 : vector<1x8x64xf32> to vector<8x64xf32>
    %496 = vector.shape_cast %492 : vector<8x64xf32> to vector<1x8x64xf32>
    tpu.vector_store %arg7[%493, %c0_173, %c0_174], %496 {strides = array<i32>} : memref<8x8x64xf32, #tpu.memory_space<vmem>>, vector<1x8x64xf32>,
    %c2_i32_175 = arith.constant 2 : i32
    %497 = arith.index_cast %c2_i32_175 : i32 to index
    %c0_176 = arith.constant 0 : index
    %c0_177 = arith.constant 0 : index
    %498 = vector.load %arg8[%497, %c0_176, %c0_177] : memref<8x8x256xf32, #tpu.memory_space<vmem>>, vector<1x8x256xf32>
    %499 = vector.shape_cast %498 : vector<1x8x256xf32> to vector<8x256xf32>
    %cst_178 = arith.constant dense<0.000000e+00> : vector<8x256xf32>
    %500 = tpu.matmul %492, %435, %cst_178 {dimension_numbers = #tpu.dot_dimension_numbers<[1], [0], [0], [1], [0, 0, 1, 1], [], []>} : vector<8x64xf32>, vector<64x256xf32>, vector<8x256xf32> -> vector<8x256xf32>
    %501 = arith.addf %499, %500 : vector<8x256xf32>
    %502 = vector.extract_strided_slice %501 {offsets = [0, 0], sizes = [8, 192], strides = [1, 1]} : vector<8x256xf32> to vector<8x192xf32>
    %503 = arith.negf %502 : vector<8x192xf32>
    %504 = math.exp %503 : vector<8x192xf32>
    %cst_179 = arith.constant 1.000000e+00 : f32
    %505 = vector.broadcast %cst_179 : f32 to vector<8x192xf32>
    %506 = arith.addf %505, %504 : vector<8x192xf32>
    %507 = arith.divf %505, %506 : vector<8x192xf32>
    %508 = vector.extract_strided_slice %507 {offsets = [0, 0], sizes = [8, 64], strides = [1, 1]} : vector<8x192xf32> to vector<8x64xf32>
    %509 = vector.extract_strided_slice %507 {offsets = [0, 64], sizes = [8, 64], strides = [1, 1]} : vector<8x192xf32> to vector<8x64xf32>
    %510 = vector.extract_strided_slice %507 {offsets = [0, 128], sizes = [8, 64], strides = [1, 1]} : vector<8x192xf32> to vector<8x64xf32>
    %511 = vector.extract_strided_slice %501 {offsets = [0, 192], sizes = [8, 64], strides = [1, 1]} : vector<8x256xf32> to vector<8x64xf32>
    %512 = math.tanh %511 : vector<8x64xf32>
    %513 = arith.mulf %509, %490 : vector<8x64xf32>
    %514 = arith.mulf %508, %512 : vector<8x64xf32>
    %515 = arith.addf %513, %514 : vector<8x64xf32>
    %516 = math.tanh %515 : vector<8x64xf32>
    %517 = arith.mulf %510, %516 : vector<8x64xf32>
    %518 = arith.index_cast %c2_i32_175 : i32 to index
    %c0_180 = arith.constant 0 : index
    %c0_181 = arith.constant 0 : index
    %519 = vector.load %arg7[%518, %c0_180, %c0_181] : memref<8x8x64xf32, #tpu.memory_space<vmem>>, vector<1x8x64xf32>
    %520 = vector.shape_cast %519 : vector<1x8x64xf32> to vector<8x64xf32>
    %521 = vector.shape_cast %517 : vector<8x64xf32> to vector<1x8x64xf32>
    tpu.vector_store %arg7[%518, %c0_180, %c0_181], %521 {strides = array<i32>} : memref<8x8x64xf32, #tpu.memory_space<vmem>>, vector<1x8x64xf32>,
    %c3_i32_182 = arith.constant 3 : i32
    %522 = arith.index_cast %c3_i32_182 : i32 to index
    %c0_183 = arith.constant 0 : index
    %c0_184 = arith.constant 0 : index
    %523 = vector.load %arg8[%522, %c0_183, %c0_184] : memref<8x8x256xf32, #tpu.memory_space<vmem>>, vector<1x8x256xf32>
    %524 = vector.shape_cast %523 : vector<1x8x256xf32> to vector<8x256xf32>
    %cst_185 = arith.constant dense<0.000000e+00> : vector<8x256xf32>
    %525 = tpu.matmul %517, %435, %cst_185 {dimension_numbers = #tpu.dot_dimension_numbers<[1], [0], [0], [1], [0, 0, 1, 1], [], []>} : vector<8x64xf32>, vector<64x256xf32>, vector<8x256xf32> -> vector<8x256xf32>
    %526 = arith.addf %524, %525 : vector<8x256xf32>
    %527 = vector.extract_strided_slice %526 {offsets = [0, 0], sizes = [8, 192], strides = [1, 1]} : vector<8x256xf32> to vector<8x192xf32>
    %528 = arith.negf %527 : vector<8x192xf32>
    %529 = math.exp %528 : vector<8x192xf32>
    %cst_186 = arith.constant 1.000000e+00 : f32
    %530 = vector.broadcast %cst_186 : f32 to vector<8x192xf32>
    %531 = arith.addf %530, %529 : vector<8x192xf32>
    %532 = arith.divf %530, %531 : vector<8x192xf32>
    %533 = vector.extract_strided_slice %532 {offsets = [0, 0], sizes = [8, 64], strides = [1, 1]} : vector<8x192xf32> to vector<8x64xf32>
    %534 = vector.extract_strided_slice %532 {offsets = [0, 64], sizes = [8, 64], strides = [1, 1]} : vector<8x192xf32> to vector<8x64xf32>
    %535 = vector.extract_strided_slice %532 {offsets = [0, 128], sizes = [8, 64], strides = [1, 1]} : vector<8x192xf32> to vector<8x64xf32>
    %536 = vector.extract_strided_slice %526 {offsets = [0, 192], sizes = [8, 64], strides = [1, 1]} : vector<8x256xf32> to vector<8x64xf32>
    %537 = math.tanh %536 : vector<8x64xf32>
    %538 = arith.mulf %534, %515 : vector<8x64xf32>
    %539 = arith.mulf %533, %537 : vector<8x64xf32>
    %540 = arith.addf %538, %539 : vector<8x64xf32>
    %541 = math.tanh %540 : vector<8x64xf32>
    %542 = arith.mulf %535, %541 : vector<8x64xf32>
    %543 = arith.index_cast %c3_i32_182 : i32 to index
    %c0_187 = arith.constant 0 : index
    %c0_188 = arith.constant 0 : index
    %544 = vector.load %arg7[%543, %c0_187, %c0_188] : memref<8x8x64xf32, #tpu.memory_space<vmem>>, vector<1x8x64xf32>
    %545 = vector.shape_cast %544 : vector<1x8x64xf32> to vector<8x64xf32>
    %546 = vector.shape_cast %542 : vector<8x64xf32> to vector<1x8x64xf32>
    tpu.vector_store %arg7[%543, %c0_187, %c0_188], %546 {strides = array<i32>} : memref<8x8x64xf32, #tpu.memory_space<vmem>>, vector<1x8x64xf32>,
    %c4_i32_189 = arith.constant 4 : i32
    %547 = arith.index_cast %c4_i32_189 : i32 to index
    %c0_190 = arith.constant 0 : index
    %c0_191 = arith.constant 0 : index
    %548 = vector.load %arg8[%547, %c0_190, %c0_191] : memref<8x8x256xf32, #tpu.memory_space<vmem>>, vector<1x8x256xf32>
    %549 = vector.shape_cast %548 : vector<1x8x256xf32> to vector<8x256xf32>
    %cst_192 = arith.constant dense<0.000000e+00> : vector<8x256xf32>
    %550 = tpu.matmul %542, %435, %cst_192 {dimension_numbers = #tpu.dot_dimension_numbers<[1], [0], [0], [1], [0, 0, 1, 1], [], []>} : vector<8x64xf32>, vector<64x256xf32>, vector<8x256xf32> -> vector<8x256xf32>
    %551 = arith.addf %549, %550 : vector<8x256xf32>
    %552 = vector.extract_strided_slice %551 {offsets = [0, 0], sizes = [8, 192], strides = [1, 1]} : vector<8x256xf32> to vector<8x192xf32>
    %553 = arith.negf %552 : vector<8x192xf32>
    %554 = math.exp %553 : vector<8x192xf32>
    %cst_193 = arith.constant 1.000000e+00 : f32
    %555 = vector.broadcast %cst_193 : f32 to vector<8x192xf32>
    %556 = arith.addf %555, %554 : vector<8x192xf32>
    %557 = arith.divf %555, %556 : vector<8x192xf32>
    %558 = vector.extract_strided_slice %557 {offsets = [0, 0], sizes = [8, 64], strides = [1, 1]} : vector<8x192xf32> to vector<8x64xf32>
    %559 = vector.extract_strided_slice %557 {offsets = [0, 64], sizes = [8, 64], strides = [1, 1]} : vector<8x192xf32> to vector<8x64xf32>
    %560 = vector.extract_strided_slice %557 {offsets = [0, 128], sizes = [8, 64], strides = [1, 1]} : vector<8x192xf32> to vector<8x64xf32>
    %561 = vector.extract_strided_slice %551 {offsets = [0, 192], sizes = [8, 64], strides = [1, 1]} : vector<8x256xf32> to vector<8x64xf32>
    %562 = math.tanh %561 : vector<8x64xf32>
    %563 = arith.mulf %559, %540 : vector<8x64xf32>
    %564 = arith.mulf %558, %562 : vector<8x64xf32>
    %565 = arith.addf %563, %564 : vector<8x64xf32>
    %566 = math.tanh %565 : vector<8x64xf32>
    %567 = arith.mulf %560, %566 : vector<8x64xf32>
    %568 = arith.index_cast %c4_i32_189 : i32 to index
    %c0_194 = arith.constant 0 : index
    %c0_195 = arith.constant 0 : index
    %569 = vector.load %arg7[%568, %c0_194, %c0_195] : memref<8x8x64xf32, #tpu.memory_space<vmem>>, vector<1x8x64xf32>
    %570 = vector.shape_cast %569 : vector<1x8x64xf32> to vector<8x64xf32>
    %571 = vector.shape_cast %567 : vector<8x64xf32> to vector<1x8x64xf32>
    tpu.vector_store %arg7[%568, %c0_194, %c0_195], %571 {strides = array<i32>} : memref<8x8x64xf32, #tpu.memory_space<vmem>>, vector<1x8x64xf32>,
    %c5_i32_196 = arith.constant 5 : i32
    %572 = arith.index_cast %c5_i32_196 : i32 to index
    %c0_197 = arith.constant 0 : index
    %c0_198 = arith.constant 0 : index
    %573 = vector.load %arg8[%572, %c0_197, %c0_198] : memref<8x8x256xf32, #tpu.memory_space<vmem>>, vector<1x8x256xf32>
    %574 = vector.shape_cast %573 : vector<1x8x256xf32> to vector<8x256xf32>
    %cst_199 = arith.constant dense<0.000000e+00> : vector<8x256xf32>
    %575 = tpu.matmul %567, %435, %cst_199 {dimension_numbers = #tpu.dot_dimension_numbers<[1], [0], [0], [1], [0, 0, 1, 1], [], []>} : vector<8x64xf32>, vector<64x256xf32>, vector<8x256xf32> -> vector<8x256xf32>
    %576 = arith.addf %574, %575 : vector<8x256xf32>
    %577 = vector.extract_strided_slice %576 {offsets = [0, 0], sizes = [8, 192], strides = [1, 1]} : vector<8x256xf32> to vector<8x192xf32>
    %578 = arith.negf %577 : vector<8x192xf32>
    %579 = math.exp %578 : vector<8x192xf32>
    %cst_200 = arith.constant 1.000000e+00 : f32
    %580 = vector.broadcast %cst_200 : f32 to vector<8x192xf32>
    %581 = arith.addf %580, %579 : vector<8x192xf32>
    %582 = arith.divf %580, %581 : vector<8x192xf32>
    %583 = vector.extract_strided_slice %582 {offsets = [0, 0], sizes = [8, 64], strides = [1, 1]} : vector<8x192xf32> to vector<8x64xf32>
    %584 = vector.extract_strided_slice %582 {offsets = [0, 64], sizes = [8, 64], strides = [1, 1]} : vector<8x192xf32> to vector<8x64xf32>
    %585 = vector.extract_strided_slice %582 {offsets = [0, 128], sizes = [8, 64], strides = [1, 1]} : vector<8x192xf32> to vector<8x64xf32>
    %586 = vector.extract_strided_slice %576 {offsets = [0, 192], sizes = [8, 64], strides = [1, 1]} : vector<8x256xf32> to vector<8x64xf32>
    %587 = math.tanh %586 : vector<8x64xf32>
    %588 = arith.mulf %584, %565 : vector<8x64xf32>
    %589 = arith.mulf %583, %587 : vector<8x64xf32>
    %590 = arith.addf %588, %589 : vector<8x64xf32>
    %591 = math.tanh %590 : vector<8x64xf32>
    %592 = arith.mulf %585, %591 : vector<8x64xf32>
    %593 = arith.index_cast %c5_i32_196 : i32 to index
    %c0_201 = arith.constant 0 : index
    %c0_202 = arith.constant 0 : index
    %594 = vector.load %arg7[%593, %c0_201, %c0_202] : memref<8x8x64xf32, #tpu.memory_space<vmem>>, vector<1x8x64xf32>
    %595 = vector.shape_cast %594 : vector<1x8x64xf32> to vector<8x64xf32>
    %596 = vector.shape_cast %592 : vector<8x64xf32> to vector<1x8x64xf32>
    tpu.vector_store %arg7[%593, %c0_201, %c0_202], %596 {strides = array<i32>} : memref<8x8x64xf32, #tpu.memory_space<vmem>>, vector<1x8x64xf32>,
    %c6_i32_203 = arith.constant 6 : i32
    %597 = arith.index_cast %c6_i32_203 : i32 to index
    %c0_204 = arith.constant 0 : index
    %c0_205 = arith.constant 0 : index
    %598 = vector.load %arg8[%597, %c0_204, %c0_205] : memref<8x8x256xf32, #tpu.memory_space<vmem>>, vector<1x8x256xf32>
    %599 = vector.shape_cast %598 : vector<1x8x256xf32> to vector<8x256xf32>
    %cst_206 = arith.constant dense<0.000000e+00> : vector<8x256xf32>
    %600 = tpu.matmul %592, %435, %cst_206 {dimension_numbers = #tpu.dot_dimension_numbers<[1], [0], [0], [1], [0, 0, 1, 1], [], []>} : vector<8x64xf32>, vector<64x256xf32>, vector<8x256xf32> -> vector<8x256xf32>
    %601 = arith.addf %599, %600 : vector<8x256xf32>
    %602 = vector.extract_strided_slice %601 {offsets = [0, 0], sizes = [8, 192], strides = [1, 1]} : vector<8x256xf32> to vector<8x192xf32>
    %603 = arith.negf %602 : vector<8x192xf32>
    %604 = math.exp %603 : vector<8x192xf32>
    %cst_207 = arith.constant 1.000000e+00 : f32
    %605 = vector.broadcast %cst_207 : f32 to vector<8x192xf32>
    %606 = arith.addf %605, %604 : vector<8x192xf32>
    %607 = arith.divf %605, %606 : vector<8x192xf32>
    %608 = vector.extract_strided_slice %607 {offsets = [0, 0], sizes = [8, 64], strides = [1, 1]} : vector<8x192xf32> to vector<8x64xf32>
    %609 = vector.extract_strided_slice %607 {offsets = [0, 64], sizes = [8, 64], strides = [1, 1]} : vector<8x192xf32> to vector<8x64xf32>
    %610 = vector.extract_strided_slice %607 {offsets = [0, 128], sizes = [8, 64], strides = [1, 1]} : vector<8x192xf32> to vector<8x64xf32>
    %611 = vector.extract_strided_slice %601 {offsets = [0, 192], sizes = [8, 64], strides = [1, 1]} : vector<8x256xf32> to vector<8x64xf32>
    %612 = math.tanh %611 : vector<8x64xf32>
    %613 = arith.mulf %609, %590 : vector<8x64xf32>
    %614 = arith.mulf %608, %612 : vector<8x64xf32>
    %615 = arith.addf %613, %614 : vector<8x64xf32>
    %616 = math.tanh %615 : vector<8x64xf32>
    %617 = arith.mulf %610, %616 : vector<8x64xf32>
    %618 = arith.index_cast %c6_i32_203 : i32 to index
    %c0_208 = arith.constant 0 : index
    %c0_209 = arith.constant 0 : index
    %619 = vector.load %arg7[%618, %c0_208, %c0_209] : memref<8x8x64xf32, #tpu.memory_space<vmem>>, vector<1x8x64xf32>
    %620 = vector.shape_cast %619 : vector<1x8x64xf32> to vector<8x64xf32>
    %621 = vector.shape_cast %617 : vector<8x64xf32> to vector<1x8x64xf32>
    tpu.vector_store %arg7[%618, %c0_208, %c0_209], %621 {strides = array<i32>} : memref<8x8x64xf32, #tpu.memory_space<vmem>>, vector<1x8x64xf32>,
    %c7_i32_210 = arith.constant 7 : i32
    %622 = arith.index_cast %c7_i32_210 : i32 to index
    %c0_211 = arith.constant 0 : index
    %c0_212 = arith.constant 0 : index
    %623 = vector.load %arg8[%622, %c0_211, %c0_212] : memref<8x8x256xf32, #tpu.memory_space<vmem>>, vector<1x8x256xf32>
    %624 = vector.shape_cast %623 : vector<1x8x256xf32> to vector<8x256xf32>
    %cst_213 = arith.constant dense<0.000000e+00> : vector<8x256xf32>
    %625 = tpu.matmul %617, %435, %cst_213 {dimension_numbers = #tpu.dot_dimension_numbers<[1], [0], [0], [1], [0, 0, 1, 1], [], []>} : vector<8x64xf32>, vector<64x256xf32>, vector<8x256xf32> -> vector<8x256xf32>
    %626 = arith.addf %624, %625 : vector<8x256xf32>
    %627 = vector.extract_strided_slice %626 {offsets = [0, 0], sizes = [8, 192], strides = [1, 1]} : vector<8x256xf32> to vector<8x192xf32>
    %628 = arith.negf %627 : vector<8x192xf32>
    %629 = math.exp %628 : vector<8x192xf32>
    %cst_214 = arith.constant 1.000000e+00 : f32
    %630 = vector.broadcast %cst_214 : f32 to vector<8x192xf32>
    %631 = arith.addf %630, %629 : vector<8x192xf32>
    %632 = arith.divf %630, %631 : vector<8x192xf32>
    %633 = vector.extract_strided_slice %632 {offsets = [0, 0], sizes = [8, 64], strides = [1, 1]} : vector<8x192xf32> to vector<8x64xf32>
    %634 = vector.extract_strided_slice %632 {offsets = [0, 64], sizes = [8, 64], strides = [1, 1]} : vector<8x192xf32> to vector<8x64xf32>
    %635 = vector.extract_strided_slice %632 {offsets = [0, 128], sizes = [8, 64], strides = [1, 1]} : vector<8x192xf32> to vector<8x64xf32>
    %636 = vector.extract_strided_slice %626 {offsets = [0, 192], sizes = [8, 64], strides = [1, 1]} : vector<8x256xf32> to vector<8x64xf32>
    %637 = math.tanh %636 : vector<8x64xf32>
    %638 = arith.mulf %634, %615 : vector<8x64xf32>
    %639 = arith.mulf %633, %637 : vector<8x64xf32>
    %640 = arith.addf %638, %639 : vector<8x64xf32>
    %641 = math.tanh %640 : vector<8x64xf32>
    %642 = arith.mulf %635, %641 : vector<8x64xf32>
    %643 = arith.index_cast %c7_i32_210 : i32 to index
    %c0_215 = arith.constant 0 : index
    %c0_216 = arith.constant 0 : index
    %644 = vector.load %arg7[%643, %c0_215, %c0_216] : memref<8x8x64xf32, #tpu.memory_space<vmem>>, vector<1x8x64xf32>
    %645 = vector.shape_cast %644 : vector<1x8x64xf32> to vector<8x64xf32>
    %646 = vector.shape_cast %642 : vector<8x64xf32> to vector<1x8x64xf32>
    tpu.vector_store %arg7[%643, %c0_215, %c0_216], %646 {strides = array<i32>} : memref<8x8x64xf32, #tpu.memory_space<vmem>>, vector<1x8x64xf32>,
    %c8_i32_217 = arith.constant 8 : i32
    %c3 = arith.constant 3 : index
    %c0_218 = arith.constant 0 : index
    %c0_219 = arith.constant 0 : index
    %647 = vector.load %arg1[%c3, %c0_218, %c0_219] : memref<4x64x256xf32, #tpu.memory_space<vmem>>, vector<1x64x256xf32>
    %648 = vector.shape_cast %647 : vector<1x64x256xf32> to vector<64x256xf32>
    %c3_220 = arith.constant 3 : index
    %c0_221 = arith.constant 0 : index
    %c0_222 = arith.constant 0 : index
    %649 = vector.load %arg2[%c3_220, %c0_221, %c0_222] : memref<4x64x256xf32, #tpu.memory_space<vmem>>, vector<1x64x256xf32>
    %650 = vector.shape_cast %649 : vector<1x64x256xf32> to vector<64x256xf32>
    %c3_223 = arith.constant 3 : index
    %c0_224 = arith.constant 0 : index
    %c0_225 = arith.constant 0 : index
    %651 = vector.load %arg3[%c3_223, %c0_224, %c0_225] : memref<4x1x256xf32, #tpu.memory_space<vmem>>, vector<1x1x256xf32>
    %652 = vector.shape_cast %651 : vector<1x1x256xf32> to vector<1x256xf32>
    %c0_226 = arith.constant 0 : index
    %c0_227 = arith.constant 0 : index
    %c0_228 = arith.constant 0 : index
    %653 = vector.load %arg7[%c0_226, %c0_227, %c0_228] : memref<8x8x64xf32, #tpu.memory_space<vmem>>, vector<8x8x64xf32>
    %654 = vector.shape_cast %653 : vector<8x8x64xf32> to vector<64x64xf32>
    %cst_229 = arith.constant dense<0.000000e+00> : vector<64x256xf32>
    %655 = tpu.matmul %654, %648, %cst_229 {dimension_numbers = #tpu.dot_dimension_numbers<[1], [0], [0], [1], [0, 0, 1, 1], [], []>} : vector<64x64xf32>, vector<64x256xf32>, vector<64x256xf32> -> vector<64x256xf32>
    %656 = vector.broadcast %652 : vector<1x256xf32> to vector<64x256xf32>
    %657 = arith.addf %655, %656 : vector<64x256xf32>
    %658 = vector.shape_cast %657 : vector<64x256xf32> to vector<8x8x256xf32>
    %c0_230 = arith.constant 0 : index
    %c0_231 = arith.constant 0 : index
    %c0_232 = arith.constant 0 : index
    %659 = vector.load %arg8[%c0_230, %c0_231, %c0_232] : memref<8x8x256xf32, #tpu.memory_space<vmem>>, vector<8x8x256xf32>
    tpu.vector_store %arg8[%c0_230, %c0_231, %c0_232], %658 {strides = array<i32>} : memref<8x8x256xf32, #tpu.memory_space<vmem>>, vector<8x8x256xf32>,
    %cst_233 = arith.constant 0.000000e+00 : f32
    %660 = vector.broadcast %cst_233 : f32 to vector<8x64xf32>
    %cst_234 = arith.constant 0.000000e+00 : f32
    %661 = vector.broadcast %cst_234 : f32 to vector<8x64xf32>
    %c0_i32_235 = arith.constant 0 : i32
    %662 = arith.index_cast %c0_i32_235 : i32 to index
    %c0_236 = arith.constant 0 : index
    %c0_237 = arith.constant 0 : index
    %663 = vector.load %arg8[%662, %c0_236, %c0_237] : memref<8x8x256xf32, #tpu.memory_space<vmem>>, vector<1x8x256xf32>
    %664 = vector.shape_cast %663 : vector<1x8x256xf32> to vector<8x256xf32>
    %cst_238 = arith.constant dense<0.000000e+00> : vector<8x256xf32>
    %665 = tpu.matmul %660, %650, %cst_238 {dimension_numbers = #tpu.dot_dimension_numbers<[1], [0], [0], [1], [0, 0, 1, 1], [], []>} : vector<8x64xf32>, vector<64x256xf32>, vector<8x256xf32> -> vector<8x256xf32>
    %666 = arith.addf %664, %665 : vector<8x256xf32>
    %667 = vector.extract_strided_slice %666 {offsets = [0, 0], sizes = [8, 192], strides = [1, 1]} : vector<8x256xf32> to vector<8x192xf32>
    %668 = arith.negf %667 : vector<8x192xf32>
    %669 = math.exp %668 : vector<8x192xf32>
    %cst_239 = arith.constant 1.000000e+00 : f32
    %670 = vector.broadcast %cst_239 : f32 to vector<8x192xf32>
    %671 = arith.addf %670, %669 : vector<8x192xf32>
    %672 = arith.divf %670, %671 : vector<8x192xf32>
    %673 = vector.extract_strided_slice %672 {offsets = [0, 0], sizes = [8, 64], strides = [1, 1]} : vector<8x192xf32> to vector<8x64xf32>
    %674 = vector.extract_strided_slice %672 {offsets = [0, 64], sizes = [8, 64], strides = [1, 1]} : vector<8x192xf32> to vector<8x64xf32>
    %675 = vector.extract_strided_slice %672 {offsets = [0, 128], sizes = [8, 64], strides = [1, 1]} : vector<8x192xf32> to vector<8x64xf32>
    %676 = vector.extract_strided_slice %666 {offsets = [0, 192], sizes = [8, 64], strides = [1, 1]} : vector<8x256xf32> to vector<8x64xf32>
    %677 = math.tanh %676 : vector<8x64xf32>
    %678 = arith.mulf %674, %661 : vector<8x64xf32>
    %679 = arith.mulf %673, %677 : vector<8x64xf32>
    %680 = arith.addf %678, %679 : vector<8x64xf32>
    %681 = math.tanh %680 : vector<8x64xf32>
    %682 = arith.mulf %675, %681 : vector<8x64xf32>
    %683 = arith.index_cast %c0_i32_235 : i32 to index
    %c0_240 = arith.constant 0 : index
    %c0_241 = arith.constant 0 : index
    %684 = vector.load %arg7[%683, %c0_240, %c0_241] : memref<8x8x64xf32, #tpu.memory_space<vmem>>, vector<1x8x64xf32>
    %685 = vector.shape_cast %684 : vector<1x8x64xf32> to vector<8x64xf32>
    %686 = vector.shape_cast %682 : vector<8x64xf32> to vector<1x8x64xf32>
    tpu.vector_store %arg7[%683, %c0_240, %c0_241], %686 {strides = array<i32>} : memref<8x8x64xf32, #tpu.memory_space<vmem>>, vector<1x8x64xf32>,
    %c1_i32_242 = arith.constant 1 : i32
    %687 = arith.index_cast %c1_i32_242 : i32 to index
    %c0_243 = arith.constant 0 : index
    %c0_244 = arith.constant 0 : index
    %688 = vector.load %arg8[%687, %c0_243, %c0_244] : memref<8x8x256xf32, #tpu.memory_space<vmem>>, vector<1x8x256xf32>
    %689 = vector.shape_cast %688 : vector<1x8x256xf32> to vector<8x256xf32>
    %cst_245 = arith.constant dense<0.000000e+00> : vector<8x256xf32>
    %690 = tpu.matmul %682, %650, %cst_245 {dimension_numbers = #tpu.dot_dimension_numbers<[1], [0], [0], [1], [0, 0, 1, 1], [], []>} : vector<8x64xf32>, vector<64x256xf32>, vector<8x256xf32> -> vector<8x256xf32>
    %691 = arith.addf %689, %690 : vector<8x256xf32>
    %692 = vector.extract_strided_slice %691 {offsets = [0, 0], sizes = [8, 192], strides = [1, 1]} : vector<8x256xf32> to vector<8x192xf32>
    %693 = arith.negf %692 : vector<8x192xf32>
    %694 = math.exp %693 : vector<8x192xf32>
    %cst_246 = arith.constant 1.000000e+00 : f32
    %695 = vector.broadcast %cst_246 : f32 to vector<8x192xf32>
    %696 = arith.addf %695, %694 : vector<8x192xf32>
    %697 = arith.divf %695, %696 : vector<8x192xf32>
    %698 = vector.extract_strided_slice %697 {offsets = [0, 0], sizes = [8, 64], strides = [1, 1]} : vector<8x192xf32> to vector<8x64xf32>
    %699 = vector.extract_strided_slice %697 {offsets = [0, 64], sizes = [8, 64], strides = [1, 1]} : vector<8x192xf32> to vector<8x64xf32>
    %700 = vector.extract_strided_slice %697 {offsets = [0, 128], sizes = [8, 64], strides = [1, 1]} : vector<8x192xf32> to vector<8x64xf32>
    %701 = vector.extract_strided_slice %691 {offsets = [0, 192], sizes = [8, 64], strides = [1, 1]} : vector<8x256xf32> to vector<8x64xf32>
    %702 = math.tanh %701 : vector<8x64xf32>
    %703 = arith.mulf %699, %680 : vector<8x64xf32>
    %704 = arith.mulf %698, %702 : vector<8x64xf32>
    %705 = arith.addf %703, %704 : vector<8x64xf32>
    %706 = math.tanh %705 : vector<8x64xf32>
    %707 = arith.mulf %700, %706 : vector<8x64xf32>
    %708 = arith.index_cast %c1_i32_242 : i32 to index
    %c0_247 = arith.constant 0 : index
    %c0_248 = arith.constant 0 : index
    %709 = vector.load %arg7[%708, %c0_247, %c0_248] : memref<8x8x64xf32, #tpu.memory_space<vmem>>, vector<1x8x64xf32>
    %710 = vector.shape_cast %709 : vector<1x8x64xf32> to vector<8x64xf32>
    %711 = vector.shape_cast %707 : vector<8x64xf32> to vector<1x8x64xf32>
    tpu.vector_store %arg7[%708, %c0_247, %c0_248], %711 {strides = array<i32>} : memref<8x8x64xf32, #tpu.memory_space<vmem>>, vector<1x8x64xf32>,
    %c2_i32_249 = arith.constant 2 : i32
    %712 = arith.index_cast %c2_i32_249 : i32 to index
    %c0_250 = arith.constant 0 : index
    %c0_251 = arith.constant 0 : index
    %713 = vector.load %arg8[%712, %c0_250, %c0_251] : memref<8x8x256xf32, #tpu.memory_space<vmem>>, vector<1x8x256xf32>
    %714 = vector.shape_cast %713 : vector<1x8x256xf32> to vector<8x256xf32>
    %cst_252 = arith.constant dense<0.000000e+00> : vector<8x256xf32>
    %715 = tpu.matmul %707, %650, %cst_252 {dimension_numbers = #tpu.dot_dimension_numbers<[1], [0], [0], [1], [0, 0, 1, 1], [], []>} : vector<8x64xf32>, vector<64x256xf32>, vector<8x256xf32> -> vector<8x256xf32>
    %716 = arith.addf %714, %715 : vector<8x256xf32>
    %717 = vector.extract_strided_slice %716 {offsets = [0, 0], sizes = [8, 192], strides = [1, 1]} : vector<8x256xf32> to vector<8x192xf32>
    %718 = arith.negf %717 : vector<8x192xf32>
    %719 = math.exp %718 : vector<8x192xf32>
    %cst_253 = arith.constant 1.000000e+00 : f32
    %720 = vector.broadcast %cst_253 : f32 to vector<8x192xf32>
    %721 = arith.addf %720, %719 : vector<8x192xf32>
    %722 = arith.divf %720, %721 : vector<8x192xf32>
    %723 = vector.extract_strided_slice %722 {offsets = [0, 0], sizes = [8, 64], strides = [1, 1]} : vector<8x192xf32> to vector<8x64xf32>
    %724 = vector.extract_strided_slice %722 {offsets = [0, 64], sizes = [8, 64], strides = [1, 1]} : vector<8x192xf32> to vector<8x64xf32>
    %725 = vector.extract_strided_slice %722 {offsets = [0, 128], sizes = [8, 64], strides = [1, 1]} : vector<8x192xf32> to vector<8x64xf32>
    %726 = vector.extract_strided_slice %716 {offsets = [0, 192], sizes = [8, 64], strides = [1, 1]} : vector<8x256xf32> to vector<8x64xf32>
    %727 = math.tanh %726 : vector<8x64xf32>
    %728 = arith.mulf %724, %705 : vector<8x64xf32>
    %729 = arith.mulf %723, %727 : vector<8x64xf32>
    %730 = arith.addf %728, %729 : vector<8x64xf32>
    %731 = math.tanh %730 : vector<8x64xf32>
    %732 = arith.mulf %725, %731 : vector<8x64xf32>
    %733 = arith.index_cast %c2_i32_249 : i32 to index
    %c0_254 = arith.constant 0 : index
    %c0_255 = arith.constant 0 : index
    %734 = vector.load %arg7[%733, %c0_254, %c0_255] : memref<8x8x64xf32, #tpu.memory_space<vmem>>, vector<1x8x64xf32>
    %735 = vector.shape_cast %734 : vector<1x8x64xf32> to vector<8x64xf32>
    %736 = vector.shape_cast %732 : vector<8x64xf32> to vector<1x8x64xf32>
    tpu.vector_store %arg7[%733, %c0_254, %c0_255], %736 {strides = array<i32>} : memref<8x8x64xf32, #tpu.memory_space<vmem>>, vector<1x8x64xf32>,
    %c3_i32_256 = arith.constant 3 : i32
    %737 = arith.index_cast %c3_i32_256 : i32 to index
    %c0_257 = arith.constant 0 : index
    %c0_258 = arith.constant 0 : index
    %738 = vector.load %arg8[%737, %c0_257, %c0_258] : memref<8x8x256xf32, #tpu.memory_space<vmem>>, vector<1x8x256xf32>
    %739 = vector.shape_cast %738 : vector<1x8x256xf32> to vector<8x256xf32>
    %cst_259 = arith.constant dense<0.000000e+00> : vector<8x256xf32>
    %740 = tpu.matmul %732, %650, %cst_259 {dimension_numbers = #tpu.dot_dimension_numbers<[1], [0], [0], [1], [0, 0, 1, 1], [], []>} : vector<8x64xf32>, vector<64x256xf32>, vector<8x256xf32> -> vector<8x256xf32>
    %741 = arith.addf %739, %740 : vector<8x256xf32>
    %742 = vector.extract_strided_slice %741 {offsets = [0, 0], sizes = [8, 192], strides = [1, 1]} : vector<8x256xf32> to vector<8x192xf32>
    %743 = arith.negf %742 : vector<8x192xf32>
    %744 = math.exp %743 : vector<8x192xf32>
    %cst_260 = arith.constant 1.000000e+00 : f32
    %745 = vector.broadcast %cst_260 : f32 to vector<8x192xf32>
    %746 = arith.addf %745, %744 : vector<8x192xf32>
    %747 = arith.divf %745, %746 : vector<8x192xf32>
    %748 = vector.extract_strided_slice %747 {offsets = [0, 0], sizes = [8, 64], strides = [1, 1]} : vector<8x192xf32> to vector<8x64xf32>
    %749 = vector.extract_strided_slice %747 {offsets = [0, 64], sizes = [8, 64], strides = [1, 1]} : vector<8x192xf32> to vector<8x64xf32>
    %750 = vector.extract_strided_slice %747 {offsets = [0, 128], sizes = [8, 64], strides = [1, 1]} : vector<8x192xf32> to vector<8x64xf32>
    %751 = vector.extract_strided_slice %741 {offsets = [0, 192], sizes = [8, 64], strides = [1, 1]} : vector<8x256xf32> to vector<8x64xf32>
    %752 = math.tanh %751 : vector<8x64xf32>
    %753 = arith.mulf %749, %730 : vector<8x64xf32>
    %754 = arith.mulf %748, %752 : vector<8x64xf32>
    %755 = arith.addf %753, %754 : vector<8x64xf32>
    %756 = math.tanh %755 : vector<8x64xf32>
    %757 = arith.mulf %750, %756 : vector<8x64xf32>
    %758 = arith.index_cast %c3_i32_256 : i32 to index
    %c0_261 = arith.constant 0 : index
    %c0_262 = arith.constant 0 : index
    %759 = vector.load %arg7[%758, %c0_261, %c0_262] : memref<8x8x64xf32, #tpu.memory_space<vmem>>, vector<1x8x64xf32>
    %760 = vector.shape_cast %759 : vector<1x8x64xf32> to vector<8x64xf32>
    %761 = vector.shape_cast %757 : vector<8x64xf32> to vector<1x8x64xf32>
    tpu.vector_store %arg7[%758, %c0_261, %c0_262], %761 {strides = array<i32>} : memref<8x8x64xf32, #tpu.memory_space<vmem>>, vector<1x8x64xf32>,
    %c4_i32_263 = arith.constant 4 : i32
    %762 = arith.index_cast %c4_i32_263 : i32 to index
    %c0_264 = arith.constant 0 : index
    %c0_265 = arith.constant 0 : index
    %763 = vector.load %arg8[%762, %c0_264, %c0_265] : memref<8x8x256xf32, #tpu.memory_space<vmem>>, vector<1x8x256xf32>
    %764 = vector.shape_cast %763 : vector<1x8x256xf32> to vector<8x256xf32>
    %cst_266 = arith.constant dense<0.000000e+00> : vector<8x256xf32>
    %765 = tpu.matmul %757, %650, %cst_266 {dimension_numbers = #tpu.dot_dimension_numbers<[1], [0], [0], [1], [0, 0, 1, 1], [], []>} : vector<8x64xf32>, vector<64x256xf32>, vector<8x256xf32> -> vector<8x256xf32>
    %766 = arith.addf %764, %765 : vector<8x256xf32>
    %767 = vector.extract_strided_slice %766 {offsets = [0, 0], sizes = [8, 192], strides = [1, 1]} : vector<8x256xf32> to vector<8x192xf32>
    %768 = arith.negf %767 : vector<8x192xf32>
    %769 = math.exp %768 : vector<8x192xf32>
    %cst_267 = arith.constant 1.000000e+00 : f32
    %770 = vector.broadcast %cst_267 : f32 to vector<8x192xf32>
    %771 = arith.addf %770, %769 : vector<8x192xf32>
    %772 = arith.divf %770, %771 : vector<8x192xf32>
    %773 = vector.extract_strided_slice %772 {offsets = [0, 0], sizes = [8, 64], strides = [1, 1]} : vector<8x192xf32> to vector<8x64xf32>
    %774 = vector.extract_strided_slice %772 {offsets = [0, 64], sizes = [8, 64], strides = [1, 1]} : vector<8x192xf32> to vector<8x64xf32>
    %775 = vector.extract_strided_slice %772 {offsets = [0, 128], sizes = [8, 64], strides = [1, 1]} : vector<8x192xf32> to vector<8x64xf32>
    %776 = vector.extract_strided_slice %766 {offsets = [0, 192], sizes = [8, 64], strides = [1, 1]} : vector<8x256xf32> to vector<8x64xf32>
    %777 = math.tanh %776 : vector<8x64xf32>
    %778 = arith.mulf %774, %755 : vector<8x64xf32>
    %779 = arith.mulf %773, %777 : vector<8x64xf32>
    %780 = arith.addf %778, %779 : vector<8x64xf32>
    %781 = math.tanh %780 : vector<8x64xf32>
    %782 = arith.mulf %775, %781 : vector<8x64xf32>
    %783 = arith.index_cast %c4_i32_263 : i32 to index
    %c0_268 = arith.constant 0 : index
    %c0_269 = arith.constant 0 : index
    %784 = vector.load %arg7[%783, %c0_268, %c0_269] : memref<8x8x64xf32, #tpu.memory_space<vmem>>, vector<1x8x64xf32>
    %785 = vector.shape_cast %784 : vector<1x8x64xf32> to vector<8x64xf32>
    %786 = vector.shape_cast %782 : vector<8x64xf32> to vector<1x8x64xf32>
    tpu.vector_store %arg7[%783, %c0_268, %c0_269], %786 {strides = array<i32>} : memref<8x8x64xf32, #tpu.memory_space<vmem>>, vector<1x8x64xf32>,
    %c5_i32_270 = arith.constant 5 : i32
    %787 = arith.index_cast %c5_i32_270 : i32 to index
    %c0_271 = arith.constant 0 : index
    %c0_272 = arith.constant 0 : index
    %788 = vector.load %arg8[%787, %c0_271, %c0_272] : memref<8x8x256xf32, #tpu.memory_space<vmem>>, vector<1x8x256xf32>
    %789 = vector.shape_cast %788 : vector<1x8x256xf32> to vector<8x256xf32>
    %cst_273 = arith.constant dense<0.000000e+00> : vector<8x256xf32>
    %790 = tpu.matmul %782, %650, %cst_273 {dimension_numbers = #tpu.dot_dimension_numbers<[1], [0], [0], [1], [0, 0, 1, 1], [], []>} : vector<8x64xf32>, vector<64x256xf32>, vector<8x256xf32> -> vector<8x256xf32>
    %791 = arith.addf %789, %790 : vector<8x256xf32>
    %792 = vector.extract_strided_slice %791 {offsets = [0, 0], sizes = [8, 192], strides = [1, 1]} : vector<8x256xf32> to vector<8x192xf32>
    %793 = arith.negf %792 : vector<8x192xf32>
    %794 = math.exp %793 : vector<8x192xf32>
    %cst_274 = arith.constant 1.000000e+00 : f32
    %795 = vector.broadcast %cst_274 : f32 to vector<8x192xf32>
    %796 = arith.addf %795, %794 : vector<8x192xf32>
    %797 = arith.divf %795, %796 : vector<8x192xf32>
    %798 = vector.extract_strided_slice %797 {offsets = [0, 0], sizes = [8, 64], strides = [1, 1]} : vector<8x192xf32> to vector<8x64xf32>
    %799 = vector.extract_strided_slice %797 {offsets = [0, 64], sizes = [8, 64], strides = [1, 1]} : vector<8x192xf32> to vector<8x64xf32>
    %800 = vector.extract_strided_slice %797 {offsets = [0, 128], sizes = [8, 64], strides = [1, 1]} : vector<8x192xf32> to vector<8x64xf32>
    %801 = vector.extract_strided_slice %791 {offsets = [0, 192], sizes = [8, 64], strides = [1, 1]} : vector<8x256xf32> to vector<8x64xf32>
    %802 = math.tanh %801 : vector<8x64xf32>
    %803 = arith.mulf %799, %780 : vector<8x64xf32>
    %804 = arith.mulf %798, %802 : vector<8x64xf32>
    %805 = arith.addf %803, %804 : vector<8x64xf32>
    %806 = math.tanh %805 : vector<8x64xf32>
    %807 = arith.mulf %800, %806 : vector<8x64xf32>
    %808 = arith.index_cast %c5_i32_270 : i32 to index
    %c0_275 = arith.constant 0 : index
    %c0_276 = arith.constant 0 : index
    %809 = vector.load %arg7[%808, %c0_275, %c0_276] : memref<8x8x64xf32, #tpu.memory_space<vmem>>, vector<1x8x64xf32>
    %810 = vector.shape_cast %809 : vector<1x8x64xf32> to vector<8x64xf32>
    %811 = vector.shape_cast %807 : vector<8x64xf32> to vector<1x8x64xf32>
    tpu.vector_store %arg7[%808, %c0_275, %c0_276], %811 {strides = array<i32>} : memref<8x8x64xf32, #tpu.memory_space<vmem>>, vector<1x8x64xf32>,
    %c6_i32_277 = arith.constant 6 : i32
    %812 = arith.index_cast %c6_i32_277 : i32 to index
    %c0_278 = arith.constant 0 : index
    %c0_279 = arith.constant 0 : index
    %813 = vector.load %arg8[%812, %c0_278, %c0_279] : memref<8x8x256xf32, #tpu.memory_space<vmem>>, vector<1x8x256xf32>
    %814 = vector.shape_cast %813 : vector<1x8x256xf32> to vector<8x256xf32>
    %cst_280 = arith.constant dense<0.000000e+00> : vector<8x256xf32>
    %815 = tpu.matmul %807, %650, %cst_280 {dimension_numbers = #tpu.dot_dimension_numbers<[1], [0], [0], [1], [0, 0, 1, 1], [], []>} : vector<8x64xf32>, vector<64x256xf32>, vector<8x256xf32> -> vector<8x256xf32>
    %816 = arith.addf %814, %815 : vector<8x256xf32>
    %817 = vector.extract_strided_slice %816 {offsets = [0, 0], sizes = [8, 192], strides = [1, 1]} : vector<8x256xf32> to vector<8x192xf32>
    %818 = arith.negf %817 : vector<8x192xf32>
    %819 = math.exp %818 : vector<8x192xf32>
    %cst_281 = arith.constant 1.000000e+00 : f32
    %820 = vector.broadcast %cst_281 : f32 to vector<8x192xf32>
    %821 = arith.addf %820, %819 : vector<8x192xf32>
    %822 = arith.divf %820, %821 : vector<8x192xf32>
    %823 = vector.extract_strided_slice %822 {offsets = [0, 0], sizes = [8, 64], strides = [1, 1]} : vector<8x192xf32> to vector<8x64xf32>
    %824 = vector.extract_strided_slice %822 {offsets = [0, 64], sizes = [8, 64], strides = [1, 1]} : vector<8x192xf32> to vector<8x64xf32>
    %825 = vector.extract_strided_slice %822 {offsets = [0, 128], sizes = [8, 64], strides = [1, 1]} : vector<8x192xf32> to vector<8x64xf32>
    %826 = vector.extract_strided_slice %816 {offsets = [0, 192], sizes = [8, 64], strides = [1, 1]} : vector<8x256xf32> to vector<8x64xf32>
    %827 = math.tanh %826 : vector<8x64xf32>
    %828 = arith.mulf %824, %805 : vector<8x64xf32>
    %829 = arith.mulf %823, %827 : vector<8x64xf32>
    %830 = arith.addf %828, %829 : vector<8x64xf32>
    %831 = math.tanh %830 : vector<8x64xf32>
    %832 = arith.mulf %825, %831 : vector<8x64xf32>
    %833 = arith.index_cast %c6_i32_277 : i32 to index
    %c0_282 = arith.constant 0 : index
    %c0_283 = arith.constant 0 : index
    %834 = vector.load %arg7[%833, %c0_282, %c0_283] : memref<8x8x64xf32, #tpu.memory_space<vmem>>, vector<1x8x64xf32>
    %835 = vector.shape_cast %834 : vector<1x8x64xf32> to vector<8x64xf32>
    %836 = vector.shape_cast %832 : vector<8x64xf32> to vector<1x8x64xf32>
    tpu.vector_store %arg7[%833, %c0_282, %c0_283], %836 {strides = array<i32>} : memref<8x8x64xf32, #tpu.memory_space<vmem>>, vector<1x8x64xf32>,
    %c7_i32_284 = arith.constant 7 : i32
    %837 = arith.index_cast %c7_i32_284 : i32 to index
    %c0_285 = arith.constant 0 : index
    %c0_286 = arith.constant 0 : index
    %838 = vector.load %arg8[%837, %c0_285, %c0_286] : memref<8x8x256xf32, #tpu.memory_space<vmem>>, vector<1x8x256xf32>
    %839 = vector.shape_cast %838 : vector<1x8x256xf32> to vector<8x256xf32>
    %cst_287 = arith.constant dense<0.000000e+00> : vector<8x256xf32>
    %840 = tpu.matmul %832, %650, %cst_287 {dimension_numbers = #tpu.dot_dimension_numbers<[1], [0], [0], [1], [0, 0, 1, 1], [], []>} : vector<8x64xf32>, vector<64x256xf32>, vector<8x256xf32> -> vector<8x256xf32>
    %841 = arith.addf %839, %840 : vector<8x256xf32>
    %842 = vector.extract_strided_slice %841 {offsets = [0, 0], sizes = [8, 192], strides = [1, 1]} : vector<8x256xf32> to vector<8x192xf32>
    %843 = arith.negf %842 : vector<8x192xf32>
    %844 = math.exp %843 : vector<8x192xf32>
    %cst_288 = arith.constant 1.000000e+00 : f32
    %845 = vector.broadcast %cst_288 : f32 to vector<8x192xf32>
    %846 = arith.addf %845, %844 : vector<8x192xf32>
    %847 = arith.divf %845, %846 : vector<8x192xf32>
    %848 = vector.extract_strided_slice %847 {offsets = [0, 0], sizes = [8, 64], strides = [1, 1]} : vector<8x192xf32> to vector<8x64xf32>
    %849 = vector.extract_strided_slice %847 {offsets = [0, 64], sizes = [8, 64], strides = [1, 1]} : vector<8x192xf32> to vector<8x64xf32>
    %850 = vector.extract_strided_slice %847 {offsets = [0, 128], sizes = [8, 64], strides = [1, 1]} : vector<8x192xf32> to vector<8x64xf32>
    %851 = vector.extract_strided_slice %841 {offsets = [0, 192], sizes = [8, 64], strides = [1, 1]} : vector<8x256xf32> to vector<8x64xf32>
    %852 = math.tanh %851 : vector<8x64xf32>
    %853 = arith.mulf %849, %830 : vector<8x64xf32>
    %854 = arith.mulf %848, %852 : vector<8x64xf32>
    %855 = arith.addf %853, %854 : vector<8x64xf32>
    %856 = math.tanh %855 : vector<8x64xf32>
    %857 = arith.mulf %850, %856 : vector<8x64xf32>
    %858 = arith.index_cast %c7_i32_284 : i32 to index
    %c0_289 = arith.constant 0 : index
    %c0_290 = arith.constant 0 : index
    %859 = vector.load %arg7[%858, %c0_289, %c0_290] : memref<8x8x64xf32, #tpu.memory_space<vmem>>, vector<1x8x64xf32>
    %860 = vector.shape_cast %859 : vector<1x8x64xf32> to vector<8x64xf32>
    %861 = vector.shape_cast %857 : vector<8x64xf32> to vector<1x8x64xf32>
    tpu.vector_store %arg7[%858, %c0_289, %c0_290], %861 {strides = array<i32>} : memref<8x8x64xf32, #tpu.memory_space<vmem>>, vector<1x8x64xf32>,
    %c8_i32_291 = arith.constant 8 : i32
    %c7 = arith.constant 7 : index
    %c0_292 = arith.constant 0 : index
    %c0_293 = arith.constant 0 : index
    %862 = vector.load %arg7[%c7, %c0_292, %c0_293] : memref<8x8x64xf32, #tpu.memory_space<vmem>>, vector<1x8x64xf32>
    %863 = vector.shape_cast %862 : vector<1x8x64xf32> to vector<8x64xf32>
    %c0_294 = arith.constant 0 : index
    %c0_295 = arith.constant 0 : index
    %864 = vector.load %arg4[%c0_294, %c0_295] : memref<64x10xf32, #tpu.memory_space<vmem>>, vector<64x10xf32>
    %cst_296 = arith.constant dense<0.000000e+00> : vector<8x10xf32>
    %865 = tpu.matmul %863, %864, %cst_296 {dimension_numbers = #tpu.dot_dimension_numbers<[1], [0], [0], [1], [0, 0, 1, 1], [], []>} : vector<8x64xf32>, vector<64x10xf32>, vector<8x10xf32> -> vector<8x10xf32>
    %c0_297 = arith.constant 0 : index
    %c0_298 = arith.constant 0 : index
    %866 = vector.load %arg5[%c0_297, %c0_298] : memref<1x10xf32, #tpu.memory_space<vmem>>, vector<1x10xf32>
    %867 = vector.broadcast %866 : vector<1x10xf32> to vector<8x10xf32>
    %868 = arith.addf %865, %867 : vector<8x10xf32>
    %c0_299 = arith.constant 0 : index
    %c0_300 = arith.constant 0 : index
    %869 = vector.load %arg6[%c0_299, %c0_300] : memref<8x10xf32, #tpu.memory_space<vmem>>, vector<8x10xf32>
    tpu.vector_store %arg6[%c0_299, %c0_300], %868 {strides = array<i32>} : memref<8x10xf32, #tpu.memory_space<vmem>>, vector<8x10xf32>,
    return
  }
}

</mosaic_0001>

<llo_original>
// kernel: tpu_custom_call.1
$region0: #{tpu_custom_call.1}
  #allocation0 [shape = 'u32[]', space=smem, size = 0x4, offset = 0x4, fixed_abs, tag = 'smem constant byte address 0x4 - core index']
  #allocation1 [shape = 'u32[144,128]{1,0:T(1,128)}', space=vmem, size = 0x12000, scoped, tag = 'internal scratch']
  #allocation2 [shape = 'f32[8,8,64]{2,1,0:T(8,128)}', space=vmem, size = 0x8000, scoped, tag = 'scratch operand']
  #allocation3 [shape = 'f32[8,8,256]{2,1,0:T(8,128)}', space=vmem, size = 0x10000, scoped, tag = 'scratch operand']
  %s0 = inlined_call_operand.vmem [shape: f32[8,8,64], index: 0, kind: input, shape index: {}]
  %s1 = inlined_call_operand.hbm [shape: f32[4,64,256], index: 1, kind: input, shape index: {}]
  %s2 = inlined_call_operand.hbm [shape: f32[4,64,256], index: 2, kind: input, shape index: {}]
  %s3 = inlined_call_operand.vmem [shape: f32[4,1,256], index: 3, kind: input, shape index: {}]
  %s4 = inlined_call_operand.vmem [shape: f32[64,10], index: 4, kind: input, shape index: {}]
  %s5 = inlined_call_operand.vmem [shape: f32[1,10], index: 5, kind: input, shape index: {}]
  %s6 = inlined_call_operand.hbm [shape: f32[8,10], index: 6, kind: output, shape index: {}]
  %s7 = sld [smem:[#allocation0]]
  $region42: #{tpu_custom_call.1} parent=0
    _
  %s9 = ssub.s32 1, %s7
  %s10 = scalar_select 0, %s9, %s7
  $region1: #{tpu_custom_call.1} parent=0
    #allocation4 [shape = 'u8[262144]{0}', space=vmem, size = 0x40000, scoped, tag = 'input window, operand 1, single buffered']
    #allocation5 [shape = 's32[1]{0}', space=sflag, size = 0x4, scoped, tag = 'scoped memory for tpu_custom_call.1']
    #allocation6 [shape = 's32[1]{0}', space=sflag, size = 0x4, scoped, tag = 'scoped memory for tpu_custom_call.1']
    #allocation7 [shape = 'u8[262144]{0}', space=vmem, size = 0x40000, scoped, tag = 'input window, operand 2, single buffered']
    #allocation8 [shape = 's32[1]{0}', space=sflag, size = 0x4, scoped, tag = 'scoped memory for tpu_custom_call.1']
    #allocation9 [shape = 'u8[4096]{0}', space=vmem, size = 0x1000, scoped, tag = 'output window, operand 0, single buffered']
    %11 = vsyncpa [#allocation5], 0
    %12 = vsyncpa [#allocation8], 0
    %13 = vsyncpa [#allocation6], 0
    // Predicated region
    $region2: #{tpu_custom_call.1} parent=1 // pred_check
      _
    $region3: #{tpu_custom_call.1} parent=1 // pred_check_branch
      %15 = sbr.rel (0) target = $region5
    $region4: #{tpu_custom_call.1} parent=1 // pred_region
      _
    $region5: #{tpu_custom_call.1} parent=1 // pred_fallthru
      _
    // Predicated region
    $region6: #{tpu_custom_call.1} parent=1 // pred_check
      _
    $region7: #{tpu_custom_call.1} parent=1 // pred_check_branch
      %17 = sbr.rel (0) target = $region9
    $region8: #{tpu_custom_call.1} parent=1 // pred_region
      %s19 = ssub.s32 8192, 8192
      %20 = vsyncadd [#allocation5], %s19
      %s21 = sshll.u32 [#allocation4], 4
      %s22 = int_to_ptr.vmem [resolvable:$true] %s21
      %27 = dma.hbm_to_vmem [thread:$0]  %s1, 8192, %s22, [#allocation5], 256, 256, 16
    $region9: #{tpu_custom_call.1} parent=1 // pred_fallthru
      _
    // Predicated region
    $region10: #{tpu_custom_call.1} parent=1 // pred_check
      _
    $region11: #{tpu_custom_call.1} parent=1 // pred_check_branch
      %29 = sbr.rel (0) target = $region13
    $region12: #{tpu_custom_call.1} parent=1 // pred_region
      %s31 = ssub.s32 8192, 8192
      %32 = vsyncadd [#allocation8], %s31
      %s33 = sshll.u32 [#allocation7], 4
      %s34 = int_to_ptr.vmem [resolvable:$true] %s33
      %39 = dma.hbm_to_vmem [thread:$0]  %s2, 8192, %s34, [#allocation8], 256, 256, 16
    $region13: #{tpu_custom_call.1} parent=1 // pred_fallthru
      _
    // Predicated region
    $region14: #{tpu_custom_call.1} parent=1 // pred_check
      _
    $region15: #{tpu_custom_call.1} parent=1 // pred_check_branch
      %41 = sbr.rel (0) target = $region17
    $region16: #{tpu_custom_call.1} parent=1 // pred_region
      _
    $region17: #{tpu_custom_call.1} parent=1 // pred_fallthru
      _
    // Predicated region
    $region18: #{tpu_custom_call.1} parent=1 // pred_check
      _
    $region19: #{tpu_custom_call.1} parent=1 // pred_check_branch
      %43 = sbr.rel (0) target = $region21
    $region20: #{tpu_custom_call.1} parent=1 // pred_region
      _
    $region21: #{tpu_custom_call.1} parent=1 // pred_fallthru
      _
    // Predicated region
    $region22: #{tpu_custom_call.1} parent=1 // pred_check
      _
    $region23: #{tpu_custom_call.1} parent=1 // pred_check_branch
      %45 = sbr.rel (0) target = $region25
    $region24: #{tpu_custom_call.1} parent=1 // pred_region
      _
    $region25: #{tpu_custom_call.1} parent=1 // pred_fallthru
      _
    // Predicated region
    $region26: #{tpu_custom_call.1} parent=1 // pred_check
      _
    $region27: #{tpu_custom_call.1} parent=1 // pred_check_branch
      %47 = sbr.rel (0) target = $region29
    $region28: #{tpu_custom_call.1} parent=1 // pred_region
      %48 = dma.done [#allocation5], 8192
    $region29: #{tpu_custom_call.1} parent=1 // pred_fallthru
      _
    // Predicated region
    $region30: #{tpu_custom_call.1} parent=1 // pred_check
      _
    $region31: #{tpu_custom_call.1} parent=1 // pred_check_branch
      %50 = sbr.rel (0) target = $region33
    $region32: #{tpu_custom_call.1} parent=1 // pred_region
      %51 = dma.done [#allocation8], 8192
    $region33: #{tpu_custom_call.1} parent=1 // pred_fallthru
      _
    %v52 = vld [vmem:[%s0] sm:$0xff]
    %v53 = vld [vmem:[%s0 + $0x8] sm:$0xff]
    %v54 = vld [vmem:[%s0 + $0x10] sm:$0xff]
    %v55 = vld [vmem:[%s0 + $0x18] sm:$0xff]
    %v56 = vld [vmem:[%s0 + $0x20] sm:$0xff]
    %v57 = vld [vmem:[%s0 + $0x28] sm:$0xff]
    %v58 = vld [vmem:[%s0 + $0x30] sm:$0xff]
    %v59 = vld [vmem:[%s0 + $0x38] sm:$0xff]
    %vm60 = vcmask 523264
    %61 = vst.msk [vmem:[#allocation2] sm:$0xff] %vm60, %v52
    %62 = vst.msk [vmem:[#allocation2 + $0x8] sm:$0xff] %vm60, %v53
    %63 = vst.msk [vmem:[#allocation2 + $0x10] sm:$0xff] %vm60, %v54
    %64 = vst.msk [vmem:[#allocation2 + $0x18] sm:$0xff] %vm60, %v55
    %65 = vst.msk [vmem:[#allocation2 + $0x20] sm:$0xff] %vm60, %v56
    %66 = vst.msk [vmem:[#allocation2 + $0x28] sm:$0xff] %vm60, %v57
    %67 = vst.msk [vmem:[#allocation2 + $0x30] sm:$0xff] %vm60, %v58
    %68 = vst.msk [vmem:[#allocation2 + $0x38] sm:$0xff] %vm60, %v59
    %v69 = vld [vmem:[#allocation4] sm:$0xff]
    %v70 = vld [vmem:[#allocation4 + $0x8] sm:$0xff]
    %v71 = vld [vmem:[#allocation4 + $0x10] sm:$0xff]
    %v72 = vld [vmem:[#allocation4 + $0x18] sm:$0xff]
    %v73 = vld [vmem:[#allocation4 + $0x20] sm:$0xff]
    %v74 = vld [vmem:[#allocation4 + $0x28] sm:$0xff]
    %v75 = vld [vmem:[#allocation4 + $0x30] sm:$0xff]
    %v76 = vld [vmem:[#allocation4 + $0x38] sm:$0xff]
    %v77 = vld [vmem:[#allocation4 + $0x40] sm:$0xff]
    %v78 = vld [vmem:[#allocation4 + $0x48] sm:$0xff]
    %v79 = vld [vmem:[#allocation4 + $0x50] sm:$0xff]
    %v80 = vld [vmem:[#allocation4 + $0x58] sm:$0xff]
    %v81 = vld [vmem:[#allocation4 + $0x60] sm:$0xff]
    %v82 = vld [vmem:[#allocation4 + $0x68] sm:$0xff]
    %v83 = vld [vmem:[#allocation4 + $0x70] sm:$0xff]
    %v84 = vld [vmem:[#allocation4 + $0x78] sm:$0xff]
    %v85 = vld [vmem:[#allocation7] sm:$0xff]
    %v86 = vld [vmem:[#allocation7 + $0x8] sm:$0xff]
    %v87 = vld [vmem:[#allocation7 + $0x10] sm:$0xff]
    %v88 = vld [vmem:[#allocation7 + $0x18] sm:$0xff]
    %v89 = vld [vmem:[#allocation7 + $0x20] sm:$0xff]
    %v90 = vld [vmem:[#allocation7 + $0x28] sm:$0xff]
    %v91 = vld [vmem:[#allocation7 + $0x30] sm:$0xff]
    %v92 = vld [vmem:[#allocation7 + $0x38] sm:$0xff]
    %v93 = vld [vmem:[#allocation7 + $0x40] sm:$0xff]
    %v94 = vld [vmem:[#allocation7 + $0x48] sm:$0xff]
    %v95 = vld [vmem:[#allocation7 + $0x50] sm:$0xff]
    %v96 = vld [vmem:[#allocation7 + $0x58] sm:$0xff]
    %v97 = vld [vmem:[#allocation7 + $0x60] sm:$0xff]
    %v98 = vld [vmem:[#allocation7 + $0x68] sm:$0xff]
    %v99 = vld [vmem:[#allocation7 + $0x70] sm:$0xff]
    %v100 = vld [vmem:[#allocation7 + $0x78] sm:$0xff]
    %v101 = vld [vmem:[%s3] sm:$0x3]
    %v102 = vld [vmem:[#allocation2] sm:$0xff]
    %v103 = vld [vmem:[#allocation2 + $0x8] sm:$0xff]
    %v104 = vld [vmem:[#allocation2 + $0x10] sm:$0xff]
    %v105 = vld [vmem:[#allocation2 + $0x18] sm:$0xff]
    %v106 = vld [vmem:[#allocation2 + $0x20] sm:$0xff]
    %v107 = vld [vmem:[#allocation2 + $0x28] sm:$0xff]
    %v108 = vld [vmem:[#allocation2 + $0x30] sm:$0xff]
    %v109 = vld [vmem:[#allocation2 + $0x38] sm:$0xff]
    %v111 = vlaneseq
    %v112 = vshrl.u32 %v111, 7
    %v113 = vsub.s32 0, %v112
    %v114 = vrot.slane %v101, %v113
    %v115 = vlaneseq
    %v116 = vshrl.u32 %v115, 7
    %v117 = vsub.s32 1, %v116
    %v118 = vrot.slane %v101, %v117
    %v122 = vsel %vm60, %v102, 0
    %v125 = vsel %vm60, %v103, 0
    %v128 = vsel %vm60, %v104, 0
    %v131 = vsel %vm60, %v105, 0
    %v134 = vsel %vm60, %v106, 0
    %v137 = vsel %vm60, %v107, 0
    %v140 = vsel %vm60, %v108, 0
    %v143 = vsel %vm60, %v109, 0
    %145 = vmatprep.subr.mxu0 %v70
    %146 = vmatpush1.msra.mxu0 %v69
    %147 = vmatprep.subr.mxu0 %v72
    %148 = vmatpush1.msra.mxu0 %v71
    %149 = vmatprep.subr.mxu0 %v74
    %150 = vmatpush1.msra.mxu0 %v73
    %151 = vmatprep.subr.mxu0 %v76
    %152 = vmatpush1.msra.mxu0 %v75
    %153 = vmatprep.subr.mxu0 %v78
    %154 = vmatpush1.msra.mxu0 %v77
    %155 = vmatprep.subr.mxu0 %v80
    %156 = vmatpush1.msra.mxu0 %v79
    %157 = vmatprep.subr.mxu0 %v82
    %158 = vmatpush1.msra.mxu0 %v81
    %159 = vmatprep.subr.mxu0 %v84
    %160 = vmatpush1.msra.mxu0 %v83
    %161 = vmatprep.subr.mxu0 0.0
    %162 = vmatpush1.msra.mxu0 0.0
    %163 = vmatprep.subr.mxu0 0.0
    %164 = vmatpush1.msra.mxu0 0.0
    %165 = vmatprep.subr.mxu0 0.0
    %166 = vmatpush1.msra.mxu0 0.0
    %167 = vmatprep.subr.mxu0 0.0
    %168 = vmatpush1.msra.mxu0 0.0
    %169 = vmatprep.subr.mxu0 0.0
    %170 = vmatpush1.msra.mxu0 0.0
    %171 = vmatprep.subr.mxu0 0.0
    %172 = vmatpush1.msra.mxu0 0.0
    %173 = vmatprep.subr.mxu0 0.0
    %174 = vmatpush1.msra.mxu0 0.0
    %175 = vmatprep.subr.mxu0 0.0
    %176 = vmatpush1.msra.mxu0 0.0
    %177 = vmatprep.subr.mxu0 0.0
    %178 = vmatpush1.msra.mxu0 0.0
    %179 = vmatprep.subr.mxu0 0.0
    %180 = vmatpush1.msra.mxu0 0.0
    %181 = vmatprep.subr.mxu0 0.0
    %182 = vmatpush1.msra.mxu0 0.0
    %183 = vmatprep.subr.mxu0 0.0
    %184 = vmatpush1.msra.mxu0 0.0
    %185 = vmatprep.subr.mxu0 0.0
    %186 = vmatpush1.msra.mxu0 0.0
    %187 = vmatprep.subr.mxu0 0.0
    %188 = vmatpush1.msra.mxu0 0.0
    %189 = vmatprep.subr.mxu0 0.0
    %190 = vmatpush1.msra.mxu0 0.0
    %191 = vmatprep.subr.mxu0 0.0
    %192 = vmatpush1.msra.mxu0 0.0
    %193 = vmatprep.subr.mxu0 0.0
    %194 = vmatpush1.msra.mxu0 0.0
    %195 = vmatprep.subr.mxu0 0.0
    %196 = vmatpush1.msra.mxu0 0.0
    %197 = vmatprep.subr.mxu0 0.0
    %198 = vmatpush1.msra.mxu0 0.0
    %199 = vmatprep.subr.mxu0 0.0
    %200 = vmatpush1.msra.mxu0 0.0
    %201 = vmatprep.subr.mxu0 0.0
    %202 = vmatpush1.msra.mxu0 0.0
    %203 = vmatprep.subr.mxu0 0.0
    %204 = vmatpush1.msra.mxu0 0.0
    %205 = vmatprep.subr.mxu0 0.0
    %206 = vmatpush1.msra.mxu0 0.0
    %207 = vmatprep.subr.mxu0 0.0
    %208 = vmatpush1.msra.mxu0 0.0
    %209 = vmatprep.mubr.f32.mxu0 0.0
    %210 = vmatmul.mubr.f32.gmra.mrb[0].mxu0 %v122
    %v211 = vpop.f32.mrb[0].mxu0
    %v212 = vadd.f32 %v114, %v211
    %v213 = vpop.f32.mrb[0].mxu0
    %v214 = vadd.f32 %v118, %v213
    %215 = vmatprep.mubr.f32.mxu0 0.0
    %216 = vmatmul.mubr.f32.gmra.mrb[0].mxu0 %v125
    %v217 = vpop.f32.mrb[0].mxu0
    %v218 = vadd.f32 %v114, %v217
    %v219 = vpop.f32.mrb[0].mxu0
    %v220 = vadd.f32 %v118, %v219
    %221 = vmatprep.mubr.f32.mxu0 0.0
    %222 = vmatmul.mubr.f32.gmra.mrb[0].mxu0 %v128
    %v223 = vpop.f32.mrb[0].mxu0
    %v224 = vadd.f32 %v114, %v223
    %v225 = vpop.f32.mrb[0].mxu0
    %v226 = vadd.f32 %v118, %v225
    %227 = vmatprep.mubr.f32.mxu0 0.0
    %228 = vmatmul.mubr.f32.gmra.mrb[0].mxu0 %v131
    %v229 = vpop.f32.mrb[0].mxu0
    %v230 = vadd.f32 %v114, %v229
    %v231 = vpop.f32.mrb[0].mxu0
    %v232 = vadd.f32 %v118, %v231
    %233 = vmatprep.mubr.f32.mxu0 0.0
    %234 = vmatmul.mubr.f32.gmra.mrb[0].mxu0 %v134
    %v235 = vpop.f32.mrb[0].mxu0
    %v236 = vadd.f32 %v114, %v235
    %v237 = vpop.f32.mrb[0].mxu0
    %v238 = vadd.f32 %v118, %v237
    %239 = vmatprep.mubr.f32.mxu0 0.0
    %240 = vmatmul.mubr.f32.gmra.mrb[0].mxu0 %v137
    %v241 = vpop.f32.mrb[0].mxu0
    %v242 = vadd.f32 %v114, %v241
    %v243 = vpop.f32.mrb[0].mxu0
    %v244 = vadd.f32 %v118, %v243
    %245 = vmatprep.mubr.f32.mxu0 0.0
    %246 = vmatmul.mubr.f32.gmra.mrb[0].mxu0 %v140
    %v247 = vpop.f32.mrb[0].mxu0
    %v248 = vadd.f32 %v114, %v247
    %v249 = vpop.f32.mrb[0].mxu0
    %v250 = vadd.f32 %v118, %v249
    %251 = vmatprep.mubr.f32.mxu0 0.0
    %252 = vmatmul.mubr.f32.gmra.mrb[0].mxu0 %v143
    %v253 = vpop.f32.mrb[0].mxu0
    %v254 = vadd.f32 %v114, %v253
    %v255 = vpop.f32.mrb[0].mxu0
    %v256 = vadd.f32 %v118, %v255
    %257 = vdwg.mxu0
    %258 = vst [vmem:[#allocation3] sm:$0xff] %v212
    %259 = vst [vmem:[#allocation3 + $0x8] sm:$0xff] %v214
    %260 = vst [vmem:[#allocation3 + $0x10] sm:$0xff] %v218
    %261 = vst [vmem:[#allocation3 + $0x18] sm:$0xff] %v220
    %262 = vst [vmem:[#allocation3 + $0x20] sm:$0xff] %v224
    %263 = vst [vmem:[#allocation3 + $0x28] sm:$0xff] %v226
    %264 = vst [vmem:[#allocation3 + $0x30] sm:$0xff] %v230
    %265 = vst [vmem:[#allocation3 + $0x38] sm:$0xff] %v232
    %266 = vst [vmem:[#allocation3 + $0x40] sm:$0xff] %v236
    %267 = vst [vmem:[#allocation3 + $0x48] sm:$0xff] %v238
    %268 = vst [vmem:[#allocation3 + $0x50] sm:$0xff] %v242
    %269 = vst [vmem:[#allocation3 + $0x58] sm:$0xff] %v244
    %270 = vst [vmem:[#allocation3 + $0x60] sm:$0xff] %v248
    %271 = vst [vmem:[#allocation3 + $0x68] sm:$0xff] %v250
    %272 = vst [vmem:[#allocation3 + $0x70] sm:$0xff] %v254
    %273 = vst [vmem:[#allocation3 + $0x78] sm:$0xff] %v256
    %v274 = vld [vmem:[#allocation3] sm:$0xff]
    %v275 = vld [vmem:[#allocation3 + $0x8] sm:$0xff]
    %v277 = vsel %vm60, 0.0, 0
    %279 = vmatprep.subr.mxu0 %v86
    %280 = vmatpush1.msra.mxu0 %v85
    %281 = vmatprep.subr.mxu0 %v88
    %282 = vmatpush1.msra.mxu0 %v87
    %283 = vmatprep.subr.mxu0 %v90
    %284 = vmatpush1.msra.mxu0 %v89
    %285 = vmatprep.subr.mxu0 %v92
    %286 = vmatpush1.msra.mxu0 %v91
    %287 = vmatprep.subr.mxu0 %v94
    %288 = vmatpush1.msra.mxu0 %v93
    %289 = vmatprep.subr.mxu0 %v96
    %290 = vmatpush1.msra.mxu0 %v95
    %291 = vmatprep.subr.mxu0 %v98
    %292 = vmatpush1.msra.mxu0 %v97
    %293 = vmatprep.subr.mxu0 %v100
    %294 = vmatpush1.msra.mxu0 %v99
    %295 = vmatprep.subr.mxu0 0.0
    %296 = vmatpush1.msra.mxu0 0.0
    %297 = vmatprep.subr.mxu0 0.0
    %298 = vmatpush1.msra.mxu0 0.0
    %299 = vmatprep.subr.mxu0 0.0
    %300 = vmatpush1.msra.mxu0 0.0
    %301 = vmatprep.subr.mxu0 0.0
    %302 = vmatpush1.msra.mxu0 0.0
    %303 = vmatprep.subr.mxu0 0.0
    %304 = vmatpush1.msra.mxu0 0.0
    %305 = vmatprep.subr.mxu0 0.0
    %306 = vmatpush1.msra.mxu0 0.0
    %307 = vmatprep.subr.mxu0 0.0
    %308 = vmatpush1.msra.mxu0 0.0
    %309 = vmatprep.subr.mxu0 0.0
    %310 = vmatpush1.msra.mxu0 0.0
    %311 = vmatprep.subr.mxu0 0.0
    %312 = vmatpush1.msra.mxu0 0.0
    %313 = vmatprep.subr.mxu0 0.0
    %314 = vmatpush1.msra.mxu0 0.0
    %315 = vmatprep.subr.mxu0 0.0
    %316 = vmatpush1.msra.mxu0 0.0
    %317 = vmatprep.subr.mxu0 0.0
    %318 = vmatpush1.msra.mxu0 0.0
    %319 = vmatprep.subr.mxu0 0.0
    %320 = vmatpush1.msra.mxu0 0.0
    %321 = vmatprep.subr.mxu0 0.0
    %322 = vmatpush1.msra.mxu0 0.0
    %323 = vmatprep.subr.mxu0 0.0
    %324 = vmatpush1.msra.mxu0 0.0
    %325 = vmatprep.subr.mxu0 0.0
    %326 = vmatpush1.msra.mxu0 0.0
    %327 = vmatprep.subr.mxu0 0.0
    %328 = vmatpush1.msra.mxu0 0.0
    %329 = vmatprep.subr.mxu0 0.0
    %330 = vmatpush1.msra.mxu0 0.0
    %331 = vmatprep.subr.mxu0 0.0
    %332 = vmatpush1.msra.mxu0 0.0
    %333 = vmatprep.subr.mxu0 0.0
    %334 = vmatpush1.msra.mxu0 0.0
    %335 = vmatprep.subr.mxu0 0.0
    %336 = vmatpush1.msra.mxu0 0.0
    %337 = vmatprep.subr.mxu0 0.0
    %338 = vmatpush1.msra.mxu0 0.0
    %339 = vmatprep.subr.mxu0 0.0
    %340 = vmatpush1.msra.mxu0 0.0
    %341 = vmatprep.subr.mxu0 0.0
    %342 = vmatpush1.msra.mxu0 0.0
    %343 = vmatprep.mubr.f32.mxu0 0.0
    %344 = vmatmul.mubr.f32.gmra.mrb[0].mxu0 %v277
    %v345 = vpop.f32.mrb[0].mxu0
    %v346 = vadd.f32 0.0, %v345
    %v347 = vpop.f32.mrb[0].mxu0
    %v348 = vadd.f32 0.0, %v347
    %349 = vdwg.mxu0
    %v350 = vadd.f32 %v274, %v346
    %v351 = vadd.f32 %v275, %v348
    %v352 = vxor.u32 %v350, 2147483648
    %v353 = vxor.u32 %v351, 2147483648
    %v354 = vmul.f32 %v352, 1.442695
    %v355 = vpow.pop %v354
    %v356 = vmul.f32 %v353, 1.442695
    %v357 = vpow.pop %v356
    %v358 = vadd.f32 %v355, 1.0
    %v359 = vadd.f32 %v357, 1.0
    %v360 = vrcp.pop %v358
    %v361 = vmul.f32 1.0, %v360
    %v362 = vrcp.pop %v359
    %v363 = vmul.f32 1.0, %v362
    %v364 = vtanh.pop %v351
    %v365 = vmul.f32 %v361, 0.0
    %367 = vrot.lane.b32.xlu0 %v364, 64
    %v368 = vpop.permute.xlu0 %367
    %v370 = vmul.f32 %v361, %v368
    %372 = vrot.lane.b32.xlu0 %v370, 64
    %v373 = vpop.permute.xlu0 %372
    %v375 = vadd.f32 %v365, %v373
    %v376 = vtanh.pop %v375
    %378 = vrot.lane.b32.xlu0 %v376, 64
    %v379 = vpop.permute.xlu0 %378
    %v381 = vmul.f32 %v363, %v379
    %382 = vst.msk [vmem:[#allocation2] sm:$0xff] %vm60, %v381
    %s383 = scalar_lea.vmem [#allocation3], 16
    %v384 = vld [vmem:[%s383] sm:$0xff]
    %v385 = vld [vmem:[%s383 + $0x8] sm:$0xff]
    %v387 = vsel %vm60, %v381, 0
    %389 = vmatprep.subr.mxu0 %v86
    %390 = vmatpush1.msra.mxu0 %v85
    %391 = vmatprep.subr.mxu0 %v88
    %392 = vmatpush1.msra.mxu0 %v87
    %393 = vmatprep.subr.mxu0 %v90
    %394 = vmatpush1.msra.mxu0 %v89
    %395 = vmatprep.subr.mxu0 %v92
    %396 = vmatpush1.msra.mxu0 %v91
    %397 = vmatprep.subr.mxu0 %v94
    %398 = vmatpush1.msra.mxu0 %v93
    %399 = vmatprep.subr.mxu0 %v96
    %400 = vmatpush1.msra.mxu0 %v95
    %401 = vmatprep.subr.mxu0 %v98
    %402 = vmatpush1.msra.mxu0 %v97
    %403 = vmatprep.subr.mxu0 %v100
    %404 = vmatpush1.msra.mxu0 %v99
    %405 = vmatprep.subr.mxu0 0.0
    %406 = vmatpush1.msra.mxu0 0.0
    %407 = vmatprep.subr.mxu0 0.0
    %408 = vmatpush1.msra.mxu0 0.0
    %409 = vmatprep.subr.mxu0 0.0
    %410 = vmatpush1.msra.mxu0 0.0
    %411 = vmatprep.subr.mxu0 0.0
    %412 = vmatpush1.msra.mxu0 0.0
    %413 = vmatprep.subr.mxu0 0.0
    %414 = vmatpush1.msra.mxu0 0.0
    %415 = vmatprep.subr.mxu0 0.0
    %416 = vmatpush1.msra.mxu0 0.0
    %417 = vmatprep.subr.mxu0 0.0
    %418 = vmatpush1.msra.mxu0 0.0
    %419 = vmatprep.subr.mxu0 0.0
    %420 = vmatpush1.msra.mxu0 0.0
    %421 = vmatprep.subr.mxu0 0.0
    %422 = vmatpush1.msra.mxu0 0.0
    %423 = vmatprep.subr.mxu0 0.0
    %424 = vmatpush1.msra.mxu0 0.0
    %425 = vmatprep.subr.mxu0 0.0
    %426 = vmatpush1.msra.mxu0 0.0
    %427 = vmatprep.subr.mxu0 0.0
    %428 = vmatpush1.msra.mxu0 0.0
    %429 = vmatprep.subr.mxu0 0.0
    %430 = vmatpush1.msra.mxu0 0.0
    %431 = vmatprep.subr.mxu0 0.0
    %432 = vmatpush1.msra.mxu0 0.0
    %433 = vmatprep.subr.mxu0 0.0
    %434 = vmatpush1.msra.mxu0 0.0
    %435 = vmatprep.subr.mxu0 0.0
    %436 = vmatpush1.msra.mxu0 0.0
    %437 = vmatprep.subr.mxu0 0.0
    %438 = vmatpush1.msra.mxu0 0.0
    %439 = vmatprep.subr.mxu0 0.0
    %440 = vmatpush1.msra.mxu0 0.0
    %441 = vmatprep.subr.mxu0 0.0
    %442 = vmatpush1.msra.mxu0 0.0
    %443 = vmatprep.subr.mxu0 0.0
    %444 = vmatpush1.msra.mxu0 0.0
    %445 = vmatprep.subr.mxu0 0.0
    %446 = vmatpush1.msra.mxu0 0.0
    %447 = vmatprep.subr.mxu0 0.0
    %448 = vmatpush1.msra.mxu0 0.0
    %449 = vmatprep.subr.mxu0 0.0
    %450 = vmatpush1.msra.mxu0 0.0
    %451 = vmatprep.subr.mxu0 0.0
    %452 = vmatpush1.msra.mxu0 0.0
    %453 = vmatprep.mubr.f32.mxu0 0.0
    %454 = vmatmul.mubr.f32.gmra.mrb[0].mxu0 %v387
    %v455 = vpop.f32.mrb[0].mxu0
    %v456 = vadd.f32 0.0, %v455
    %v457 = vpop.f32.mrb[0].mxu0
    %v458 = vadd.f32 0.0, %v457
    %459 = vdwg.mxu0
    %v460 = vadd.f32 %v384, %v456
    %v461 = vadd.f32 %v385, %v458
    %v462 = vxor.u32 %v460, 2147483648
    %v463 = vxor.u32 %v461, 2147483648
    %v464 = vmul.f32 %v462, 1.442695
    %v465 = vpow.pop %v464
    %v466 = vmul.f32 %v463, 1.442695
    %v467 = vpow.pop %v466
    %v468 = vadd.f32 %v465, 1.0
    %v469 = vadd.f32 %v467, 1.0
    %v470 = vrcp.pop %v468
    %v471 = vmul.f32 1.0, %v470
    %v472 = vrcp.pop %v469
    %v473 = vmul.f32 1.0, %v472
    %v474 = vtanh.pop %v461
    %v475 = vmul.f32 %v471, %v375
    %477 = vrot.lane.b32.xlu0 %v474, 64
    %v478 = vpop.permute.xlu0 %477
    %v480 = vmul.f32 %v471, %v478
    %482 = vrot.lane.b32.xlu0 %v480, 64
    %v483 = vpop.permute.xlu0 %482
    %v485 = vadd.f32 %v475, %v483
    %v486 = vtanh.pop %v485
    %488 = vrot.lane.b32.xlu0 %v486, 64
    %v489 = vpop.permute.xlu0 %488
    %v491 = vmul.f32 %v473, %v489
    %s492 = scalar_lea.vmem [#allocation2], 8
    %493 = vst.msk [vmem:[%s492] sm:$0xff] %vm60, %v491
    %s494 = scalar_lea.vmem [#allocation3], 32
    %v495 = vld [vmem:[%s494] sm:$0xff]
    %v496 = vld [vmem:[%s494 + $0x8] sm:$0xff]
    %v498 = vsel %vm60, %v491, 0
    %500 = vmatprep.subr.mxu0 %v86
    %501 = vmatpush1.msra.mxu0 %v85
    %502 = vmatprep.subr.mxu0 %v88
    %503 = vmatpush1.msra.mxu0 %v87
    %504 = vmatprep.subr.mxu0 %v90
    %505 = vmatpush1.msra.mxu0 %v89
    %506 = vmatprep.subr.mxu0 %v92
    %507 = vmatpush1.msra.mxu0 %v91
    %508 = vmatprep.subr.mxu0 %v94
    %509 = vmatpush1.msra.mxu0 %v93
    %510 = vmatprep.subr.mxu0 %v96
    %511 = vmatpush1.msra.mxu0 %v95
    %512 = vmatprep.subr.mxu0 %v98
    %513 = vmatpush1.msra.mxu0 %v97
    %514 = vmatprep.subr.mxu0 %v100
    %515 = vmatpush1.msra.mxu0 %v99
    %516 = vmatprep.subr.mxu0 0.0
    %517 = vmatpush1.msra.mxu0 0.0
    %518 = vmatprep.subr.mxu0 0.0
    %519 = vmatpush1.msra.mxu0 0.0
    %520 = vmatprep.subr.mxu0 0.0
    %521 = vmatpush1.msra.mxu0 0.0
    %522 = vmatprep.subr.mxu0 0.0
    %523 = vmatpush1.msra.mxu0 0.0
    %524 = vmatprep.subr.mxu0 0.0
    %525 = vmatpush1.msra.mxu0 0.0
    %526 = vmatprep.subr.mxu0 0.0
    %527 = vmatpush1.msra.mxu0 0.0
    %528 = vmatprep.subr.mxu0 0.0
    %529 = vmatpush1.msra.mxu0 0.0
    %530 = vmatprep.subr.mxu0 0.0
    %531 = vmatpush1.msra.mxu0 0.0
    %532 = vmatprep.subr.mxu0 0.0
    %533 = vmatpush1.msra.mxu0 0.0
    %534 = vmatprep.subr.mxu0 0.0
    %535 = vmatpush1.msra.mxu0 0.0
    %536 = vmatprep.subr.mxu0 0.0
    %537 = vmatpush1.msra.mxu0 0.0
    %538 = vmatprep.subr.mxu0 0.0
    %539 = vmatpush1.msra.mxu0 0.0
    %540 = vmatprep.subr.mxu0 0.0
    %541 = vmatpush1.msra.mxu0 0.0
    %542 = vmatprep.subr.mxu0 0.0
    %543 = vmatpush1.msra.mxu0 0.0
    %544 = vmatprep.subr.mxu0 0.0
    %545 = vmatpush1.msra.mxu0 0.0
    %546 = vmatprep.subr.mxu0 0.0
    %547 = vmatpush1.msra.mxu0 0.0
    %548 = vmatprep.subr.mxu0 0.0
    %549 = vmatpush1.msra.mxu0 0.0
    %550 = vmatprep.subr.mxu0 0.0
    %551 = vmatpush1.msra.mxu0 0.0
    %552 = vmatprep.subr.mxu0 0.0
    %553 = vmatpush1.msra.mxu0 0.0
    %554 = vmatprep.subr.mxu0 0.0
    %555 = vmatpush1.msra.mxu0 0.0
    %556 = vmatprep.subr.mxu0 0.0
    %557 = vmatpush1.msra.mxu0 0.0
    %558 = vmatprep.subr.mxu0 0.0
    %559 = vmatpush1.msra.mxu0 0.0
    %560 = vmatprep.subr.mxu0 0.0
    %561 = vmatpush1.msra.mxu0 0.0
    %562 = vmatprep.subr.mxu0 0.0
    %563 = vmatpush1.msra.mxu0 0.0
    %564 = vmatprep.mubr.f32.mxu0 0.0
    %565 = vmatmul.mubr.f32.gmra.mrb[0].mxu0 %v498
    %v566 = vpop.f32.mrb[0].mxu0
    %v567 = vadd.f32 0.0, %v566
    %v568 = vpop.f32.mrb[0].mxu0
    %v569 = vadd.f32 0.0, %v568
    %570 = vdwg.mxu0
    %v571 = vadd.f32 %v495, %v567
    %v572 = vadd.f32 %v496, %v569
    %v573 = vxor.u32 %v571, 2147483648
    %v574 = vxor.u32 %v572, 2147483648
    %v575 = vmul.f32 %v573, 1.442695
    %v576 = vpow.pop %v575
    %v577 = vmul.f32 %v574, 1.442695
    %v578 = vpow.pop %v577
    %v579 = vadd.f32 %v576, 1.0
    %v580 = vadd.f32 %v578, 1.0
    %v581 = vrcp.pop %v579
    %v582 = vmul.f32 1.0, %v581
    %v583 = vrcp.pop %v580
    %v584 = vmul.f32 1.0, %v583
    %v585 = vtanh.pop %v572
    %v586 = vmul.f32 %v582, %v485
    %588 = vrot.lane.b32.xlu0 %v585, 64
    %v589 = vpop.permute.xlu0 %588
    %v591 = vmul.f32 %v582, %v589
    %593 = vrot.lane.b32.xlu0 %v591, 64
    %v594 = vpop.permute.xlu0 %593
    %v596 = vadd.f32 %v586, %v594
    %v597 = vtanh.pop %v596
    %599 = vrot.lane.b32.xlu0 %v597, 64
    %v600 = vpop.permute.xlu0 %599
    %v602 = vmul.f32 %v584, %v600
    %s603 = scalar_lea.vmem [#allocation2], 16
    %604 = vst.msk [vmem:[%s603] sm:$0xff] %vm60, %v602
    %s605 = scalar_lea.vmem [#allocation3], 48
    %v606 = vld [vmem:[%s605] sm:$0xff]
    %v607 = vld [vmem:[%s605 + $0x8] sm:$0xff]
    %v609 = vsel %vm60, %v602, 0
    %611 = vmatprep.subr.mxu0 %v86
    %612 = vmatpush1.msra.mxu0 %v85
    %613 = vmatprep.subr.mxu0 %v88
    %614 = vmatpush1.msra.mxu0 %v87
    %615 = vmatprep.subr.mxu0 %v90
    %616 = vmatpush1.msra.mxu0 %v89
    %617 = vmatprep.subr.mxu0 %v92
    %618 = vmatpush1.msra.mxu0 %v91
    %619 = vmatprep.subr.mxu0 %v94
    %620 = vmatpush1.msra.mxu0 %v93
    %621 = vmatprep.subr.mxu0 %v96
    %622 = vmatpush1.msra.mxu0 %v95
    %623 = vmatprep.subr.mxu0 %v98
    %624 = vmatpush1.msra.mxu0 %v97
    %625 = vmatprep.subr.mxu0 %v100
    %626 = vmatpush1.msra.mxu0 %v99
    %627 = vmatprep.subr.mxu0 0.0
    %628 = vmatpush1.msra.mxu0 0.0
    %629 = vmatprep.subr.mxu0 0.0
    %630 = vmatpush1.msra.mxu0 0.0
    %631 = vmatprep.subr.mxu0 0.0
    %632 = vmatpush1.msra.mxu0 0.0
    %633 = vmatprep.subr.mxu0 0.0
    %634 = vmatpush1.msra.mxu0 0.0
    %635 = vmatprep.subr.mxu0 0.0
    %636 = vmatpush1.msra.mxu0 0.0
    %637 = vmatprep.subr.mxu0 0.0
    %638 = vmatpush1.msra.mxu0 0.0
    %639 = vmatprep.subr.mxu0 0.0
    %640 = vmatpush1.msra.mxu0 0.0
    %641 = vmatprep.subr.mxu0 0.0
    %642 = vmatpush1.msra.mxu0 0.0
    %643 = vmatprep.subr.mxu0 0.0
    %644 = vmatpush1.msra.mxu0 0.0
    %645 = vmatprep.subr.mxu0 0.0
    %646 = vmatpush1.msra.mxu0 0.0
    %647 = vmatprep.subr.mxu0 0.0
    %648 = vmatpush1.msra.mxu0 0.0
    %649 = vmatprep.subr.mxu0 0.0
    %650 = vmatpush1.msra.mxu0 0.0
    %651 = vmatprep.subr.mxu0 0.0
    %652 = vmatpush1.msra.mxu0 0.0
    %653 = vmatprep.subr.mxu0 0.0
    %654 = vmatpush1.msra.mxu0 0.0
    %655 = vmatprep.subr.mxu0 0.0
    %656 = vmatpush1.msra.mxu0 0.0
    %657 = vmatprep.subr.mxu0 0.0
    %658 = vmatpush1.msra.mxu0 0.0
    %659 = vmatprep.subr.mxu0 0.0
    %660 = vmatpush1.msra.mxu0 0.0
    %661 = vmatprep.subr.mxu0 0.0
    %662 = vmatpush1.msra.mxu0 0.0
    %663 = vmatprep.subr.mxu0 0.0
    %664 = vmatpush1.msra.mxu0 0.0
    %665 = vmatprep.subr.mxu0 0.0
    %666 = vmatpush1.msra.mxu0 0.0
    %667 = vmatprep.subr.mxu0 0.0
    %668 = vmatpush1.msra.mxu0 0.0
    %669 = vmatprep.subr.mxu0 0.0
    %670 = vmatpush1.msra.mxu0 0.0
    %671 = vmatprep.subr.mxu0 0.0
    %672 = vmatpush1.msra.mxu0 0.0
    %673 = vmatprep.subr.mxu0 0.0
    %674 = vmatpush1.msra.mxu0 0.0
    %675 = vmatprep.mubr.f32.mxu0 0.0
    %676 = vmatmul.mubr.f32.gmra.mrb[0].mxu0 %v609
    %v677 = vpop.f32.mrb[0].mxu0
    %v678 = vadd.f32 0.0, %v677
    %v679 = vpop.f32.mrb[0].mxu0
    %v680 = vadd.f32 0.0, %v679
    %681 = vdwg.mxu0
    %v682 = vadd.f32 %v606, %v678
    %v683 = vadd.f32 %v607, %v680
    %v684 = vxor.u32 %v682, 2147483648
    %v685 = vxor.u32 %v683, 2147483648
    %v686 = vmul.f32 %v684, 1.442695
    %v687 = vpow.pop %v686
    %v688 = vmul.f32 %v685, 1.442695
    %v689 = vpow.pop %v688
    %v690 = vadd.f32 %v687, 1.0
    %v691 = vadd.f32 %v689, 1.0
    %v692 = vrcp.pop %v690
    %v693 = vmul.f32 1.0, %v692
    %v694 = vrcp.pop %v691
    %v695 = vmul.f32 1.0, %v694
    %v696 = vtanh.pop %v683
    %v697 = vmul.f32 %v693, %v596
    %699 = vrot.lane.b32.xlu0 %v696, 64
    %v700 = vpop.permute.xlu0 %699
    %v702 = vmul.f32 %v693, %v700
    %704 = vrot.lane.b32.xlu0 %v702, 64
    %v705 = vpop.permute.xlu0 %704
    %v707 = vadd.f32 %v697, %v705
    %v708 = vtanh.pop %v707
    %710 = vrot.lane.b32.xlu0 %v708, 64
    %v711 = vpop.permute.xlu0 %710
    %v713 = vmul.f32 %v695, %v711
    %s714 = scalar_lea.vmem [#allocation2], 24
    %715 = vst.msk [vmem:[%s714] sm:$0xff] %vm60, %v713
    %s716 = scalar_lea.vmem [#allocation3], 64
    %v717 = vld [vmem:[%s716] sm:$0xff]
    %v718 = vld [vmem:[%s716 + $0x8] sm:$0xff]
    %v720 = vsel %vm60, %v713, 0
    %722 = vmatprep.subr.mxu0 %v86
    %723 = vmatpush1.msra.mxu0 %v85
    %724 = vmatprep.subr.mxu0 %v88
    %725 = vmatpush1.msra.mxu0 %v87
    %726 = vmatprep.subr.mxu0 %v90
    %727 = vmatpush1.msra.mxu0 %v89
    %728 = vmatprep.subr.mxu0 %v92
    %729 = vmatpush1.msra.mxu0 %v91
    %730 = vmatprep.subr.mxu0 %v94
    %731 = vmatpush1.msra.mxu0 %v93
    %732 = vmatprep.subr.mxu0 %v96
    %733 = vmatpush1.msra.mxu0 %v95
    %734 = vmatprep.subr.mxu0 %v98
    %735 = vmatpush1.msra.mxu0 %v97
    %736 = vmatprep.subr.mxu0 %v100
    %737 = vmatpush1.msra.mxu0 %v99
    %738 = vmatprep.subr.mxu0 0.0
    %739 = vmatpush1.msra.mxu0 0.0
    %740 = vmatprep.subr.mxu0 0.0
    %741 = vmatpush1.msra.mxu0 0.0
    %742 = vmatprep.subr.mxu0 0.0
    %743 = vmatpush1.msra.mxu0 0.0
    %744 = vmatprep.subr.mxu0 0.0
    %745 = vmatpush1.msra.mxu0 0.0
    %746 = vmatprep.subr.mxu0 0.0
    %747 = vmatpush1.msra.mxu0 0.0
    %748 = vmatprep.subr.mxu0 0.0
    %749 = vmatpush1.msra.mxu0 0.0
    %750 = vmatprep.subr.mxu0 0.0
    %751 = vmatpush1.msra.mxu0 0.0
    %752 = vmatprep.subr.mxu0 0.0
    %753 = vmatpush1.msra.mxu0 0.0
    %754 = vmatprep.subr.mxu0 0.0
    %755 = vmatpush1.msra.mxu0 0.0
    %756 = vmatprep.subr.mxu0 0.0
    %757 = vmatpush1.msra.mxu0 0.0
    %758 = vmatprep.subr.mxu0 0.0
    %759 = vmatpush1.msra.mxu0 0.0
    %760 = vmatprep.subr.mxu0 0.0
    %761 = vmatpush1.msra.mxu0 0.0
    %762 = vmatprep.subr.mxu0 0.0
    %763 = vmatpush1.msra.mxu0 0.0
    %764 = vmatprep.subr.mxu0 0.0
    %765 = vmatpush1.msra.mxu0 0.0
    %766 = vmatprep.subr.mxu0 0.0
    %767 = vmatpush1.msra.mxu0 0.0
    %768 = vmatprep.subr.mxu0 0.0
    %769 = vmatpush1.msra.mxu0 0.0
    %770 = vmatprep.subr.mxu0 0.0
    %771 = vmatpush1.msra.mxu0 0.0
    %772 = vmatprep.subr.mxu0 0.0
    %773 = vmatpush1.msra.mxu0 0.0
    %774 = vmatprep.subr.mxu0 0.0
    %775 = vmatpush1.msra.mxu0 0.0
    %776 = vmatprep.subr.mxu0 0.0
    %777 = vmatpush1.msra.mxu0 0.0
    %778 = vmatprep.subr.mxu0 0.0
    %779 = vmatpush1.msra.mxu0 0.0
    %780 = vmatprep.subr.mxu0 0.0
    %781 = vmatpush1.msra.mxu0 0.0
    %782 = vmatprep.subr.mxu0 0.0
    %783 = vmatpush1.msra.mxu0 0.0
    %784 = vmatprep.subr.mxu0 0.0
    %785 = vmatpush1.msra.mxu0 0.0
    %786 = vmatprep.mubr.f32.mxu0 0.0
    %787 = vmatmul.mubr.f32.gmra.mrb[0].mxu0 %v720
    %v788 = vpop.f32.mrb[0].mxu0
    %v789 = vadd.f32 0.0, %v788
    %v790 = vpop.f32.mrb[0].mxu0
    %v791 = vadd.f32 0.0, %v790
    %792 = vdwg.mxu0
    %v793 = vadd.f32 %v717, %v789
    %v794 = vadd.f32 %v718, %v791
    %v795 = vxor.u32 %v793, 2147483648
    %v796 = vxor.u32 %v794, 2147483648
    %v797 = vmul.f32 %v795, 1.442695
    %v798 = vpow.pop %v797
    %v799 = vmul.f32 %v796, 1.442695
    %v800 = vpow.pop %v799
    %v801 = vadd.f32 %v798, 1.0
    %v802 = vadd.f32 %v800, 1.0
    %v803 = vrcp.pop %v801
    %v804 = vmul.f32 1.0, %v803
    %v805 = vrcp.pop %v802
    %v806 = vmul.f32 1.0, %v805
    %v807 = vtanh.pop %v794
    %v808 = vmul.f32 %v804, %v707
    %810 = vrot.lane.b32.xlu0 %v807, 64
    %v811 = vpop.permute.xlu0 %810
    %v813 = vmul.f32 %v804, %v811
    %815 = vrot.lane.b32.xlu0 %v813, 64
    %v816 = vpop.permute.xlu0 %815
    %v818 = vadd.f32 %v808, %v816
    %v819 = vtanh.pop %v818
    %821 = vrot.lane.b32.xlu0 %v819, 64
    %v822 = vpop.permute.xlu0 %821
    %v824 = vmul.f32 %v806, %v822
    %s825 = scalar_lea.vmem [#allocation2], 32
    %826 = vst.msk [vmem:[%s825] sm:$0xff] %vm60, %v824
    %s827 = scalar_lea.vmem [#allocation3], 80
    %v828 = vld [vmem:[%s827] sm:$0xff]
    %v829 = vld [vmem:[%s827 + $0x8] sm:$0xff]
    %v831 = vsel %vm60, %v824, 0
    %833 = vmatprep.subr.mxu0 %v86
    %834 = vmatpush1.msra.mxu0 %v85
    %835 = vmatprep.subr.mxu0 %v88
    %836 = vmatpush1.msra.mxu0 %v87
    %837 = vmatprep.subr.mxu0 %v90
    %838 = vmatpush1.msra.mxu0 %v89
    %839 = vmatprep.subr.mxu0 %v92
    %840 = vmatpush1.msra.mxu0 %v91
    %841 = vmatprep.subr.mxu0 %v94
    %842 = vmatpush1.msra.mxu0 %v93
    %843 = vmatprep.subr.mxu0 %v96
    %844 = vmatpush1.msra.mxu0 %v95
    %845 = vmatprep.subr.mxu0 %v98
    %846 = vmatpush1.msra.mxu0 %v97
    %847 = vmatprep.subr.mxu0 %v100
    %848 = vmatpush1.msra.mxu0 %v99
    %849 = vmatprep.subr.mxu0 0.0
    %850 = vmatpush1.msra.mxu0 0.0
    %851 = vmatprep.subr.mxu0 0.0
    %852 = vmatpush1.msra.mxu0 0.0
    %853 = vmatprep.subr.mxu0 0.0
    %854 = vmatpush1.msra.mxu0 0.0
    %855 = vmatprep.subr.mxu0 0.0
    %856 = vmatpush1.msra.mxu0 0.0
    %857 = vmatprep.subr.mxu0 0.0
    %858 = vmatpush1.msra.mxu0 0.0
    %859 = vmatprep.subr.mxu0 0.0
    %860 = vmatpush1.msra.mxu0 0.0
    %861 = vmatprep.subr.mxu0 0.0
    %862 = vmatpush1.msra.mxu0 0.0
    %863 = vmatprep.subr.mxu0 0.0
    %864 = vmatpush1.msra.mxu0 0.0
    %865 = vmatprep.subr.mxu0 0.0
    %866 = vmatpush1.msra.mxu0 0.0
    %867 = vmatprep.subr.mxu0 0.0
    %868 = vmatpush1.msra.mxu0 0.0
    %869 = vmatprep.subr.mxu0 0.0
    %870 = vmatpush1.msra.mxu0 0.0
    %871 = vmatprep.subr.mxu0 0.0
    %872 = vmatpush1.msra.mxu0 0.0
    %873 = vmatprep.subr.mxu0 0.0
    %874 = vmatpush1.msra.mxu0 0.0
    %875 = vmatprep.subr.mxu0 0.0
    %876 = vmatpush1.msra.mxu0 0.0
    %877 = vmatprep.subr.mxu0 0.0
    %878 = vmatpush1.msra.mxu0 0.0
    %879 = vmatprep.subr.mxu0 0.0
    %880 = vmatpush1.msra.mxu0 0.0
    %881 = vmatprep.subr.mxu0 0.0
    %882 = vmatpush1.msra.mxu0 0.0
    %883 = vmatprep.subr.mxu0 0.0
    %884 = vmatpush1.msra.mxu0 0.0
    %885 = vmatprep.subr.mxu0 0.0
    %886 = vmatpush1.msra.mxu0 0.0
    %887 = vmatprep.subr.mxu0 0.0
    %888 = vmatpush1.msra.mxu0 0.0
    %889 = vmatprep.subr.mxu0 0.0
    %890 = vmatpush1.msra.mxu0 0.0
    %891 = vmatprep.subr.mxu0 0.0
    %892 = vmatpush1.msra.mxu0 0.0
    %893 = vmatprep.subr.mxu0 0.0
    %894 = vmatpush1.msra.mxu0 0.0
    %895 = vmatprep.subr.mxu0 0.0
    %896 = vmatpush1.msra.mxu0 0.0
    %897 = vmatprep.mubr.f32.mxu0 0.0
    %898 = vmatmul.mubr.f32.gmra.mrb[0].mxu0 %v831
    %v899 = vpop.f32.mrb[0].mxu0
    %v900 = vadd.f32 0.0, %v899
    %v901 = vpop.f32.mrb[0].mxu0
    %v902 = vadd.f32 0.0, %v901
    %903 = vdwg.mxu0
    %v904 = vadd.f32 %v828, %v900
    %v905 = vadd.f32 %v829, %v902
    %v906 = vxor.u32 %v904, 2147483648
    %v907 = vxor.u32 %v905, 2147483648
    %v908 = vmul.f32 %v906, 1.442695
    %v909 = vpow.pop %v908
    %v910 = vmul.f32 %v907, 1.442695
    %v911 = vpow.pop %v910
    %v912 = vadd.f32 %v909, 1.0
    %v913 = vadd.f32 %v911, 1.0
    %v914 = vrcp.pop %v912
    %v915 = vmul.f32 1.0, %v914
    %v916 = vrcp.pop %v913
    %v917 = vmul.f32 1.0, %v916
    %v918 = vtanh.pop %v905
    %v919 = vmul.f32 %v915, %v818
    %921 = vrot.lane.b32.xlu0 %v918, 64
    %v922 = vpop.permute.xlu0 %921
    %v924 = vmul.f32 %v915, %v922
    %926 = vrot.lane.b32.xlu0 %v924, 64
    %v927 = vpop.permute.xlu0 %926
    %v929 = vadd.f32 %v919, %v927
    %v930 = vtanh.pop %v929
    %932 = vrot.lane.b32.xlu0 %v930, 64
    %v933 = vpop.permute.xlu0 %932
    %v935 = vmul.f32 %v917, %v933
    %s936 = scalar_lea.vmem [#allocation2], 40
    %937 = vst.msk [vmem:[%s936] sm:$0xff] %vm60, %v935
    %s938 = scalar_lea.vmem [#allocation3], 96
    %v939 = vld [vmem:[%s938] sm:$0xff]
    %v940 = vld [vmem:[%s938 + $0x8] sm:$0xff]
    %v942 = vsel %vm60, %v935, 0
    %944 = vmatprep.subr.mxu0 %v86
    %945 = vmatpush1.msra.mxu0 %v85
    %946 = vmatprep.subr.mxu0 %v88
    %947 = vmatpush1.msra.mxu0 %v87
    %948 = vmatprep.subr.mxu0 %v90
    %949 = vmatpush1.msra.mxu0 %v89
    %950 = vmatprep.subr.mxu0 %v92
    %951 = vmatpush1.msra.mxu0 %v91
    %952 = vmatprep.subr.mxu0 %v94
    %953 = vmatpush1.msra.mxu0 %v93
    %954 = vmatprep.subr.mxu0 %v96
    %955 = vmatpush1.msra.mxu0 %v95
    %956 = vmatprep.subr.mxu0 %v98
    %957 = vmatpush1.msra.mxu0 %v97
    %958 = vmatprep.subr.mxu0 %v100
    %959 = vmatpush1.msra.mxu0 %v99
    %960 = vmatprep.subr.mxu0 0.0
    %961 = vmatpush1.msra.mxu0 0.0
    %962 = vmatprep.subr.mxu0 0.0
    %963 = vmatpush1.msra.mxu0 0.0
    %964 = vmatprep.subr.mxu0 0.0
    %965 = vmatpush1.msra.mxu0 0.0
    %966 = vmatprep.subr.mxu0 0.0
    %967 = vmatpush1.msra.mxu0 0.0
    %968 = vmatprep.subr.mxu0 0.0
    %969 = vmatpush1.msra.mxu0 0.0
    %970 = vmatprep.subr.mxu0 0.0
    %971 = vmatpush1.msra.mxu0 0.0
    %972 = vmatprep.subr.mxu0 0.0
    %973 = vmatpush1.msra.mxu0 0.0
    %974 = vmatprep.subr.mxu0 0.0
    %975 = vmatpush1.msra.mxu0 0.0
    %976 = vmatprep.subr.mxu0 0.0
    %977 = vmatpush1.msra.mxu0 0.0
    %978 = vmatprep.subr.mxu0 0.0
    %979 = vmatpush1.msra.mxu0 0.0
    %980 = vmatprep.subr.mxu0 0.0
    %981 = vmatpush1.msra.mxu0 0.0
    %982 = vmatprep.subr.mxu0 0.0
    %983 = vmatpush1.msra.mxu0 0.0
    %984 = vmatprep.subr.mxu0 0.0
    %985 = vmatpush1.msra.mxu0 0.0
    %986 = vmatprep.subr.mxu0 0.0
    %987 = vmatpush1.msra.mxu0 0.0
    %988 = vmatprep.subr.mxu0 0.0
    %989 = vmatpush1.msra.mxu0 0.0
    %990 = vmatprep.subr.mxu0 0.0
    %991 = vmatpush1.msra.mxu0 0.0
    %992 = vmatprep.subr.mxu0 0.0
    %993 = vmatpush1.msra.mxu0 0.0
    %994 = vmatprep.subr.mxu0 0.0
    %995 = vmatpush1.msra.mxu0 0.0
    %996 = vmatprep.subr.mxu0 0.0
    %997 = vmatpush1.msra.mxu0 0.0
    %998 = vmatprep.subr.mxu0 0.0
    %999 = vmatpush1.msra.mxu0 0.0
    %1000 = vmatprep.subr.mxu0 0.0
    %1001 = vmatpush1.msra.mxu0 0.0
    %1002 = vmatprep.subr.mxu0 0.0
    %1003 = vmatpush1.msra.mxu0 0.0
    %1004 = vmatprep.subr.mxu0 0.0
    %1005 = vmatpush1.msra.mxu0 0.0
    %1006 = vmatprep.subr.mxu0 0.0
    %1007 = vmatpush1.msra.mxu0 0.0
    %1008 = vmatprep.mubr.f32.mxu0 0.0
    %1009 = vmatmul.mubr.f32.gmra.mrb[0].mxu0 %v942
    %v1010 = vpop.f32.mrb[0].mxu0
    %v1011 = vadd.f32 0.0, %v1010
    %v1012 = vpop.f32.mrb[0].mxu0
    %v1013 = vadd.f32 0.0, %v1012
    %1014 = vdwg.mxu0
    %v1015 = vadd.f32 %v939, %v1011
    %v1016 = vadd.f32 %v940, %v1013
    %v1017 = vxor.u32 %v1015, 2147483648
    %v1018 = vxor.u32 %v1016, 2147483648
    %v1019 = vmul.f32 %v1017, 1.442695
    %v1020 = vpow.pop %v1019
    %v1021 = vmul.f32 %v1018, 1.442695
    %v1022 = vpow.pop %v1021
    %v1023 = vadd.f32 %v1020, 1.0
    %v1024 = vadd.f32 %v1022, 1.0
    %v1025 = vrcp.pop %v1023
    %v1026 = vmul.f32 1.0, %v1025
    %v1027 = vrcp.pop %v1024
    %v1028 = vmul.f32 1.0, %v1027
    %v1029 = vtanh.pop %v1016
    %v1030 = vmul.f32 %v1026, %v929
    %1032 = vrot.lane.b32.xlu0 %v1029, 64
    %v1033 = vpop.permute.xlu0 %1032
    %v1035 = vmul.f32 %v1026, %v1033
    %1037 = vrot.lane.b32.xlu0 %v1035, 64
    %v1038 = vpop.permute.xlu0 %1037
    %v1040 = vadd.f32 %v1030, %v1038
    %v1041 = vtanh.pop %v1040
    %1043 = vrot.lane.b32.xlu0 %v1041, 64
    %v1044 = vpop.permute.xlu0 %1043
    %v1046 = vmul.f32 %v1028, %v1044
    %s1047 = scalar_lea.vmem [#allocation2], 48
    %1048 = vst.msk [vmem:[%s1047] sm:$0xff] %vm60, %v1046
    %s1049 = scalar_lea.vmem [#allocation3], 112
    %v1050 = vld [vmem:[%s1049] sm:$0xff]
    %v1051 = vld [vmem:[%s1049 + $0x8] sm:$0xff]
    %v1053 = vsel %vm60, %v1046, 0
    %1055 = vmatprep.subr.mxu0 %v86
    %1056 = vmatpush1.msra.mxu0 %v85
    %1057 = vmatprep.subr.mxu0 %v88
    %1058 = vmatpush1.msra.mxu0 %v87
    %1059 = vmatprep.subr.mxu0 %v90
    %1060 = vmatpush1.msra.mxu0 %v89
    %1061 = vmatprep.subr.mxu0 %v92
    %1062 = vmatpush1.msra.mxu0 %v91
    %1063 = vmatprep.subr.mxu0 %v94
    %1064 = vmatpush1.msra.mxu0 %v93
    %1065 = vmatprep.subr.mxu0 %v96
    %1066 = vmatpush1.msra.mxu0 %v95
    %1067 = vmatprep.subr.mxu0 %v98
    %1068 = vmatpush1.msra.mxu0 %v97
    %1069 = vmatprep.subr.mxu0 %v100
    %1070 = vmatpush1.msra.mxu0 %v99
    %1071 = vmatprep.subr.mxu0 0.0
    %1072 = vmatpush1.msra.mxu0 0.0
    %1073 = vmatprep.subr.mxu0 0.0
    %1074 = vmatpush1.msra.mxu0 0.0
    %1075 = vmatprep.subr.mxu0 0.0
    %1076 = vmatpush1.msra.mxu0 0.0
    %1077 = vmatprep.subr.mxu0 0.0
    %1078 = vmatpush1.msra.mxu0 0.0
    %1079 = vmatprep.subr.mxu0 0.0
    %1080 = vmatpush1.msra.mxu0 0.0
    %1081 = vmatprep.subr.mxu0 0.0
    %1082 = vmatpush1.msra.mxu0 0.0
    %1083 = vmatprep.subr.mxu0 0.0
    %1084 = vmatpush1.msra.mxu0 0.0
    %1085 = vmatprep.subr.mxu0 0.0
    %1086 = vmatpush1.msra.mxu0 0.0
    %1087 = vmatprep.subr.mxu0 0.0
    %1088 = vmatpush1.msra.mxu0 0.0
    %1089 = vmatprep.subr.mxu0 0.0
    %1090 = vmatpush1.msra.mxu0 0.0
    %1091 = vmatprep.subr.mxu0 0.0
    %1092 = vmatpush1.msra.mxu0 0.0
    %1093 = vmatprep.subr.mxu0 0.0
    %1094 = vmatpush1.msra.mxu0 0.0
    %1095 = vmatprep.subr.mxu0 0.0
    %1096 = vmatpush1.msra.mxu0 0.0
    %1097 = vmatprep.subr.mxu0 0.0
    %1098 = vmatpush1.msra.mxu0 0.0
    %1099 = vmatprep.subr.mxu0 0.0
    %1100 = vmatpush1.msra.mxu0 0.0
    %1101 = vmatprep.subr.mxu0 0.0
    %1102 = vmatpush1.msra.mxu0 0.0
    %1103 = vmatprep.subr.mxu0 0.0
    %1104 = vmatpush1.msra.mxu0 0.0
    %1105 = vmatprep.subr.mxu0 0.0
    %1106 = vmatpush1.msra.mxu0 0.0
    %1107 = vmatprep.subr.mxu0 0.0
    %1108 = vmatpush1.msra.mxu0 0.0
    %1109 = vmatprep.subr.mxu0 0.0
    %1110 = vmatpush1.msra.mxu0 0.0
    %1111 = vmatprep.subr.mxu0 0.0
    %1112 = vmatpush1.msra.mxu0 0.0
    %1113 = vmatprep.subr.mxu0 0.0
    %1114 = vmatpush1.msra.mxu0 0.0
    %1115 = vmatprep.subr.mxu0 0.0
    %1116 = vmatpush1.msra.mxu0 0.0
    %1117 = vmatprep.subr.mxu0 0.0
    %1118 = vmatpush1.msra.mxu0 0.0
    %1119 = vmatprep.mubr.f32.mxu0 0.0
    %1120 = vmatmul.mubr.f32.gmra.mrb[0].mxu0 %v1053
    %v1121 = vpop.f32.mrb[0].mxu0
    %v1122 = vadd.f32 0.0, %v1121
    %v1123 = vpop.f32.mrb[0].mxu0
    %v1124 = vadd.f32 0.0, %v1123
    %1125 = vdwg.mxu0
    %v1126 = vadd.f32 %v1050, %v1122
    %v1127 = vadd.f32 %v1051, %v1124
    %v1128 = vxor.u32 %v1126, 2147483648
    %v1129 = vxor.u32 %v1127, 2147483648
    %v1130 = vmul.f32 %v1128, 1.442695
    %v1131 = vpow.pop %v1130
    %v1132 = vmul.f32 %v1129, 1.442695
    %v1133 = vpow.pop %v1132
    %v1134 = vadd.f32 %v1131, 1.0
    %v1135 = vadd.f32 %v1133, 1.0
    %v1136 = vrcp.pop %v1134
    %v1137 = vmul.f32 1.0, %v1136
    %v1138 = vrcp.pop %v1135
    %v1139 = vmul.f32 1.0, %v1138
    %v1140 = vtanh.pop %v1127
    %v1141 = vmul.f32 %v1137, %v1040
    %1143 = vrot.lane.b32.xlu0 %v1140, 64
    %v1144 = vpop.permute.xlu0 %1143
    %v1146 = vmul.f32 %v1137, %v1144
    %1148 = vrot.lane.b32.xlu0 %v1146, 64
    %v1149 = vpop.permute.xlu0 %1148
    %v1151 = vadd.f32 %v1141, %v1149
    %v1152 = vtanh.pop %v1151
    %1154 = vrot.lane.b32.xlu0 %v1152, 64
    %v1155 = vpop.permute.xlu0 %1154
    %v1157 = vmul.f32 %v1139, %v1155
    %s1158 = scalar_lea.vmem [#allocation2], 56
    %1159 = vst.msk [vmem:[%s1158] sm:$0xff] %vm60, %v1157
    %s1160 = scalar_lea.vmem [#allocation4], 128
    %v1161 = vld [vmem:[%s1160] sm:$0xff]
    %v1162 = vld [vmem:[%s1160 + $0x8] sm:$0xff]
    %v1163 = vld [vmem:[%s1160 + $0x10] sm:$0xff]
    %v1164 = vld [vmem:[%s1160 + $0x18] sm:$0xff]
    %v1165 = vld [vmem:[%s1160 + $0x20] sm:$0xff]
    %v1166 = vld [vmem:[%s1160 + $0x28] sm:$0xff]
    %v1167 = vld [vmem:[%s1160 + $0x30] sm:$0xff]
    %v1168 = vld [vmem:[%s1160 + $0x38] sm:$0xff]
    %v1169 = vld [vmem:[%s1160 + $0x40] sm:$0xff]
    %v1170 = vld [vmem:[%s1160 + $0x48] sm:$0xff]
    %v1171 = vld [vmem:[%s1160 + $0x50] sm:$0xff]
    %v1172 = vld [vmem:[%s1160 + $0x58] sm:$0xff]
    %v1173 = vld [vmem:[%s1160 + $0x60] sm:$0xff]
    %v1174 = vld [vmem:[%s1160 + $0x68] sm:$0xff]
    %v1175 = vld [vmem:[%s1160 + $0x70] sm:$0xff]
    %v1176 = vld [vmem:[%s1160 + $0x78] sm:$0xff]
    %s1177 = scalar_lea.vmem [#allocation7], 128
    %v1178 = vld [vmem:[%s1177] sm:$0xff]
    %v1179 = vld [vmem:[%s1177 + $0x8] sm:$0xff]
    %v1180 = vld [vmem:[%s1177 + $0x10] sm:$0xff]
    %v1181 = vld [vmem:[%s1177 + $0x18] sm:$0xff]
    %v1182 = vld [vmem:[%s1177 + $0x20] sm:$0xff]
    %v1183 = vld [vmem:[%s1177 + $0x28] sm:$0xff]
    %v1184 = vld [vmem:[%s1177 + $0x30] sm:$0xff]
    %v1185 = vld [vmem:[%s1177 + $0x38] sm:$0xff]
    %v1186 = vld [vmem:[%s1177 + $0x40] sm:$0xff]
    %v1187 = vld [vmem:[%s1177 + $0x48] sm:$0xff]
    %v1188 = vld [vmem:[%s1177 + $0x50] sm:$0xff]
    %v1189 = vld [vmem:[%s1177 + $0x58] sm:$0xff]
    %v1190 = vld [vmem:[%s1177 + $0x60] sm:$0xff]
    %v1191 = vld [vmem:[%s1177 + $0x68] sm:$0xff]
    %v1192 = vld [vmem:[%s1177 + $0x70] sm:$0xff]
    %v1193 = vld [vmem:[%s1177 + $0x78] sm:$0xff]
    %s1194 = scalar_lea.vmem %s3, 2
    %v1195 = vld [vmem:[%s1194] sm:$0x3]
    %v1196 = vld [vmem:[#allocation2] sm:$0xff]
    %v1197 = vld [vmem:[#allocation2 + $0x8] sm:$0xff]
    %v1198 = vld [vmem:[#allocation2 + $0x10] sm:$0xff]
    %v1199 = vld [vmem:[#allocation2 + $0x18] sm:$0xff]
    %v1200 = vld [vmem:[#allocation2 + $0x20] sm:$0xff]
    %v1201 = vld [vmem:[#allocation2 + $0x28] sm:$0xff]
    %v1202 = vld [vmem:[#allocation2 + $0x30] sm:$0xff]
    %v1203 = vld [vmem:[#allocation2 + $0x38] sm:$0xff]
    %v1205 = vlaneseq
    %v1206 = vshrl.u32 %v1205, 7
    %v1207 = vsub.s32 0, %v1206
    %v1208 = vrot.slane %v1195, %v1207
    %v1209 = vlaneseq
    %v1210 = vshrl.u32 %v1209, 7
    %v1211 = vsub.s32 1, %v1210
    %v1212 = vrot.slane %v1195, %v1211
    %v1216 = vsel %vm60, %v1196, 0
    %v1219 = vsel %vm60, %v1197, 0
    %v1222 = vsel %vm60, %v1198, 0
    %v1225 = vsel %vm60, %v1199, 0
    %v1228 = vsel %vm60, %v1200, 0
    %v1231 = vsel %vm60, %v1201, 0
    %v1234 = vsel %vm60, %v1202, 0
    %v1237 = vsel %vm60, %v1203, 0
    %1239 = vmatprep.subr.mxu0 %v1162
    %1240 = vmatpush1.msra.mxu0 %v1161
    %1241 = vmatprep.subr.mxu0 %v1164
    %1242 = vmatpush1.msra.mxu0 %v1163
    %1243 = vmatprep.subr.mxu0 %v1166
    %1244 = vmatpush1.msra.mxu0 %v1165
    %1245 = vmatprep.subr.mxu0 %v1168
    %1246 = vmatpush1.msra.mxu0 %v1167
    %1247 = vmatprep.subr.mxu0 %v1170
    %1248 = vmatpush1.msra.mxu0 %v1169
    %1249 = vmatprep.subr.mxu0 %v1172
    %1250 = vmatpush1.msra.mxu0 %v1171
    %1251 = vmatprep.subr.mxu0 %v1174
    %1252 = vmatpush1.msra.mxu0 %v1173
    %1253 = vmatprep.subr.mxu0 %v1176
    %1254 = vmatpush1.msra.mxu0 %v1175
    %1255 = vmatprep.subr.mxu0 0.0
    %1256 = vmatpush1.msra.mxu0 0.0
    %1257 = vmatprep.subr.mxu0 0.0
    %1258 = vmatpush1.msra.mxu0 0.0
    %1259 = vmatprep.subr.mxu0 0.0
    %1260 = vmatpush1.msra.mxu0 0.0
    %1261 = vmatprep.subr.mxu0 0.0
    %1262 = vmatpush1.msra.mxu0 0.0
    %1263 = vmatprep.subr.mxu0 0.0
    %1264 = vmatpush1.msra.mxu0 0.0
    %1265 = vmatprep.subr.mxu0 0.0
    %1266 = vmatpush1.msra.mxu0 0.0
    %1267 = vmatprep.subr.mxu0 0.0
    %1268 = vmatpush1.msra.mxu0 0.0
    %1269 = vmatprep.subr.mxu0 0.0
    %1270 = vmatpush1.msra.mxu0 0.0
    %1271 = vmatprep.subr.mxu0 0.0
    %1272 = vmatpush1.msra.mxu0 0.0
    %1273 = vmatprep.subr.mxu0 0.0
    %1274 = vmatpush1.msra.mxu0 0.0
    %1275 = vmatprep.subr.mxu0 0.0
    %1276 = vmatpush1.msra.mxu0 0.0
    %1277 = vmatprep.subr.mxu0 0.0
    %1278 = vmatpush1.msra.mxu0 0.0
    %1279 = vmatprep.subr.mxu0 0.0
    %1280 = vmatpush1.msra.mxu0 0.0
    %1281 = vmatprep.subr.mxu0 0.0
    %1282 = vmatpush1.msra.mxu0 0.0
    %1283 = vmatprep.subr.mxu0 0.0
    %1284 = vmatpush1.msra.mxu0 0.0
    %1285 = vmatprep.subr.mxu0 0.0
    %1286 = vmatpush1.msra.mxu0 0.0
    %1287 = vmatprep.subr.mxu0 0.0
    %1288 = vmatpush1.msra.mxu0 0.0
    %1289 = vmatprep.subr.mxu0 0.0
    %1290 = vmatpush1.msra.mxu0 0.0
    %1291 = vmatprep.subr.mxu0 0.0
    %1292 = vmatpush1.msra.mxu0 0.0
    %1293 = vmatprep.subr.mxu0 0.0
    %1294 = vmatpush1.msra.mxu0 0.0
    %1295 = vmatprep.subr.mxu0 0.0
    %1296 = vmatpush1.msra.mxu0 0.0
    %1297 = vmatprep.subr.mxu0 0.0
    %1298 = vmatpush1.msra.mxu0 0.0
    %1299 = vmatprep.subr.mxu0 0.0
    %1300 = vmatpush1.msra.mxu0 0.0
    %1301 = vmatprep.subr.mxu0 0.0
    %1302 = vmatpush1.msra.mxu0 0.0
    %1303 = vmatprep.mubr.f32.mxu0 0.0
    %1304 = vmatmul.mubr.f32.gmra.mrb[0].mxu0 %v1216
    %v1305 = vpop.f32.mrb[0].mxu0
    %v1306 = vadd.f32 %v1208, %v1305
    %v1307 = vpop.f32.mrb[0].mxu0
    %v1308 = vadd.f32 %v1212, %v1307
    %1309 = vmatprep.mubr.f32.mxu0 0.0
    %1310 = vmatmul.mubr.f32.gmra.mrb[0].mxu0 %v1219
    %v1311 = vpop.f32.mrb[0].mxu0
    %v1312 = vadd.f32 %v1208, %v1311
    %v1313 = vpop.f32.mrb[0].mxu0
    %v1314 = vadd.f32 %v1212, %v1313
    %1315 = vmatprep.mubr.f32.mxu0 0.0
    %1316 = vmatmul.mubr.f32.gmra.mrb[0].mxu0 %v1222
    %v1317 = vpop.f32.mrb[0].mxu0
    %v1318 = vadd.f32 %v1208, %v1317
    %v1319 = vpop.f32.mrb[0].mxu0
    %v1320 = vadd.f32 %v1212, %v1319
    %1321 = vmatprep.mubr.f32.mxu0 0.0
    %1322 = vmatmul.mubr.f32.gmra.mrb[0].mxu0 %v1225
    %v1323 = vpop.f32.mrb[0].mxu0
    %v1324 = vadd.f32 %v1208, %v1323
    %v1325 = vpop.f32.mrb[0].mxu0
    %v1326 = vadd.f32 %v1212, %v1325
    %1327 = vmatprep.mubr.f32.mxu0 0.0
    %1328 = vmatmul.mubr.f32.gmra.mrb[0].mxu0 %v1228
    %v1329 = vpop.f32.mrb[0].mxu0
    %v1330 = vadd.f32 %v1208, %v1329
    %v1331 = vpop.f32.mrb[0].mxu0
    %v1332 = vadd.f32 %v1212, %v1331
    %1333 = vmatprep.mubr.f32.mxu0 0.0
    %1334 = vmatmul.mubr.f32.gmra.mrb[0].mxu0 %v1231
    %v1335 = vpop.f32.mrb[0].mxu0
    %v1336 = vadd.f32 %v1208, %v1335
    %v1337 = vpop.f32.mrb[0].mxu0
    %v1338 = vadd.f32 %v1212, %v1337
    %1339 = vmatprep.mubr.f32.mxu0 0.0
    %1340 = vmatmul.mubr.f32.gmra.mrb[0].mxu0 %v1234
    %v1341 = vpop.f32.mrb[0].mxu0
    %v1342 = vadd.f32 %v1208, %v1341
    %v1343 = vpop.f32.mrb[0].mxu0
    %v1344 = vadd.f32 %v1212, %v1343
    %1345 = vmatprep.mubr.f32.mxu0 0.0
    %1346 = vmatmul.mubr.f32.gmra.mrb[0].mxu0 %v1237
    %v1347 = vpop.f32.mrb[0].mxu0
    %v1348 = vadd.f32 %v1208, %v1347
    %v1349 = vpop.f32.mrb[0].mxu0
    %v1350 = vadd.f32 %v1212, %v1349
    %1351 = vdwg.mxu0
    %1352 = vst [vmem:[#allocation3] sm:$0xff] %v1306
    %1353 = vst [vmem:[#allocation3 + $0x8] sm:$0xff] %v1308
    %1354 = vst [vmem:[#allocation3 + $0x10] sm:$0xff] %v1312
    %1355 = vst [vmem:[#allocation3 + $0x18] sm:$0xff] %v1314
    %1356 = vst [vmem:[#allocation3 + $0x20] sm:$0xff] %v1318
    %1357 = vst [vmem:[#allocation3 + $0x28] sm:$0xff] %v1320
    %1358 = vst [vmem:[#allocation3 + $0x30] sm:$0xff] %v1324
    %1359 = vst [vmem:[#allocation3 + $0x38] sm:$0xff] %v1326
    %1360 = vst [vmem:[#allocation3 + $0x40] sm:$0xff] %v1330
    %1361 = vst [vmem:[#allocation3 + $0x48] sm:$0xff] %v1332
    %1362 = vst [vmem:[#allocation3 + $0x50] sm:$0xff] %v1336
    %1363 = vst [vmem:[#allocation3 + $0x58] sm:$0xff] %v1338
    %1364 = vst [vmem:[#allocation3 + $0x60] sm:$0xff] %v1342
    %1365 = vst [vmem:[#allocation3 + $0x68] sm:$0xff] %v1344
    %1366 = vst [vmem:[#allocation3 + $0x70] sm:$0xff] %v1348
    %1367 = vst [vmem:[#allocation3 + $0x78] sm:$0xff] %v1350
    %v1368 = vld [vmem:[#allocation3] sm:$0xff]
    %v1369 = vld [vmem:[#allocation3 + $0x8] sm:$0xff]
    %1370 = vmatprep.subr.mxu0 %v1179
    %1371 = vmatpush1.msra.mxu0 %v1178
    %1372 = vmatprep.subr.mxu0 %v1181
    %1373 = vmatpush1.msra.mxu0 %v1180
    %1374 = vmatprep.subr.mxu0 %v1183
    %1375 = vmatpush1.msra.mxu0 %v1182
    %1376 = vmatprep.subr.mxu0 %v1185
    %1377 = vmatpush1.msra.mxu0 %v1184
    %1378 = vmatprep.subr.mxu0 %v1187
    %1379 = vmatpush1.msra.mxu0 %v1186
    %1380 = vmatprep.subr.mxu0 %v1189
    %1381 = vmatpush1.msra.mxu0 %v1188
    %1382 = vmatprep.subr.mxu0 %v1191
    %1383 = vmatpush1.msra.mxu0 %v1190
    %1384 = vmatprep.subr.mxu0 %v1193
    %1385 = vmatpush1.msra.mxu0 %v1192
    %1386 = vmatprep.subr.mxu0 0.0
    %1387 = vmatpush1.msra.mxu0 0.0
    %1388 = vmatprep.subr.mxu0 0.0
    %1389 = vmatpush1.msra.mxu0 0.0
    %1390 = vmatprep.subr.mxu0 0.0
    %1391 = vmatpush1.msra.mxu0 0.0
    %1392 = vmatprep.subr.mxu0 0.0
    %1393 = vmatpush1.msra.mxu0 0.0
    %1394 = vmatprep.subr.mxu0 0.0
    %1395 = vmatpush1.msra.mxu0 0.0
    %1396 = vmatprep.subr.mxu0 0.0
    %1397 = vmatpush1.msra.mxu0 0.0
    %1398 = vmatprep.subr.mxu0 0.0
    %1399 = vmatpush1.msra.mxu0 0.0
    %1400 = vmatprep.subr.mxu0 0.0
    %1401 = vmatpush1.msra.mxu0 0.0
    %1402 = vmatprep.subr.mxu0 0.0
    %1403 = vmatpush1.msra.mxu0 0.0
    %1404 = vmatprep.subr.mxu0 0.0
    %1405 = vmatpush1.msra.mxu0 0.0
    %1406 = vmatprep.subr.mxu0 0.0
    %1407 = vmatpush1.msra.mxu0 0.0
    %1408 = vmatprep.subr.mxu0 0.0
    %1409 = vmatpush1.msra.mxu0 0.0
    %1410 = vmatprep.subr.mxu0 0.0
    %1411 = vmatpush1.msra.mxu0 0.0
    %1412 = vmatprep.subr.mxu0 0.0
    %1413 = vmatpush1.msra.mxu0 0.0
    %1414 = vmatprep.subr.mxu0 0.0
    %1415 = vmatpush1.msra.mxu0 0.0
    %1416 = vmatprep.subr.mxu0 0.0
    %1417 = vmatpush1.msra.mxu0 0.0
    %1418 = vmatprep.subr.mxu0 0.0
    %1419 = vmatpush1.msra.mxu0 0.0
    %1420 = vmatprep.subr.mxu0 0.0
    %1421 = vmatpush1.msra.mxu0 0.0
    %1422 = vmatprep.subr.mxu0 0.0
    %1423 = vmatpush1.msra.mxu0 0.0
    %1424 = vmatprep.subr.mxu0 0.0
    %1425 = vmatpush1.msra.mxu0 0.0
    %1426 = vmatprep.subr.mxu0 0.0
    %1427 = vmatpush1.msra.mxu0 0.0
    %1428 = vmatprep.subr.mxu0 0.0
    %1429 = vmatpush1.msra.mxu0 0.0
    %1430 = vmatprep.subr.mxu0 0.0
    %1431 = vmatpush1.msra.mxu0 0.0
    %1432 = vmatprep.subr.mxu0 0.0
    %1433 = vmatpush1.msra.mxu0 0.0
    %1434 = vmatprep.mubr.f32.mxu0 0.0
    %1435 = vmatmul.mubr.f32.gmra.mrb[0].mxu0 %v277
    %v1436 = vpop.f32.mrb[0].mxu0
    %v1437 = vadd.f32 0.0, %v1436
    %v1438 = vpop.f32.mrb[0].mxu0
    %v1439 = vadd.f32 0.0, %v1438
    %1440 = vdwg.mxu0
    %v1441 = vadd.f32 %v1368, %v1437
    %v1442 = vadd.f32 %v1369, %v1439
    %v1443 = vxor.u32 %v1441, 2147483648
    %v1444 = vxor.u32 %v1442, 2147483648
    %v1445 = vmul.f32 %v1443, 1.442695
    %v1446 = vpow.pop %v1445
    %v1447 = vmul.f32 %v1444, 1.442695
    %v1448 = vpow.pop %v1447
    %v1449 = vadd.f32 %v1446, 1.0
    %v1450 = vadd.f32 %v1448, 1.0
    %v1451 = vrcp.pop %v1449
    %v1452 = vmul.f32 1.0, %v1451
    %v1453 = vrcp.pop %v1450
    %v1454 = vmul.f32 1.0, %v1453
    %v1455 = vtanh.pop %v1442
    %v1456 = vmul.f32 %v1452, 0.0
    %1458 = vrot.lane.b32.xlu0 %v1455, 64
    %v1459 = vpop.permute.xlu0 %1458
    %v1461 = vmul.f32 %v1452, %v1459
    %1463 = vrot.lane.b32.xlu0 %v1461, 64
    %v1464 = vpop.permute.xlu0 %1463
    %v1466 = vadd.f32 %v1456, %v1464
    %v1467 = vtanh.pop %v1466
    %1469 = vrot.lane.b32.xlu0 %v1467, 64
    %v1470 = vpop.permute.xlu0 %1469
    %v1472 = vmul.f32 %v1454, %v1470
    %1473 = vst.msk [vmem:[#allocation2] sm:$0xff] %vm60, %v1472
    %v1474 = vld [vmem:[%s383] sm:$0xff]
    %v1475 = vld [vmem:[%s383 + $0x8] sm:$0xff]
    %v1477 = vsel %vm60, %v1472, 0
    %1479 = vmatprep.subr.mxu0 %v1179
    %1480 = vmatpush1.msra.mxu0 %v1178
    %1481 = vmatprep.subr.mxu0 %v1181
    %1482 = vmatpush1.msra.mxu0 %v1180
    %1483 = vmatprep.subr.mxu0 %v1183
    %1484 = vmatpush1.msra.mxu0 %v1182
    %1485 = vmatprep.subr.mxu0 %v1185
    %1486 = vmatpush1.msra.mxu0 %v1184
    %1487 = vmatprep.subr.mxu0 %v1187
    %1488 = vmatpush1.msra.mxu0 %v1186
    %1489 = vmatprep.subr.mxu0 %v1189
    %1490 = vmatpush1.msra.mxu0 %v1188
    %1491 = vmatprep.subr.mxu0 %v1191
    %1492 = vmatpush1.msra.mxu0 %v1190
    %1493 = vmatprep.subr.mxu0 %v1193
    %1494 = vmatpush1.msra.mxu0 %v1192
    %1495 = vmatprep.subr.mxu0 0.0
    %1496 = vmatpush1.msra.mxu0 0.0
    %1497 = vmatprep.subr.mxu0 0.0
    %1498 = vmatpush1.msra.mxu0 0.0
    %1499 = vmatprep.subr.mxu0 0.0
    %1500 = vmatpush1.msra.mxu0 0.0
    %1501 = vmatprep.subr.mxu0 0.0
    %1502 = vmatpush1.msra.mxu0 0.0
    %1503 = vmatprep.subr.mxu0 0.0
    %1504 = vmatpush1.msra.mxu0 0.0
    %1505 = vmatprep.subr.mxu0 0.0
    %1506 = vmatpush1.msra.mxu0 0.0
    %1507 = vmatprep.subr.mxu0 0.0
    %1508 = vmatpush1.msra.mxu0 0.0
    %1509 = vmatprep.subr.mxu0 0.0
    %1510 = vmatpush1.msra.mxu0 0.0
    %1511 = vmatprep.subr.mxu0 0.0
    %1512 = vmatpush1.msra.mxu0 0.0
    %1513 = vmatprep.subr.mxu0 0.0
    %1514 = vmatpush1.msra.mxu0 0.0
    %1515 = vmatprep.subr.mxu0 0.0
    %1516 = vmatpush1.msra.mxu0 0.0
    %1517 = vmatprep.subr.mxu0 0.0
    %1518 = vmatpush1.msra.mxu0 0.0
    %1519 = vmatprep.subr.mxu0 0.0
    %1520 = vmatpush1.msra.mxu0 0.0
    %1521 = vmatprep.subr.mxu0 0.0
    %1522 = vmatpush1.msra.mxu0 0.0
    %1523 = vmatprep.subr.mxu0 0.0
    %1524 = vmatpush1.msra.mxu0 0.0
    %1525 = vmatprep.subr.mxu0 0.0
    %1526 = vmatpush1.msra.mxu0 0.0
    %1527 = vmatprep.subr.mxu0 0.0
    %1528 = vmatpush1.msra.mxu0 0.0
    %1529 = vmatprep.subr.mxu0 0.0
    %1530 = vmatpush1.msra.mxu0 0.0
    %1531 = vmatprep.subr.mxu0 0.0
    %1532 = vmatpush1.msra.mxu0 0.0
    %1533 = vmatprep.subr.mxu0 0.0
    %1534 = vmatpush1.msra.mxu0 0.0
    %1535 = vmatprep.subr.mxu0 0.0
    %1536 = vmatpush1.msra.mxu0 0.0
    %1537 = vmatprep.subr.mxu0 0.0
    %1538 = vmatpush1.msra.mxu0 0.0
    %1539 = vmatprep.subr.mxu0 0.0
    %1540 = vmatpush1.msra.mxu0 0.0
    %1541 = vmatprep.subr.mxu0 0.0
    %1542 = vmatpush1.msra.mxu0 0.0
    %1543 = vmatprep.mubr.f32.mxu0 0.0
    %1544 = vmatmul.mubr.f32.gmra.mrb[0].mxu0 %v1477
    %v1545 = vpop.f32.mrb[0].mxu0
    %v1546 = vadd.f32 0.0, %v1545
    %v1547 = vpop.f32.mrb[0].mxu0
    %v1548 = vadd.f32 0.0, %v1547
    %1549 = vdwg.mxu0
    %v1550 = vadd.f32 %v1474, %v1546
    %v1551 = vadd.f32 %v1475, %v1548
    %v1552 = vxor.u32 %v1550, 2147483648
    %v1553 = vxor.u32 %v1551, 2147483648
    %v1554 = vmul.f32 %v1552, 1.442695
    %v1555 = vpow.pop %v1554
    %v1556 = vmul.f32 %v1553, 1.442695
    %v1557 = vpow.pop %v1556
    %v1558 = vadd.f32 %v1555, 1.0
    %v1559 = vadd.f32 %v1557, 1.0
    %v1560 = vrcp.pop %v1558
    %v1561 = vmul.f32 1.0, %v1560
    %v1562 = vrcp.pop %v1559
    %v1563 = vmul.f32 1.0, %v1562
    %v1564 = vtanh.pop %v1551
    %v1565 = vmul.f32 %v1561, %v1466
    %1567 = vrot.lane.b32.xlu0 %v1564, 64
    %v1568 = vpop.permute.xlu0 %1567
    %v1570 = vmul.f32 %v1561, %v1568
    %1572 = vrot.lane.b32.xlu0 %v1570, 64
    %v1573 = vpop.permute.xlu0 %1572
    %v1575 = vadd.f32 %v1565, %v1573
    %v1576 = vtanh.pop %v1575
    %1578 = vrot.lane.b32.xlu0 %v1576, 64
    %v1579 = vpop.permute.xlu0 %1578
    %v1581 = vmul.f32 %v1563, %v1579
    %1582 = vst.msk [vmem:[%s492] sm:$0xff] %vm60, %v1581
    %v1583 = vld [vmem:[%s494] sm:$0xff]
    %v1584 = vld [vmem:[%s494 + $0x8] sm:$0xff]
    %v1586 = vsel %vm60, %v1581, 0
    %1588 = vmatprep.subr.mxu0 %v1179
    %1589 = vmatpush1.msra.mxu0 %v1178
    %1590 = vmatprep.subr.mxu0 %v1181
    %1591 = vmatpush1.msra.mxu0 %v1180
    %1592 = vmatprep.subr.mxu0 %v1183
    %1593 = vmatpush1.msra.mxu0 %v1182
    %1594 = vmatprep.subr.mxu0 %v1185
    %1595 = vmatpush1.msra.mxu0 %v1184
    %1596 = vmatprep.subr.mxu0 %v1187
    %1597 = vmatpush1.msra.mxu0 %v1186
    %1598 = vmatprep.subr.mxu0 %v1189
    %1599 = vmatpush1.msra.mxu0 %v1188
    %1600 = vmatprep.subr.mxu0 %v1191
    %1601 = vmatpush1.msra.mxu0 %v1190
    %1602 = vmatprep.subr.mxu0 %v1193
    %1603 = vmatpush1.msra.mxu0 %v1192
    %1604 = vmatprep.subr.mxu0 0.0
    %1605 = vmatpush1.msra.mxu0 0.0
    %1606 = vmatprep.subr.mxu0 0.0
    %1607 = vmatpush1.msra.mxu0 0.0
    %1608 = vmatprep.subr.mxu0 0.0
    %1609 = vmatpush1.msra.mxu0 0.0
    %1610 = vmatprep.subr.mxu0 0.0
    %1611 = vmatpush1.msra.mxu0 0.0
    %1612 = vmatprep.subr.mxu0 0.0
    %1613 = vmatpush1.msra.mxu0 0.0
    %1614 = vmatprep.subr.mxu0 0.0
    %1615 = vmatpush1.msra.mxu0 0.0
    %1616 = vmatprep.subr.mxu0 0.0
    %1617 = vmatpush1.msra.mxu0 0.0
    %1618 = vmatprep.subr.mxu0 0.0
    %1619 = vmatpush1.msra.mxu0 0.0
    %1620 = vmatprep.subr.mxu0 0.0
    %1621 = vmatpush1.msra.mxu0 0.0
    %1622 = vmatprep.subr.mxu0 0.0
    %1623 = vmatpush1.msra.mxu0 0.0
    %1624 = vmatprep.subr.mxu0 0.0
    %1625 = vmatpush1.msra.mxu0 0.0
    %1626 = vmatprep.subr.mxu0 0.0
    %1627 = vmatpush1.msra.mxu0 0.0
    %1628 = vmatprep.subr.mxu0 0.0
    %1629 = vmatpush1.msra.mxu0 0.0
    %1630 = vmatprep.subr.mxu0 0.0
    %1631 = vmatpush1.msra.mxu0 0.0
    %1632 = vmatprep.subr.mxu0 0.0
    %1633 = vmatpush1.msra.mxu0 0.0
    %1634 = vmatprep.subr.mxu0 0.0
    %1635 = vmatpush1.msra.mxu0 0.0
    %1636 = vmatprep.subr.mxu0 0.0
    %1637 = vmatpush1.msra.mxu0 0.0
    %1638 = vmatprep.subr.mxu0 0.0
    %1639 = vmatpush1.msra.mxu0 0.0
    %1640 = vmatprep.subr.mxu0 0.0
    %1641 = vmatpush1.msra.mxu0 0.0
    %1642 = vmatprep.subr.mxu0 0.0
    %1643 = vmatpush1.msra.mxu0 0.0
    %1644 = vmatprep.subr.mxu0 0.0
    %1645 = vmatpush1.msra.mxu0 0.0
    %1646 = vmatprep.subr.mxu0 0.0
    %1647 = vmatpush1.msra.mxu0 0.0
    %1648 = vmatprep.subr.mxu0 0.0
    %1649 = vmatpush1.msra.mxu0 0.0
    %1650 = vmatprep.subr.mxu0 0.0
    %1651 = vmatpush1.msra.mxu0 0.0
    %1652 = vmatprep.mubr.f32.mxu0 0.0
    %1653 = vmatmul.mubr.f32.gmra.mrb[0].mxu0 %v1586
    %v1654 = vpop.f32.mrb[0].mxu0
    %v1655 = vadd.f32 0.0, %v1654
    %v1656 = vpop.f32.mrb[0].mxu0
    %v1657 = vadd.f32 0.0, %v1656
    %1658 = vdwg.mxu0
    %v1659 = vadd.f32 %v1583, %v1655
    %v1660 = vadd.f32 %v1584, %v1657
    %v1661 = vxor.u32 %v1659, 2147483648
    %v1662 = vxor.u32 %v1660, 2147483648
    %v1663 = vmul.f32 %v1661, 1.442695
    %v1664 = vpow.pop %v1663
    %v1665 = vmul.f32 %v1662, 1.442695
    %v1666 = vpow.pop %v1665
    %v1667 = vadd.f32 %v1664, 1.0
    %v1668 = vadd.f32 %v1666, 1.0
    %v1669 = vrcp.pop %v1667
    %v1670 = vmul.f32 1.0, %v1669
    %v1671 = vrcp.pop %v1668
    %v1672 = vmul.f32 1.0, %v1671
    %v1673 = vtanh.pop %v1660
    %v1674 = vmul.f32 %v1670, %v1575
    %1676 = vrot.lane.b32.xlu0 %v1673, 64
    %v1677 = vpop.permute.xlu0 %1676
    %v1679 = vmul.f32 %v1670, %v1677
    %1681 = vrot.lane.b32.xlu0 %v1679, 64
    %v1682 = vpop.permute.xlu0 %1681
    %v1684 = vadd.f32 %v1674, %v1682
    %v1685 = vtanh.pop %v1684
    %1687 = vrot.lane.b32.xlu0 %v1685, 64
    %v1688 = vpop.permute.xlu0 %1687
    %v1690 = vmul.f32 %v1672, %v1688
    %1691 = vst.msk [vmem:[%s603] sm:$0xff] %vm60, %v1690
    %v1692 = vld [vmem:[%s605] sm:$0xff]
    %v1693 = vld [vmem:[%s605 + $0x8] sm:$0xff]
    %v1695 = vsel %vm60, %v1690, 0
    %1697 = vmatprep.subr.mxu0 %v1179
    %1698 = vmatpush1.msra.mxu0 %v1178
    %1699 = vmatprep.subr.mxu0 %v1181
    %1700 = vmatpush1.msra.mxu0 %v1180
    %1701 = vmatprep.subr.mxu0 %v1183
    %1702 = vmatpush1.msra.mxu0 %v1182
    %1703 = vmatprep.subr.mxu0 %v1185
    %1704 = vmatpush1.msra.mxu0 %v1184
    %1705 = vmatprep.subr.mxu0 %v1187
    %1706 = vmatpush1.msra.mxu0 %v1186
    %1707 = vmatprep.subr.mxu0 %v1189
    %1708 = vmatpush1.msra.mxu0 %v1188
    %1709 = vmatprep.subr.mxu0 %v1191
    %1710 = vmatpush1.msra.mxu0 %v1190
    %1711 = vmatprep.subr.mxu0 %v1193
    %1712 = vmatpush1.msra.mxu0 %v1192
    %1713 = vmatprep.subr.mxu0 0.0
    %1714 = vmatpush1.msra.mxu0 0.0
    %1715 = vmatprep.subr.mxu0 0.0
    %1716 = vmatpush1.msra.mxu0 0.0
    %1717 = vmatprep.subr.mxu0 0.0
    %1718 = vmatpush1.msra.mxu0 0.0
    %1719 = vmatprep.subr.mxu0 0.0
    %1720 = vmatpush1.msra.mxu0 0.0
    %1721 = vmatprep.subr.mxu0 0.0
    %1722 = vmatpush1.msra.mxu0 0.0
    %1723 = vmatprep.subr.mxu0 0.0
    %1724 = vmatpush1.msra.mxu0 0.0
    %1725 = vmatprep.subr.mxu0 0.0
    %1726 = vmatpush1.msra.mxu0 0.0
    %1727 = vmatprep.subr.mxu0 0.0
    %1728 = vmatpush1.msra.mxu0 0.0
    %1729 = vmatprep.subr.mxu0 0.0
    %1730 = vmatpush1.msra.mxu0 0.0
    %1731 = vmatprep.subr.mxu0 0.0
    %1732 = vmatpush1.msra.mxu0 0.0
    %1733 = vmatprep.subr.mxu0 0.0
    %1734 = vmatpush1.msra.mxu0 0.0
    %1735 = vmatprep.subr.mxu0 0.0
    %1736 = vmatpush1.msra.mxu0 0.0
    %1737 = vmatprep.subr.mxu0 0.0
    %1738 = vmatpush1.msra.mxu0 0.0
    %1739 = vmatprep.subr.mxu0 0.0
    %1740 = vmatpush1.msra.mxu0 0.0
    %1741 = vmatprep.subr.mxu0 0.0
    %1742 = vmatpush1.msra.mxu0 0.0
    %1743 = vmatprep.subr.mxu0 0.0
    %1744 = vmatpush1.msra.mxu0 0.0
    %1745 = vmatprep.subr.mxu0 0.0
    %1746 = vmatpush1.msra.mxu0 0.0
    %1747 = vmatprep.subr.mxu0 0.0
    %1748 = vmatpush1.msra.mxu0 0.0
    %1749 = vmatprep.subr.mxu0 0.0
    %1750 = vmatpush1.msra.mxu0 0.0
    %1751 = vmatprep.subr.mxu0 0.0
    %1752 = vmatpush1.msra.mxu0 0.0
    %1753 = vmatprep.subr.mxu0 0.0
    %1754 = vmatpush1.msra.mxu0 0.0
    %1755 = vmatprep.subr.mxu0 0.0
    %1756 = vmatpush1.msra.mxu0 0.0
    %1757 = vmatprep.subr.mxu0 0.0
    %1758 = vmatpush1.msra.mxu0 0.0
    %1759 = vmatprep.subr.mxu0 0.0
    %1760 = vmatpush1.msra.mxu0 0.0
    %1761 = vmatprep.mubr.f32.mxu0 0.0
    %1762 = vmatmul.mubr.f32.gmra.mrb[0].mxu0 %v1695
    %v1763 = vpop.f32.mrb[0].mxu0
    %v1764 = vadd.f32 0.0, %v1763
    %v1765 = vpop.f32.mrb[0].mxu0
    %v1766 = vadd.f32 0.0, %v1765
    %1767 = vdwg.mxu0
    %v1768 = vadd.f32 %v1692, %v1764
    %v1769 = vadd.f32 %v1693, %v1766
    %v1770 = vxor.u32 %v1768, 2147483648
    %v1771 = vxor.u32 %v1769, 2147483648
    %v1772 = vmul.f32 %v1770, 1.442695
    %v1773 = vpow.pop %v1772
    %v1774 = vmul.f32 %v1771, 1.442695
    %v1775 = vpow.pop %v1774
    %v1776 = vadd.f32 %v1773, 1.0
    %v1777 = vadd.f32 %v1775, 1.0
    %v1778 = vrcp.pop %v1776
    %v1779 = vmul.f32 1.0, %v1778
    %v1780 = vrcp.pop %v1777
    %v1781 = vmul.f32 1.0, %v1780
    %v1782 = vtanh.pop %v1769
    %v1783 = vmul.f32 %v1779, %v1684
    %1785 = vrot.lane.b32.xlu0 %v1782, 64
    %v1786 = vpop.permute.xlu0 %1785
    %v1788 = vmul.f32 %v1779, %v1786
    %1790 = vrot.lane.b32.xlu0 %v1788, 64
    %v1791 = vpop.permute.xlu0 %1790
    %v1793 = vadd.f32 %v1783, %v1791
    %v1794 = vtanh.pop %v1793
    %1796 = vrot.lane.b32.xlu0 %v1794, 64
    %v1797 = vpop.permute.xlu0 %1796
    %v1799 = vmul.f32 %v1781, %v1797
    %1800 = vst.msk [vmem:[%s714] sm:$0xff] %vm60, %v1799
    %v1801 = vld [vmem:[%s716] sm:$0xff]
    %v1802 = vld [vmem:[%s716 + $0x8] sm:$0xff]
    %v1804 = vsel %vm60, %v1799, 0
    %1806 = vmatprep.subr.mxu0 %v1179
    %1807 = vmatpush1.msra.mxu0 %v1178
    %1808 = vmatprep.subr.mxu0 %v1181
    %1809 = vmatpush1.msra.mxu0 %v1180
    %1810 = vmatprep.subr.mxu0 %v1183
    %1811 = vmatpush1.msra.mxu0 %v1182
    %1812 = vmatprep.subr.mxu0 %v1185
    %1813 = vmatpush1.msra.mxu0 %v1184
    %1814 = vmatprep.subr.mxu0 %v1187
    %1815 = vmatpush1.msra.mxu0 %v1186
    %1816 = vmatprep.subr.mxu0 %v1189
    %1817 = vmatpush1.msra.mxu0 %v1188
    %1818 = vmatprep.subr.mxu0 %v1191
    %1819 = vmatpush1.msra.mxu0 %v1190
    %1820 = vmatprep.subr.mxu0 %v1193
    %1821 = vmatpush1.msra.mxu0 %v1192
    %1822 = vmatprep.subr.mxu0 0.0
    %1823 = vmatpush1.msra.mxu0 0.0
    %1824 = vmatprep.subr.mxu0 0.0
    %1825 = vmatpush1.msra.mxu0 0.0
    %1826 = vmatprep.subr.mxu0 0.0
    %1827 = vmatpush1.msra.mxu0 0.0
    %1828 = vmatprep.subr.mxu0 0.0
    %1829 = vmatpush1.msra.mxu0 0.0
    %1830 = vmatprep.subr.mxu0 0.0
    %1831 = vmatpush1.msra.mxu0 0.0
    %1832 = vmatprep.subr.mxu0 0.0
    %1833 = vmatpush1.msra.mxu0 0.0
    %1834 = vmatprep.subr.mxu0 0.0
    %1835 = vmatpush1.msra.mxu0 0.0
    %1836 = vmatprep.subr.mxu0 0.0
    %1837 = vmatpush1.msra.mxu0 0.0
    %1838 = vmatprep.subr.mxu0 0.0
    %1839 = vmatpush1.msra.mxu0 0.0
    %1840 = vmatprep.subr.mxu0 0.0
    %1841 = vmatpush1.msra.mxu0 0.0
    %1842 = vmatprep.subr.mxu0 0.0
    %1843 = vmatpush1.msra.mxu0 0.0
    %1844 = vmatprep.subr.mxu0 0.0
    %1845 = vmatpush1.msra.mxu0 0.0
    %1846 = vmatprep.subr.mxu0 0.0
    %1847 = vmatpush1.msra.mxu0 0.0
    %1848 = vmatprep.subr.mxu0 0.0
    %1849 = vmatpush1.msra.mxu0 0.0
    %1850 = vmatprep.subr.mxu0 0.0
    %1851 = vmatpush1.msra.mxu0 0.0
    %1852 = vmatprep.subr.mxu0 0.0
    %1853 = vmatpush1.msra.mxu0 0.0
    %1854 = vmatprep.subr.mxu0 0.0
    %1855 = vmatpush1.msra.mxu0 0.0
    %1856 = vmatprep.subr.mxu0 0.0
    %1857 = vmatpush1.msra.mxu0 0.0
    %1858 = vmatprep.subr.mxu0 0.0
    %1859 = vmatpush1.msra.mxu0 0.0
    %1860 = vmatprep.subr.mxu0 0.0
    %1861 = vmatpush1.msra.mxu0 0.0
    %1862 = vmatprep.subr.mxu0 0.0
    %1863 = vmatpush1.msra.mxu0 0.0
    %1864 = vmatprep.subr.mxu0 0.0
    %1865 = vmatpush1.msra.mxu0 0.0
    %1866 = vmatprep.subr.mxu0 0.0
    %1867 = vmatpush1.msra.mxu0 0.0
    %1868 = vmatprep.subr.mxu0 0.0
    %1869 = vmatpush1.msra.mxu0 0.0
    %1870 = vmatprep.mubr.f32.mxu0 0.0
    %1871 = vmatmul.mubr.f32.gmra.mrb[0].mxu0 %v1804
    %v1872 = vpop.f32.mrb[0].mxu0
    %v1873 = vadd.f32 0.0, %v1872
    %v1874 = vpop.f32.mrb[0].mxu0
    %v1875 = vadd.f32 0.0, %v1874
    %1876 = vdwg.mxu0
    %v1877 = vadd.f32 %v1801, %v1873
    %v1878 = vadd.f32 %v1802, %v1875
    %v1879 = vxor.u32 %v1877, 2147483648
    %v1880 = vxor.u32 %v1878, 2147483648
    %v1881 = vmul.f32 %v1879, 1.442695
    %v1882 = vpow.pop %v1881
    %v1883 = vmul.f32 %v1880, 1.442695
    %v1884 = vpow.pop %v1883
    %v1885 = vadd.f32 %v1882, 1.0
    %v1886 = vadd.f32 %v1884, 1.0
    %v1887 = vrcp.pop %v1885
    %v1888 = vmul.f32 1.0, %v1887
    %v1889 = vrcp.pop %v1886
    %v1890 = vmul.f32 1.0, %v1889
    %v1891 = vtanh.pop %v1878
    %v1892 = vmul.f32 %v1888, %v1793
    %1894 = vrot.lane.b32.xlu0 %v1891, 64
    %v1895 = vpop.permute.xlu0 %1894
    %v1897 = vmul.f32 %v1888, %v1895
    %1899 = vrot.lane.b32.xlu0 %v1897, 64
    %v1900 = vpop.permute.xlu0 %1899
    %v1902 = vadd.f32 %v1892, %v1900
    %v1903 = vtanh.pop %v1902
    %1905 = vrot.lane.b32.xlu0 %v1903, 64
    %v1906 = vpop.permute.xlu0 %1905
    %v1908 = vmul.f32 %v1890, %v1906
    %1909 = vst.msk [vmem:[%s825] sm:$0xff] %vm60, %v1908
    %v1910 = vld [vmem:[%s827] sm:$0xff]
    %v1911 = vld [vmem:[%s827 + $0x8] sm:$0xff]
    %v1913 = vsel %vm60, %v1908, 0
    %1915 = vmatprep.subr.mxu0 %v1179
    %1916 = vmatpush1.msra.mxu0 %v1178
    %1917 = vmatprep.subr.mxu0 %v1181
    %1918 = vmatpush1.msra.mxu0 %v1180
    %1919 = vmatprep.subr.mxu0 %v1183
    %1920 = vmatpush1.msra.mxu0 %v1182
    %1921 = vmatprep.subr.mxu0 %v1185
    %1922 = vmatpush1.msra.mxu0 %v1184
    %1923 = vmatprep.subr.mxu0 %v1187
    %1924 = vmatpush1.msra.mxu0 %v1186
    %1925 = vmatprep.subr.mxu0 %v1189
    %1926 = vmatpush1.msra.mxu0 %v1188
    %1927 = vmatprep.subr.mxu0 %v1191
    %1928 = vmatpush1.msra.mxu0 %v1190
    %1929 = vmatprep.subr.mxu0 %v1193
    %1930 = vmatpush1.msra.mxu0 %v1192
    %1931 = vmatprep.subr.mxu0 0.0
    %1932 = vmatpush1.msra.mxu0 0.0
    %1933 = vmatprep.subr.mxu0 0.0
    %1934 = vmatpush1.msra.mxu0 0.0
    %1935 = vmatprep.subr.mxu0 0.0
    %1936 = vmatpush1.msra.mxu0 0.0
    %1937 = vmatprep.subr.mxu0 0.0
    %1938 = vmatpush1.msra.mxu0 0.0
    %1939 = vmatprep.subr.mxu0 0.0
    %1940 = vmatpush1.msra.mxu0 0.0
    %1941 = vmatprep.subr.mxu0 0.0
    %1942 = vmatpush1.msra.mxu0 0.0
    %1943 = vmatprep.subr.mxu0 0.0
    %1944 = vmatpush1.msra.mxu0 0.0
    %1945 = vmatprep.subr.mxu0 0.0
    %1946 = vmatpush1.msra.mxu0 0.0
    %1947 = vmatprep.subr.mxu0 0.0
    %1948 = vmatpush1.msra.mxu0 0.0
    %1949 = vmatprep.subr.mxu0 0.0
    %1950 = vmatpush1.msra.mxu0 0.0
    %1951 = vmatprep.subr.mxu0 0.0
    %1952 = vmatpush1.msra.mxu0 0.0
    %1953 = vmatprep.subr.mxu0 0.0
    %1954 = vmatpush1.msra.mxu0 0.0
    %1955 = vmatprep.subr.mxu0 0.0
    %1956 = vmatpush1.msra.mxu0 0.0
    %1957 = vmatprep.subr.mxu0 0.0
    %1958 = vmatpush1.msra.mxu0 0.0
    %1959 = vmatprep.subr.mxu0 0.0
    %1960 = vmatpush1.msra.mxu0 0.0
    %1961 = vmatprep.subr.mxu0 0.0
    %1962 = vmatpush1.msra.mxu0 0.0
    %1963 = vmatprep.subr.mxu0 0.0
    %1964 = vmatpush1.msra.mxu0 0.0
    %1965 = vmatprep.subr.mxu0 0.0
    %1966 = vmatpush1.msra.mxu0 0.0
    %1967 = vmatprep.subr.mxu0 0.0
    %1968 = vmatpush1.msra.mxu0 0.0
    %1969 = vmatprep.subr.mxu0 0.0
    %1970 = vmatpush1.msra.mxu0 0.0
    %1971 = vmatprep.subr.mxu0 0.0
    %1972 = vmatpush1.msra.mxu0 0.0
    %1973 = vmatprep.subr.mxu0 0.0
    %1974 = vmatpush1.msra.mxu0 0.0
    %1975 = vmatprep.subr.mxu0 0.0
    %1976 = vmatpush1.msra.mxu0 0.0
    %1977 = vmatprep.subr.mxu0 0.0
    %1978 = vmatpush1.msra.mxu0 0.0
    %1979 = vmatprep.mubr.f32.mxu0 0.0
    %1980 = vmatmul.mubr.f32.gmra.mrb[0].mxu0 %v1913
    %v1981 = vpop.f32.mrb[0].mxu0
    %v1982 = vadd.f32 0.0, %v1981
    %v1983 = vpop.f32.mrb[0].mxu0
    %v1984 = vadd.f32 0.0, %v1983
    %1985 = vdwg.mxu0
    %v1986 = vadd.f32 %v1910, %v1982
    %v1987 = vadd.f32 %v1911, %v1984
    %v1988 = vxor.u32 %v1986, 2147483648
    %v1989 = vxor.u32 %v1987, 2147483648
    %v1990 = vmul.f32 %v1988, 1.442695
    %v1991 = vpow.pop %v1990
    %v1992 = vmul.f32 %v1989, 1.442695
    %v1993 = vpow.pop %v1992
    %v1994 = vadd.f32 %v1991, 1.0
    %v1995 = vadd.f32 %v1993, 1.0
    %v1996 = vrcp.pop %v1994
    %v1997 = vmul.f32 1.0, %v1996
    %v1998 = vrcp.pop %v1995
    %v1999 = vmul.f32 1.0, %v1998
    %v2000 = vtanh.pop %v1987
    %v2001 = vmul.f32 %v1997, %v1902
    %2003 = vrot.lane.b32.xlu0 %v2000, 64
    %v2004 = vpop.permute.xlu0 %2003
    %v2006 = vmul.f32 %v1997, %v2004
    %2008 = vrot.lane.b32.xlu0 %v2006, 64
    %v2009 = vpop.permute.xlu0 %2008
    %v2011 = vadd.f32 %v2001, %v2009
    %v2012 = vtanh.pop %v2011
    %2014 = vrot.lane.b32.xlu0 %v2012, 64
    %v2015 = vpop.permute.xlu0 %2014
    %v2017 = vmul.f32 %v1999, %v2015
    %2018 = vst.msk [vmem:[%s936] sm:$0xff] %vm60, %v2017
    %v2019 = vld [vmem:[%s938] sm:$0xff]
    %v2020 = vld [vmem:[%s938 + $0x8] sm:$0xff]
    %v2022 = vsel %vm60, %v2017, 0
    %2024 = vmatprep.subr.mxu0 %v1179
    %2025 = vmatpush1.msra.mxu0 %v1178
    %2026 = vmatprep.subr.mxu0 %v1181
    %2027 = vmatpush1.msra.mxu0 %v1180
    %2028 = vmatprep.subr.mxu0 %v1183
    %2029 = vmatpush1.msra.mxu0 %v1182
    %2030 = vmatprep.subr.mxu0 %v1185
    %2031 = vmatpush1.msra.mxu0 %v1184
    %2032 = vmatprep.subr.mxu0 %v1187
    %2033 = vmatpush1.msra.mxu0 %v1186
    %2034 = vmatprep.subr.mxu0 %v1189
    %2035 = vmatpush1.msra.mxu0 %v1188
    %2036 = vmatprep.subr.mxu0 %v1191
    %2037 = vmatpush1.msra.mxu0 %v1190
    %2038 = vmatprep.subr.mxu0 %v1193
    %2039 = vmatpush1.msra.mxu0 %v1192
    %2040 = vmatprep.subr.mxu0 0.0
    %2041 = vmatpush1.msra.mxu0 0.0
    %2042 = vmatprep.subr.mxu0 0.0
    %2043 = vmatpush1.msra.mxu0 0.0
    %2044 = vmatprep.subr.mxu0 0.0
    %2045 = vmatpush1.msra.mxu0 0.0
    %2046 = vmatprep.subr.mxu0 0.0
    %2047 = vmatpush1.msra.mxu0 0.0
    %2048 = vmatprep.subr.mxu0 0.0
    %2049 = vmatpush1.msra.mxu0 0.0
    %2050 = vmatprep.subr.mxu0 0.0
    %2051 = vmatpush1.msra.mxu0 0.0
    %2052 = vmatprep.subr.mxu0 0.0
    %2053 = vmatpush1.msra.mxu0 0.0
    %2054 = vmatprep.subr.mxu0 0.0
    %2055 = vmatpush1.msra.mxu0 0.0
    %2056 = vmatprep.subr.mxu0 0.0
    %2057 = vmatpush1.msra.mxu0 0.0
    %2058 = vmatprep.subr.mxu0 0.0
    %2059 = vmatpush1.msra.mxu0 0.0
    %2060 = vmatprep.subr.mxu0 0.0
    %2061 = vmatpush1.msra.mxu0 0.0
    %2062 = vmatprep.subr.mxu0 0.0
    %2063 = vmatpush1.msra.mxu0 0.0
    %2064 = vmatprep.subr.mxu0 0.0
    %2065 = vmatpush1.msra.mxu0 0.0
    %2066 = vmatprep.subr.mxu0 0.0
    %2067 = vmatpush1.msra.mxu0 0.0
    %2068 = vmatprep.subr.mxu0 0.0
    %2069 = vmatpush1.msra.mxu0 0.0
    %2070 = vmatprep.subr.mxu0 0.0
    %2071 = vmatpush1.msra.mxu0 0.0
    %2072 = vmatprep.subr.mxu0 0.0
    %2073 = vmatpush1.msra.mxu0 0.0
    %2074 = vmatprep.subr.mxu0 0.0
    %2075 = vmatpush1.msra.mxu0 0.0
    %2076 = vmatprep.subr.mxu0 0.0
    %2077 = vmatpush1.msra.mxu0 0.0
    %2078 = vmatprep.subr.mxu0 0.0
    %2079 = vmatpush1.msra.mxu0 0.0
    %2080 = vmatprep.subr.mxu0 0.0
    %2081 = vmatpush1.msra.mxu0 0.0
    %2082 = vmatprep.subr.mxu0 0.0
    %2083 = vmatpush1.msra.mxu0 0.0
    %2084 = vmatprep.subr.mxu0 0.0
    %2085 = vmatpush1.msra.mxu0 0.0
    %2086 = vmatprep.subr.mxu0 0.0
    %2087 = vmatpush1.msra.mxu0 0.0
    %2088 = vmatprep.mubr.f32.mxu0 0.0
    %2089 = vmatmul.mubr.f32.gmra.mrb[0].mxu0 %v2022
    %v2090 = vpop.f32.mrb[0].mxu0
    %v2091 = vadd.f32 0.0, %v2090
    %v2092 = vpop.f32.mrb[0].mxu0
    %v2093 = vadd.f32 0.0, %v2092
    %2094 = vdwg.mxu0
    %v2095 = vadd.f32 %v2019, %v2091
    %v2096 = vadd.f32 %v2020, %v2093
    %v2097 = vxor.u32 %v2095, 2147483648
    %v2098 = vxor.u32 %v2096, 2147483648
    %v2099 = vmul.f32 %v2097, 1.442695
    %v2100 = vpow.pop %v2099
    %v2101 = vmul.f32 %v2098, 1.442695
    %v2102 = vpow.pop %v2101
    %v2103 = vadd.f32 %v2100, 1.0
    %v2104 = vadd.f32 %v2102, 1.0
    %v2105 = vrcp.pop %v2103
    %v2106 = vmul.f32 1.0, %v2105
    %v2107 = vrcp.pop %v2104
    %v2108 = vmul.f32 1.0, %v2107
    %v2109 = vtanh.pop %v2096
    %v2110 = vmul.f32 %v2106, %v2011
    %2112 = vrot.lane.b32.xlu0 %v2109, 64
    %v2113 = vpop.permute.xlu0 %2112
    %v2115 = vmul.f32 %v2106, %v2113
    %2117 = vrot.lane.b32.xlu0 %v2115, 64
    %v2118 = vpop.permute.xlu0 %2117
    %v2120 = vadd.f32 %v2110, %v2118
    %v2121 = vtanh.pop %v2120
    %2123 = vrot.lane.b32.xlu0 %v2121, 64
    %v2124 = vpop.permute.xlu0 %2123
    %v2126 = vmul.f32 %v2108, %v2124
    %2127 = vst.msk [vmem:[%s1047] sm:$0xff] %vm60, %v2126
    %v2128 = vld [vmem:[%s1049] sm:$0xff]
    %v2129 = vld [vmem:[%s1049 + $0x8] sm:$0xff]
    %v2131 = vsel %vm60, %v2126, 0
    %2133 = vmatprep.subr.mxu0 %v1179
    %2134 = vmatpush1.msra.mxu0 %v1178
    %2135 = vmatprep.subr.mxu0 %v1181
    %2136 = vmatpush1.msra.mxu0 %v1180
    %2137 = vmatprep.subr.mxu0 %v1183
    %2138 = vmatpush1.msra.mxu0 %v1182
    %2139 = vmatprep.subr.mxu0 %v1185
    %2140 = vmatpush1.msra.mxu0 %v1184
    %2141 = vmatprep.subr.mxu0 %v1187
    %2142 = vmatpush1.msra.mxu0 %v1186
    %2143 = vmatprep.subr.mxu0 %v1189
    %2144 = vmatpush1.msra.mxu0 %v1188
    %2145 = vmatprep.subr.mxu0 %v1191
    %2146 = vmatpush1.msra.mxu0 %v1190
    %2147 = vmatprep.subr.mxu0 %v1193
    %2148 = vmatpush1.msra.mxu0 %v1192
    %2149 = vmatprep.subr.mxu0 0.0
    %2150 = vmatpush1.msra.mxu0 0.0
    %2151 = vmatprep.subr.mxu0 0.0
    %2152 = vmatpush1.msra.mxu0 0.0
    %2153 = vmatprep.subr.mxu0 0.0
    %2154 = vmatpush1.msra.mxu0 0.0
    %2155 = vmatprep.subr.mxu0 0.0
    %2156 = vmatpush1.msra.mxu0 0.0
    %2157 = vmatprep.subr.mxu0 0.0
    %2158 = vmatpush1.msra.mxu0 0.0
    %2159 = vmatprep.subr.mxu0 0.0
    %2160 = vmatpush1.msra.mxu0 0.0
    %2161 = vmatprep.subr.mxu0 0.0
    %2162 = vmatpush1.msra.mxu0 0.0
    %2163 = vmatprep.subr.mxu0 0.0
    %2164 = vmatpush1.msra.mxu0 0.0
    %2165 = vmatprep.subr.mxu0 0.0
    %2166 = vmatpush1.msra.mxu0 0.0
    %2167 = vmatprep.subr.mxu0 0.0
    %2168 = vmatpush1.msra.mxu0 0.0
    %2169 = vmatprep.subr.mxu0 0.0
    %2170 = vmatpush1.msra.mxu0 0.0
    %2171 = vmatprep.subr.mxu0 0.0
    %2172 = vmatpush1.msra.mxu0 0.0
    %2173 = vmatprep.subr.mxu0 0.0
    %2174 = vmatpush1.msra.mxu0 0.0
    %2175 = vmatprep.subr.mxu0 0.0
    %2176 = vmatpush1.msra.mxu0 0.0
    %2177 = vmatprep.subr.mxu0 0.0
    %2178 = vmatpush1.msra.mxu0 0.0
    %2179 = vmatprep.subr.mxu0 0.0
    %2180 = vmatpush1.msra.mxu0 0.0
    %2181 = vmatprep.subr.mxu0 0.0
    %2182 = vmatpush1.msra.mxu0 0.0
    %2183 = vmatprep.subr.mxu0 0.0
    %2184 = vmatpush1.msra.mxu0 0.0
    %2185 = vmatprep.subr.mxu0 0.0
    %2186 = vmatpush1.msra.mxu0 0.0
    %2187 = vmatprep.subr.mxu0 0.0
    %2188 = vmatpush1.msra.mxu0 0.0
    %2189 = vmatprep.subr.mxu0 0.0
    %2190 = vmatpush1.msra.mxu0 0.0
    %2191 = vmatprep.subr.mxu0 0.0
    %2192 = vmatpush1.msra.mxu0 0.0
    %2193 = vmatprep.subr.mxu0 0.0
    %2194 = vmatpush1.msra.mxu0 0.0
    %2195 = vmatprep.subr.mxu0 0.0
    %2196 = vmatpush1.msra.mxu0 0.0
    %2197 = vmatprep.mubr.f32.mxu0 0.0
    %2198 = vmatmul.mubr.f32.gmra.mrb[0].mxu0 %v2131
    %v2199 = vpop.f32.mrb[0].mxu0
    %v2200 = vadd.f32 0.0, %v2199
    %v2201 = vpop.f32.mrb[0].mxu0
    %v2202 = vadd.f32 0.0, %v2201
    %2203 = vdwg.mxu0
    %v2204 = vadd.f32 %v2128, %v2200
    %v2205 = vadd.f32 %v2129, %v2202
    %v2206 = vxor.u32 %v2204, 2147483648
    %v2207 = vxor.u32 %v2205, 2147483648
    %v2208 = vmul.f32 %v2206, 1.442695
    %v2209 = vpow.pop %v2208
    %v2210 = vmul.f32 %v2207, 1.442695
    %v2211 = vpow.pop %v2210
    %v2212 = vadd.f32 %v2209, 1.0
    %v2213 = vadd.f32 %v2211, 1.0
    %v2214 = vrcp.pop %v2212
    %v2215 = vmul.f32 1.0, %v2214
    %v2216 = vrcp.pop %v2213
    %v2217 = vmul.f32 1.0, %v2216
    %v2218 = vtanh.pop %v2205
    %v2219 = vmul.f32 %v2215, %v2120
    %2221 = vrot.lane.b32.xlu0 %v2218, 64
    %v2222 = vpop.permute.xlu0 %2221
    %v2224 = vmul.f32 %v2215, %v2222
    %2226 = vrot.lane.b32.xlu0 %v2224, 64
    %v2227 = vpop.permute.xlu0 %2226
    %v2229 = vadd.f32 %v2219, %v2227
    %v2230 = vtanh.pop %v2229
    %2232 = vrot.lane.b32.xlu0 %v2230, 64
    %v2233 = vpop.permute.xlu0 %2232
    %v2235 = vmul.f32 %v2217, %v2233
    %2236 = vst.msk [vmem:[%s1158] sm:$0xff] %vm60, %v2235
    %s2237 = scalar_lea.vmem [#allocation4], 256
    %v2238 = vld [vmem:[%s2237] sm:$0xff]
    %v2239 = vld [vmem:[%s2237 + $0x8] sm:$0xff]
    %v2240 = vld [vmem:[%s2237 + $0x10] sm:$0xff]
    %v2241 = vld [vmem:[%s2237 + $0x18] sm:$0xff]
    %v2242 = vld [vmem:[%s2237 + $0x20] sm:$0xff]
    %v2243 = vld [vmem:[%s2237 + $0x28] sm:$0xff]
    %v2244 = vld [vmem:[%s2237 + $0x30] sm:$0xff]
    %v2245 = vld [vmem:[%s2237 + $0x38] sm:$0xff]
    %v2246 = vld [vmem:[%s2237 + $0x40] sm:$0xff]
    %v2247 = vld [vmem:[%s2237 + $0x48] sm:$0xff]
    %v2248 = vld [vmem:[%s2237 + $0x50] sm:$0xff]
    %v2249 = vld [vmem:[%s2237 + $0x58] sm:$0xff]
    %v2250 = vld [vmem:[%s2237 + $0x60] sm:$0xff]
    %v2251 = vld [vmem:[%s2237 + $0x68] sm:$0xff]
    %v2252 = vld [vmem:[%s2237 + $0x70] sm:$0xff]
    %v2253 = vld [vmem:[%s2237 + $0x78] sm:$0xff]
    %s2254 = scalar_lea.vmem [#allocation7], 256
    %v2255 = vld [vmem:[%s2254] sm:$0xff]
    %v2256 = vld [vmem:[%s2254 + $0x8] sm:$0xff]
    %v2257 = vld [vmem:[%s2254 + $0x10] sm:$0xff]
    %v2258 = vld [vmem:[%s2254 + $0x18] sm:$0xff]
    %v2259 = vld [vmem:[%s2254 + $0x20] sm:$0xff]
    %v2260 = vld [vmem:[%s2254 + $0x28] sm:$0xff]
    %v2261 = vld [vmem:[%s2254 + $0x30] sm:$0xff]
    %v2262 = vld [vmem:[%s2254 + $0x38] sm:$0xff]
    %v2263 = vld [vmem:[%s2254 + $0x40] sm:$0xff]
    %v2264 = vld [vmem:[%s2254 + $0x48] sm:$0xff]
    %v2265 = vld [vmem:[%s2254 + $0x50] sm:$0xff]
    %v2266 = vld [vmem:[%s2254 + $0x58] sm:$0xff]
    %v2267 = vld [vmem:[%s2254 + $0x60] sm:$0xff]
    %v2268 = vld [vmem:[%s2254 + $0x68] sm:$0xff]
    %v2269 = vld [vmem:[%s2254 + $0x70] sm:$0xff]
    %v2270 = vld [vmem:[%s2254 + $0x78] sm:$0xff]
    %s2271 = scalar_lea.vmem %s3, 4
    %v2272 = vld [vmem:[%s2271] sm:$0x3]
    %v2273 = vld [vmem:[#allocation2] sm:$0xff]
    %v2274 = vld [vmem:[#allocation2 + $0x8] sm:$0xff]
    %v2275 = vld [vmem:[#allocation2 + $0x10] sm:$0xff]
    %v2276 = vld [vmem:[#allocation2 + $0x18] sm:$0xff]
    %v2277 = vld [vmem:[#allocation2 + $0x20] sm:$0xff]
    %v2278 = vld [vmem:[#allocation2 + $0x28] sm:$0xff]
    %v2279 = vld [vmem:[#allocation2 + $0x30] sm:$0xff]
    %v2280 = vld [vmem:[#allocation2 + $0x38] sm:$0xff]
    %v2282 = vlaneseq
    %v2283 = vshrl.u32 %v2282, 7
    %v2284 = vsub.s32 0, %v2283
    %v2285 = vrot.slane %v2272, %v2284
    %v2286 = vlaneseq
    %v2287 = vshrl.u32 %v2286, 7
    %v2288 = vsub.s32 1, %v2287
    %v2289 = vrot.slane %v2272, %v2288
    %v2293 = vsel %vm60, %v2273, 0
    %v2296 = vsel %vm60, %v2274, 0
    %v2299 = vsel %vm60, %v2275, 0
    %v2302 = vsel %vm60, %v2276, 0
    %v2305 = vsel %vm60, %v2277, 0
    %v2308 = vsel %vm60, %v2278, 0
    %v2311 = vsel %vm60, %v2279, 0
    %v2314 = vsel %vm60, %v2280, 0
    %2316 = vmatprep.subr.mxu0 %v2239
    %2317 = vmatpush1.msra.mxu0 %v2238
    %2318 = vmatprep.subr.mxu0 %v2241
    %2319 = vmatpush1.msra.mxu0 %v2240
    %2320 = vmatprep.subr.mxu0 %v2243
    %2321 = vmatpush1.msra.mxu0 %v2242
    %2322 = vmatprep.subr.mxu0 %v2245
    %2323 = vmatpush1.msra.mxu0 %v2244
    %2324 = vmatprep.subr.mxu0 %v2247
    %2325 = vmatpush1.msra.mxu0 %v2246
    %2326 = vmatprep.subr.mxu0 %v2249
    %2327 = vmatpush1.msra.mxu0 %v2248
    %2328 = vmatprep.subr.mxu0 %v2251
    %2329 = vmatpush1.msra.mxu0 %v2250
    %2330 = vmatprep.subr.mxu0 %v2253
    %2331 = vmatpush1.msra.mxu0 %v2252
    %2332 = vmatprep.subr.mxu0 0.0
    %2333 = vmatpush1.msra.mxu0 0.0
    %2334 = vmatprep.subr.mxu0 0.0
    %2335 = vmatpush1.msra.mxu0 0.0
    %2336 = vmatprep.subr.mxu0 0.0
    %2337 = vmatpush1.msra.mxu0 0.0
    %2338 = vmatprep.subr.mxu0 0.0
    %2339 = vmatpush1.msra.mxu0 0.0
    %2340 = vmatprep.subr.mxu0 0.0
    %2341 = vmatpush1.msra.mxu0 0.0
    %2342 = vmatprep.subr.mxu0 0.0
    %2343 = vmatpush1.msra.mxu0 0.0
    %2344 = vmatprep.subr.mxu0 0.0
    %2345 = vmatpush1.msra.mxu0 0.0
    %2346 = vmatprep.subr.mxu0 0.0
    %2347 = vmatpush1.msra.mxu0 0.0
    %2348 = vmatprep.subr.mxu0 0.0
    %2349 = vmatpush1.msra.mxu0 0.0
    %2350 = vmatprep.subr.mxu0 0.0
    %2351 = vmatpush1.msra.mxu0 0.0
    %2352 = vmatprep.subr.mxu0 0.0
    %2353 = vmatpush1.msra.mxu0 0.0
    %2354 = vmatprep.subr.mxu0 0.0
    %2355 = vmatpush1.msra.mxu0 0.0
    %2356 = vmatprep.subr.mxu0 0.0
    %2357 = vmatpush1.msra.mxu0 0.0
    %2358 = vmatprep.subr.mxu0 0.0
    %2359 = vmatpush1.msra.mxu0 0.0
    %2360 = vmatprep.subr.mxu0 0.0
    %2361 = vmatpush1.msra.mxu0 0.0
    %2362 = vmatprep.subr.mxu0 0.0
    %2363 = vmatpush1.msra.mxu0 0.0
    %2364 = vmatprep.subr.mxu0 0.0
    %2365 = vmatpush1.msra.mxu0 0.0
    %2366 = vmatprep.subr.mxu0 0.0
    %2367 = vmatpush1.msra.mxu0 0.0
    %2368 = vmatprep.subr.mxu0 0.0
    %2369 = vmatpush1.msra.mxu0 0.0
    %2370 = vmatprep.subr.mxu0 0.0
    %2371 = vmatpush1.msra.mxu0 0.0
    %2372 = vmatprep.subr.mxu0 0.0
    %2373 = vmatpush1.msra.mxu0 0.0
    %2374 = vmatprep.subr.mxu0 0.0
    %2375 = vmatpush1.msra.mxu0 0.0
    %2376 = vmatprep.subr.mxu0 0.0
    %2377 = vmatpush1.msra.mxu0 0.0
    %2378 = vmatprep.subr.mxu0 0.0
    %2379 = vmatpush1.msra.mxu0 0.0
    %2380 = vmatprep.mubr.f32.mxu0 0.0
    %2381 = vmatmul.mubr.f32.gmra.mrb[0].mxu0 %v2293
    %v2382 = vpop.f32.mrb[0].mxu0
    %v2383 = vadd.f32 %v2285, %v2382
    %v2384 = vpop.f32.mrb[0].mxu0
    %v2385 = vadd.f32 %v2289, %v2384
    %2386 = vmatprep.mubr.f32.mxu0 0.0
    %2387 = vmatmul.mubr.f32.gmra.mrb[0].mxu0 %v2296
    %v2388 = vpop.f32.mrb[0].mxu0
    %v2389 = vadd.f32 %v2285, %v2388
    %v2390 = vpop.f32.mrb[0].mxu0
    %v2391 = vadd.f32 %v2289, %v2390
    %2392 = vmatprep.mubr.f32.mxu0 0.0
    %2393 = vmatmul.mubr.f32.gmra.mrb[0].mxu0 %v2299
    %v2394 = vpop.f32.mrb[0].mxu0
    %v2395 = vadd.f32 %v2285, %v2394
    %v2396 = vpop.f32.mrb[0].mxu0
    %v2397 = vadd.f32 %v2289, %v2396
    %2398 = vmatprep.mubr.f32.mxu0 0.0
    %2399 = vmatmul.mubr.f32.gmra.mrb[0].mxu0 %v2302
    %v2400 = vpop.f32.mrb[0].mxu0
    %v2401 = vadd.f32 %v2285, %v2400
    %v2402 = vpop.f32.mrb[0].mxu0
    %v2403 = vadd.f32 %v2289, %v2402
    %2404 = vmatprep.mubr.f32.mxu0 0.0
    %2405 = vmatmul.mubr.f32.gmra.mrb[0].mxu0 %v2305
    %v2406 = vpop.f32.mrb[0].mxu0
    %v2407 = vadd.f32 %v2285, %v2406
    %v2408 = vpop.f32.mrb[0].mxu0
    %v2409 = vadd.f32 %v2289, %v2408
    %2410 = vmatprep.mubr.f32.mxu0 0.0
    %2411 = vmatmul.mubr.f32.gmra.mrb[0].mxu0 %v2308
    %v2412 = vpop.f32.mrb[0].mxu0
    %v2413 = vadd.f32 %v2285, %v2412
    %v2414 = vpop.f32.mrb[0].mxu0
    %v2415 = vadd.f32 %v2289, %v2414
    %2416 = vmatprep.mubr.f32.mxu0 0.0
    %2417 = vmatmul.mubr.f32.gmra.mrb[0].mxu0 %v2311
    %v2418 = vpop.f32.mrb[0].mxu0
    %v2419 = vadd.f32 %v2285, %v2418
    %v2420 = vpop.f32.mrb[0].mxu0
    %v2421 = vadd.f32 %v2289, %v2420
    %2422 = vmatprep.mubr.f32.mxu0 0.0
    %2423 = vmatmul.mubr.f32.gmra.mrb[0].mxu0 %v2314
    %v2424 = vpop.f32.mrb[0].mxu0
    %v2425 = vadd.f32 %v2285, %v2424
    %v2426 = vpop.f32.mrb[0].mxu0
    %v2427 = vadd.f32 %v2289, %v2426
    %2428 = vdwg.mxu0
    %2429 = vst [vmem:[#allocation3] sm:$0xff] %v2383
    %2430 = vst [vmem:[#allocation3 + $0x8] sm:$0xff] %v2385
    %2431 = vst [vmem:[#allocation3 + $0x10] sm:$0xff] %v2389
    %2432 = vst [vmem:[#allocation3 + $0x18] sm:$0xff] %v2391
    %2433 = vst [vmem:[#allocation3 + $0x20] sm:$0xff] %v2395
    %2434 = vst [vmem:[#allocation3 + $0x28] sm:$0xff] %v2397
    %2435 = vst [vmem:[#allocation3 + $0x30] sm:$0xff] %v2401
    %2436 = vst [vmem:[#allocation3 + $0x38] sm:$0xff] %v2403
    %2437 = vst [vmem:[#allocation3 + $0x40] sm:$0xff] %v2407
    %2438 = vst [vmem:[#allocation3 + $0x48] sm:$0xff] %v2409
    %2439 = vst [vmem:[#allocation3 + $0x50] sm:$0xff] %v2413
    %2440 = vst [vmem:[#allocation3 + $0x58] sm:$0xff] %v2415
    %2441 = vst [vmem:[#allocation3 + $0x60] sm:$0xff] %v2419
    %2442 = vst [vmem:[#allocation3 + $0x68] sm:$0xff] %v2421
    %2443 = vst [vmem:[#allocation3 + $0x70] sm:$0xff] %v2425
    %2444 = vst [vmem:[#allocation3 + $0x78] sm:$0xff] %v2427
    %v2445 = vld [vmem:[#allocation3] sm:$0xff]
    %v2446 = vld [vmem:[#allocation3 + $0x8] sm:$0xff]
    %2447 = vmatprep.subr.mxu0 %v2256
    %2448 = vmatpush1.msra.mxu0 %v2255
    %2449 = vmatprep.subr.mxu0 %v2258
    %2450 = vmatpush1.msra.mxu0 %v2257
    %2451 = vmatprep.subr.mxu0 %v2260
    %2452 = vmatpush1.msra.mxu0 %v2259
    %2453 = vmatprep.subr.mxu0 %v2262
    %2454 = vmatpush1.msra.mxu0 %v2261
    %2455 = vmatprep.subr.mxu0 %v2264
    %2456 = vmatpush1.msra.mxu0 %v2263
    %2457 = vmatprep.subr.mxu0 %v2266
    %2458 = vmatpush1.msra.mxu0 %v2265
    %2459 = vmatprep.subr.mxu0 %v2268
    %2460 = vmatpush1.msra.mxu0 %v2267
    %2461 = vmatprep.subr.mxu0 %v2270
    %2462 = vmatpush1.msra.mxu0 %v2269
    %2463 = vmatprep.subr.mxu0 0.0
    %2464 = vmatpush1.msra.mxu0 0.0
    %2465 = vmatprep.subr.mxu0 0.0
    %2466 = vmatpush1.msra.mxu0 0.0
    %2467 = vmatprep.subr.mxu0 0.0
    %2468 = vmatpush1.msra.mxu0 0.0
    %2469 = vmatprep.subr.mxu0 0.0
    %2470 = vmatpush1.msra.mxu0 0.0
    %2471 = vmatprep.subr.mxu0 0.0
    %2472 = vmatpush1.msra.mxu0 0.0
    %2473 = vmatprep.subr.mxu0 0.0
    %2474 = vmatpush1.msra.mxu0 0.0
    %2475 = vmatprep.subr.mxu0 0.0
    %2476 = vmatpush1.msra.mxu0 0.0
    %2477 = vmatprep.subr.mxu0 0.0
    %2478 = vmatpush1.msra.mxu0 0.0
    %2479 = vmatprep.subr.mxu0 0.0
    %2480 = vmatpush1.msra.mxu0 0.0
    %2481 = vmatprep.subr.mxu0 0.0
    %2482 = vmatpush1.msra.mxu0 0.0
    %2483 = vmatprep.subr.mxu0 0.0
    %2484 = vmatpush1.msra.mxu0 0.0
    %2485 = vmatprep.subr.mxu0 0.0
    %2486 = vmatpush1.msra.mxu0 0.0
    %2487 = vmatprep.subr.mxu0 0.0
    %2488 = vmatpush1.msra.mxu0 0.0
    %2489 = vmatprep.subr.mxu0 0.0
    %2490 = vmatpush1.msra.mxu0 0.0
    %2491 = vmatprep.subr.mxu0 0.0
    %2492 = vmatpush1.msra.mxu0 0.0
    %2493 = vmatprep.subr.mxu0 0.0
    %2494 = vmatpush1.msra.mxu0 0.0
    %2495 = vmatprep.subr.mxu0 0.0
    %2496 = vmatpush1.msra.mxu0 0.0
    %2497 = vmatprep.subr.mxu0 0.0
    %2498 = vmatpush1.msra.mxu0 0.0
    %2499 = vmatprep.subr.mxu0 0.0
    %2500 = vmatpush1.msra.mxu0 0.0
    %2501 = vmatprep.subr.mxu0 0.0
    %2502 = vmatpush1.msra.mxu0 0.0
    %2503 = vmatprep.subr.mxu0 0.0
    %2504 = vmatpush1.msra.mxu0 0.0
    %2505 = vmatprep.subr.mxu0 0.0
    %2506 = vmatpush1.msra.mxu0 0.0
    %2507 = vmatprep.subr.mxu0 0.0
    %2508 = vmatpush1.msra.mxu0 0.0
    %2509 = vmatprep.subr.mxu0 0.0
    %2510 = vmatpush1.msra.mxu0 0.0
    %2511 = vmatprep.mubr.f32.mxu0 0.0
    %2512 = vmatmul.mubr.f32.gmra.mrb[0].mxu0 %v277
    %v2513 = vpop.f32.mrb[0].mxu0
    %v2514 = vadd.f32 0.0, %v2513
    %v2515 = vpop.f32.mrb[0].mxu0
    %v2516 = vadd.f32 0.0, %v2515
    %2517 = vdwg.mxu0
    %v2518 = vadd.f32 %v2445, %v2514
    %v2519 = vadd.f32 %v2446, %v2516
    %v2520 = vxor.u32 %v2518, 2147483648
    %v2521 = vxor.u32 %v2519, 2147483648
    %v2522 = vmul.f32 %v2520, 1.442695
    %v2523 = vpow.pop %v2522
    %v2524 = vmul.f32 %v2521, 1.442695
    %v2525 = vpow.pop %v2524
    %v2526 = vadd.f32 %v2523, 1.0
    %v2527 = vadd.f32 %v2525, 1.0
    %v2528 = vrcp.pop %v2526
    %v2529 = vmul.f32 1.0, %v2528
    %v2530 = vrcp.pop %v2527
    %v2531 = vmul.f32 1.0, %v2530
    %v2532 = vtanh.pop %v2519
    %v2533 = vmul.f32 %v2529, 0.0
    %2535 = vrot.lane.b32.xlu0 %v2532, 64
    %v2536 = vpop.permute.xlu0 %2535
    %v2538 = vmul.f32 %v2529, %v2536
    %2540 = vrot.lane.b32.xlu0 %v2538, 64
    %v2541 = vpop.permute.xlu0 %2540
    %v2543 = vadd.f32 %v2533, %v2541
    %v2544 = vtanh.pop %v2543
    %2546 = vrot.lane.b32.xlu0 %v2544, 64
    %v2547 = vpop.permute.xlu0 %2546
    %v2549 = vmul.f32 %v2531, %v2547
    %2550 = vst.msk [vmem:[#allocation2] sm:$0xff] %vm60, %v2549
    %v2551 = vld [vmem:[%s383] sm:$0xff]
    %v2552 = vld [vmem:[%s383 + $0x8] sm:$0xff]
    %v2554 = vsel %vm60, %v2549, 0
    %2556 = vmatprep.subr.mxu0 %v2256
    %2557 = vmatpush1.msra.mxu0 %v2255
    %2558 = vmatprep.subr.mxu0 %v2258
    %2559 = vmatpush1.msra.mxu0 %v2257
    %2560 = vmatprep.subr.mxu0 %v2260
    %2561 = vmatpush1.msra.mxu0 %v2259
    %2562 = vmatprep.subr.mxu0 %v2262
    %2563 = vmatpush1.msra.mxu0 %v2261
    %2564 = vmatprep.subr.mxu0 %v2264
    %2565 = vmatpush1.msra.mxu0 %v2263
    %2566 = vmatprep.subr.mxu0 %v2266
    %2567 = vmatpush1.msra.mxu0 %v2265
    %2568 = vmatprep.subr.mxu0 %v2268
    %2569 = vmatpush1.msra.mxu0 %v2267
    %2570 = vmatprep.subr.mxu0 %v2270
    %2571 = vmatpush1.msra.mxu0 %v2269
    %2572 = vmatprep.subr.mxu0 0.0
    %2573 = vmatpush1.msra.mxu0 0.0
    %2574 = vmatprep.subr.mxu0 0.0
    %2575 = vmatpush1.msra.mxu0 0.0
    %2576 = vmatprep.subr.mxu0 0.0
    %2577 = vmatpush1.msra.mxu0 0.0
    %2578 = vmatprep.subr.mxu0 0.0
    %2579 = vmatpush1.msra.mxu0 0.0
    %2580 = vmatprep.subr.mxu0 0.0
    %2581 = vmatpush1.msra.mxu0 0.0
    %2582 = vmatprep.subr.mxu0 0.0
    %2583 = vmatpush1.msra.mxu0 0.0
    %2584 = vmatprep.subr.mxu0 0.0
    %2585 = vmatpush1.msra.mxu0 0.0
    %2586 = vmatprep.subr.mxu0 0.0
    %2587 = vmatpush1.msra.mxu0 0.0
    %2588 = vmatprep.subr.mxu0 0.0
    %2589 = vmatpush1.msra.mxu0 0.0
    %2590 = vmatprep.subr.mxu0 0.0
    %2591 = vmatpush1.msra.mxu0 0.0
    %2592 = vmatprep.subr.mxu0 0.0
    %2593 = vmatpush1.msra.mxu0 0.0
    %2594 = vmatprep.subr.mxu0 0.0
    %2595 = vmatpush1.msra.mxu0 0.0
    %2596 = vmatprep.subr.mxu0 0.0
    %2597 = vmatpush1.msra.mxu0 0.0
    %2598 = vmatprep.subr.mxu0 0.0
    %2599 = vmatpush1.msra.mxu0 0.0
    %2600 = vmatprep.subr.mxu0 0.0
    %2601 = vmatpush1.msra.mxu0 0.0
    %2602 = vmatprep.subr.mxu0 0.0
    %2603 = vmatpush1.msra.mxu0 0.0
    %2604 = vmatprep.subr.mxu0 0.0
    %2605 = vmatpush1.msra.mxu0 0.0
    %2606 = vmatprep.subr.mxu0 0.0
    %2607 = vmatpush1.msra.mxu0 0.0
    %2608 = vmatprep.subr.mxu0 0.0
    %2609 = vmatpush1.msra.mxu0 0.0
    %2610 = vmatprep.subr.mxu0 0.0
    %2611 = vmatpush1.msra.mxu0 0.0
    %2612 = vmatprep.subr.mxu0 0.0
    %2613 = vmatpush1.msra.mxu0 0.0
    %2614 = vmatprep.subr.mxu0 0.0
    %2615 = vmatpush1.msra.mxu0 0.0
    %2616 = vmatprep.subr.mxu0 0.0
    %2617 = vmatpush1.msra.mxu0 0.0
    %2618 = vmatprep.subr.mxu0 0.0
    %2619 = vmatpush1.msra.mxu0 0.0
    %2620 = vmatprep.mubr.f32.mxu0 0.0
    %2621 = vmatmul.mubr.f32.gmra.mrb[0].mxu0 %v2554
    %v2622 = vpop.f32.mrb[0].mxu0
    %v2623 = vadd.f32 0.0, %v2622
    %v2624 = vpop.f32.mrb[0].mxu0
    %v2625 = vadd.f32 0.0, %v2624
    %2626 = vdwg.mxu0
    %v2627 = vadd.f32 %v2551, %v2623
    %v2628 = vadd.f32 %v2552, %v2625
    %v2629 = vxor.u32 %v2627, 2147483648
    %v2630 = vxor.u32 %v2628, 2147483648
    %v2631 = vmul.f32 %v2629, 1.442695
    %v2632 = vpow.pop %v2631
    %v2633 = vmul.f32 %v2630, 1.442695
    %v2634 = vpow.pop %v2633
    %v2635 = vadd.f32 %v2632, 1.0
    %v2636 = vadd.f32 %v2634, 1.0
    %v2637 = vrcp.pop %v2635
    %v2638 = vmul.f32 1.0, %v2637
    %v2639 = vrcp.pop %v2636
    %v2640 = vmul.f32 1.0, %v2639
    %v2641 = vtanh.pop %v2628
    %v2642 = vmul.f32 %v2638, %v2543
    %2644 = vrot.lane.b32.xlu0 %v2641, 64
    %v2645 = vpop.permute.xlu0 %2644
    %v2647 = vmul.f32 %v2638, %v2645
    %2649 = vrot.lane.b32.xlu0 %v2647, 64
    %v2650 = vpop.permute.xlu0 %2649
    %v2652 = vadd.f32 %v2642, %v2650
    %v2653 = vtanh.pop %v2652
    %2655 = vrot.lane.b32.xlu0 %v2653, 64
    %v2656 = vpop.permute.xlu0 %2655
    %v2658 = vmul.f32 %v2640, %v2656
    %2659 = vst.msk [vmem:[%s492] sm:$0xff] %vm60, %v2658
    %v2660 = vld [vmem:[%s494] sm:$0xff]
    %v2661 = vld [vmem:[%s494 + $0x8] sm:$0xff]
    %v2663 = vsel %vm60, %v2658, 0
    %2665 = vmatprep.subr.mxu0 %v2256
    %2666 = vmatpush1.msra.mxu0 %v2255
    %2667 = vmatprep.subr.mxu0 %v2258
    %2668 = vmatpush1.msra.mxu0 %v2257
    %2669 = vmatprep.subr.mxu0 %v2260
    %2670 = vmatpush1.msra.mxu0 %v2259
    %2671 = vmatprep.subr.mxu0 %v2262
    %2672 = vmatpush1.msra.mxu0 %v2261
    %2673 = vmatprep.subr.mxu0 %v2264
    %2674 = vmatpush1.msra.mxu0 %v2263
    %2675 = vmatprep.subr.mxu0 %v2266
    %2676 = vmatpush1.msra.mxu0 %v2265
    %2677 = vmatprep.subr.mxu0 %v2268
    %2678 = vmatpush1.msra.mxu0 %v2267
    %2679 = vmatprep.subr.mxu0 %v2270
    %2680 = vmatpush1.msra.mxu0 %v2269
    %2681 = vmatprep.subr.mxu0 0.0
    %2682 = vmatpush1.msra.mxu0 0.0
    %2683 = vmatprep.subr.mxu0 0.0
    %2684 = vmatpush1.msra.mxu0 0.0
    %2685 = vmatprep.subr.mxu0 0.0
    %2686 = vmatpush1.msra.mxu0 0.0
    %2687 = vmatprep.subr.mxu0 0.0
    %2688 = vmatpush1.msra.mxu0 0.0
    %2689 = vmatprep.subr.mxu0 0.0
    %2690 = vmatpush1.msra.mxu0 0.0
    %2691 = vmatprep.subr.mxu0 0.0
    %2692 = vmatpush1.msra.mxu0 0.0
    %2693 = vmatprep.subr.mxu0 0.0
    %2694 = vmatpush1.msra.mxu0 0.0
    %2695 = vmatprep.subr.mxu0 0.0
    %2696 = vmatpush1.msra.mxu0 0.0
    %2697 = vmatprep.subr.mxu0 0.0
    %2698 = vmatpush1.msra.mxu0 0.0
    %2699 = vmatprep.subr.mxu0 0.0
    %2700 = vmatpush1.msra.mxu0 0.0
    %2701 = vmatprep.subr.mxu0 0.0
    %2702 = vmatpush1.msra.mxu0 0.0
    %2703 = vmatprep.subr.mxu0 0.0
    %2704 = vmatpush1.msra.mxu0 0.0
    %2705 = vmatprep.subr.mxu0 0.0
    %2706 = vmatpush1.msra.mxu0 0.0
    %2707 = vmatprep.subr.mxu0 0.0
    %2708 = vmatpush1.msra.mxu0 0.0
    %2709 = vmatprep.subr.mxu0 0.0
    %2710 = vmatpush1.msra.mxu0 0.0
    %2711 = vmatprep.subr.mxu0 0.0
    %2712 = vmatpush1.msra.mxu0 0.0
    %2713 = vmatprep.subr.mxu0 0.0
    %2714 = vmatpush1.msra.mxu0 0.0
    %2715 = vmatprep.subr.mxu0 0.0
    %2716 = vmatpush1.msra.mxu0 0.0
    %2717 = vmatprep.subr.mxu0 0.0
    %2718 = vmatpush1.msra.mxu0 0.0
    %2719 = vmatprep.subr.mxu0 0.0
    %2720 = vmatpush1.msra.mxu0 0.0
    %2721 = vmatprep.subr.mxu0 0.0
    %2722 = vmatpush1.msra.mxu0 0.0
    %2723 = vmatprep.subr.mxu0 0.0
    %2724 = vmatpush1.msra.mxu0 0.0
    %2725 = vmatprep.subr.mxu0 0.0
    %2726 = vmatpush1.msra.mxu0 0.0
    %2727 = vmatprep.subr.mxu0 0.0
    %2728 = vmatpush1.msra.mxu0 0.0
    %2729 = vmatprep.mubr.f32.mxu0 0.0
    %2730 = vmatmul.mubr.f32.gmra.mrb[0].mxu0 %v2663
    %v2731 = vpop.f32.mrb[0].mxu0
    %v2732 = vadd.f32 0.0, %v2731
    %v2733 = vpop.f32.mrb[0].mxu0
    %v2734 = vadd.f32 0.0, %v2733
    %2735 = vdwg.mxu0
    %v2736 = vadd.f32 %v2660, %v2732
    %v2737 = vadd.f32 %v2661, %v2734
    %v2738 = vxor.u32 %v2736, 2147483648
    %v2739 = vxor.u32 %v2737, 2147483648
    %v2740 = vmul.f32 %v2738, 1.442695
    %v2741 = vpow.pop %v2740
    %v2742 = vmul.f32 %v2739, 1.442695
    %v2743 = vpow.pop %v2742
    %v2744 = vadd.f32 %v2741, 1.0
    %v2745 = vadd.f32 %v2743, 1.0
    %v2746 = vrcp.pop %v2744
    %v2747 = vmul.f32 1.0, %v2746
    %v2748 = vrcp.pop %v2745
    %v2749 = vmul.f32 1.0, %v2748
    %v2750 = vtanh.pop %v2737
    %v2751 = vmul.f32 %v2747, %v2652
    %2753 = vrot.lane.b32.xlu0 %v2750, 64
    %v2754 = vpop.permute.xlu0 %2753
    %v2756 = vmul.f32 %v2747, %v2754
    %2758 = vrot.lane.b32.xlu0 %v2756, 64
    %v2759 = vpop.permute.xlu0 %2758
    %v2761 = vadd.f32 %v2751, %v2759
    %v2762 = vtanh.pop %v2761
    %2764 = vrot.lane.b32.xlu0 %v2762, 64
    %v2765 = vpop.permute.xlu0 %2764
    %v2767 = vmul.f32 %v2749, %v2765
    %2768 = vst.msk [vmem:[%s603] sm:$0xff] %vm60, %v2767
    %v2769 = vld [vmem:[%s605] sm:$0xff]
    %v2770 = vld [vmem:[%s605 + $0x8] sm:$0xff]
    %v2772 = vsel %vm60, %v2767, 0
    %2774 = vmatprep.subr.mxu0 %v2256
    %2775 = vmatpush1.msra.mxu0 %v2255
    %2776 = vmatprep.subr.mxu0 %v2258
    %2777 = vmatpush1.msra.mxu0 %v2257
    %2778 = vmatprep.subr.mxu0 %v2260
    %2779 = vmatpush1.msra.mxu0 %v2259
    %2780 = vmatprep.subr.mxu0 %v2262
    %2781 = vmatpush1.msra.mxu0 %v2261
    %2782 = vmatprep.subr.mxu0 %v2264
    %2783 = vmatpush1.msra.mxu0 %v2263
    %2784 = vmatprep.subr.mxu0 %v2266
    %2785 = vmatpush1.msra.mxu0 %v2265
    %2786 = vmatprep.subr.mxu0 %v2268
    %2787 = vmatpush1.msra.mxu0 %v2267
    %2788 = vmatprep.subr.mxu0 %v2270
    %2789 = vmatpush1.msra.mxu0 %v2269
    %2790 = vmatprep.subr.mxu0 0.0
    %2791 = vmatpush1.msra.mxu0 0.0
    %2792 = vmatprep.subr.mxu0 0.0
    %2793 = vmatpush1.msra.mxu0 0.0
    %2794 = vmatprep.subr.mxu0 0.0
    %2795 = vmatpush1.msra.mxu0 0.0
    %2796 = vmatprep.subr.mxu0 0.0
    %2797 = vmatpush1.msra.mxu0 0.0
    %2798 = vmatprep.subr.mxu0 0.0
    %2799 = vmatpush1.msra.mxu0 0.0
    %2800 = vmatprep.subr.mxu0 0.0
    %2801 = vmatpush1.msra.mxu0 0.0
    %2802 = vmatprep.subr.mxu0 0.0
    %2803 = vmatpush1.msra.mxu0 0.0
    %2804 = vmatprep.subr.mxu0 0.0
    %2805 = vmatpush1.msra.mxu0 0.0
    %2806 = vmatprep.subr.mxu0 0.0
    %2807 = vmatpush1.msra.mxu0 0.0
    %2808 = vmatprep.subr.mxu0 0.0
    %2809 = vmatpush1.msra.mxu0 0.0
    %2810 = vmatprep.subr.mxu0 0.0
    %2811 = vmatpush1.msra.mxu0 0.0
    %2812 = vmatprep.subr.mxu0 0.0
    %2813 = vmatpush1.msra.mxu0 0.0
    %2814 = vmatprep.subr.mxu0 0.0
    %2815 = vmatpush1.msra.mxu0 0.0
    %2816 = vmatprep.subr.mxu0 0.0
    %2817 = vmatpush1.msra.mxu0 0.0
    %2818 = vmatprep.subr.mxu0 0.0
    %2819 = vmatpush1.msra.mxu0 0.0
    %2820 = vmatprep.subr.mxu0 0.0
    %2821 = vmatpush1.msra.mxu0 0.0
    %2822 = vmatprep.subr.mxu0 0.0
    %2823 = vmatpush1.msra.mxu0 0.0
    %2824 = vmatprep.subr.mxu0 0.0
    %2825 = vmatpush1.msra.mxu0 0.0
    %2826 = vmatprep.subr.mxu0 0.0
    %2827 = vmatpush1.msra.mxu0 0.0
    %2828 = vmatprep.subr.mxu0 0.0
    %2829 = vmatpush1.msra.mxu0 0.0
    %2830 = vmatprep.subr.mxu0 0.0
    %2831 = vmatpush1.msra.mxu0 0.0
    %2832 = vmatprep.subr.mxu0 0.0
    %2833 = vmatpush1.msra.mxu0 0.0
    %2834 = vmatprep.subr.mxu0 0.0
    %2835 = vmatpush1.msra.mxu0 0.0
    %2836 = vmatprep.subr.mxu0 0.0
    %2837 = vmatpush1.msra.mxu0 0.0
    %2838 = vmatprep.mubr.f32.mxu0 0.0
    %2839 = vmatmul.mubr.f32.gmra.mrb[0].mxu0 %v2772
    %v2840 = vpop.f32.mrb[0].mxu0
    %v2841 = vadd.f32 0.0, %v2840
    %v2842 = vpop.f32.mrb[0].mxu0
    %v2843 = vadd.f32 0.0, %v2842
    %2844 = vdwg.mxu0
    %v2845 = vadd.f32 %v2769, %v2841
    %v2846 = vadd.f32 %v2770, %v2843
    %v2847 = vxor.u32 %v2845, 2147483648
    %v2848 = vxor.u32 %v2846, 2147483648
    %v2849 = vmul.f32 %v2847, 1.442695
    %v2850 = vpow.pop %v2849
    %v2851 = vmul.f32 %v2848, 1.442695
    %v2852 = vpow.pop %v2851
    %v2853 = vadd.f32 %v2850, 1.0
    %v2854 = vadd.f32 %v2852, 1.0
    %v2855 = vrcp.pop %v2853
    %v2856 = vmul.f32 1.0, %v2855
    %v2857 = vrcp.pop %v2854
    %v2858 = vmul.f32 1.0, %v2857
    %v2859 = vtanh.pop %v2846
    %v2860 = vmul.f32 %v2856, %v2761
    %2862 = vrot.lane.b32.xlu0 %v2859, 64
    %v2863 = vpop.permute.xlu0 %2862
    %v2865 = vmul.f32 %v2856, %v2863
    %2867 = vrot.lane.b32.xlu0 %v2865, 64
    %v2868 = vpop.permute.xlu0 %2867
    %v2870 = vadd.f32 %v2860, %v2868
    %v2871 = vtanh.pop %v2870
    %2873 = vrot.lane.b32.xlu0 %v2871, 64
    %v2874 = vpop.permute.xlu0 %2873
    %v2876 = vmul.f32 %v2858, %v2874
    %2877 = vst.msk [vmem:[%s714] sm:$0xff] %vm60, %v2876
    %v2878 = vld [vmem:[%s716] sm:$0xff]
    %v2879 = vld [vmem:[%s716 + $0x8] sm:$0xff]
    %v2881 = vsel %vm60, %v2876, 0
    %2883 = vmatprep.subr.mxu0 %v2256
    %2884 = vmatpush1.msra.mxu0 %v2255
    %2885 = vmatprep.subr.mxu0 %v2258
    %2886 = vmatpush1.msra.mxu0 %v2257
    %2887 = vmatprep.subr.mxu0 %v2260
    %2888 = vmatpush1.msra.mxu0 %v2259
    %2889 = vmatprep.subr.mxu0 %v2262
    %2890 = vmatpush1.msra.mxu0 %v2261
    %2891 = vmatprep.subr.mxu0 %v2264
    %2892 = vmatpush1.msra.mxu0 %v2263
    %2893 = vmatprep.subr.mxu0 %v2266
    %2894 = vmatpush1.msra.mxu0 %v2265
    %2895 = vmatprep.subr.mxu0 %v2268
    %2896 = vmatpush1.msra.mxu0 %v2267
    %2897 = vmatprep.subr.mxu0 %v2270
    %2898 = vmatpush1.msra.mxu0 %v2269
    %2899 = vmatprep.subr.mxu0 0.0
    %2900 = vmatpush1.msra.mxu0 0.0
    %2901 = vmatprep.subr.mxu0 0.0
    %2902 = vmatpush1.msra.mxu0 0.0
    %2903 = vmatprep.subr.mxu0 0.0
    %2904 = vmatpush1.msra.mxu0 0.0
    %2905 = vmatprep.subr.mxu0 0.0
    %2906 = vmatpush1.msra.mxu0 0.0
    %2907 = vmatprep.subr.mxu0 0.0
    %2908 = vmatpush1.msra.mxu0 0.0
    %2909 = vmatprep.subr.mxu0 0.0
    %2910 = vmatpush1.msra.mxu0 0.0
    %2911 = vmatprep.subr.mxu0 0.0
    %2912 = vmatpush1.msra.mxu0 0.0
    %2913 = vmatprep.subr.mxu0 0.0
    %2914 = vmatpush1.msra.mxu0 0.0
    %2915 = vmatprep.subr.mxu0 0.0
    %2916 = vmatpush1.msra.mxu0 0.0
    %2917 = vmatprep.subr.mxu0 0.0
    %2918 = vmatpush1.msra.mxu0 0.0
    %2919 = vmatprep.subr.mxu0 0.0
    %2920 = vmatpush1.msra.mxu0 0.0
    %2921 = vmatprep.subr.mxu0 0.0
    %2922 = vmatpush1.msra.mxu0 0.0
    %2923 = vmatprep.subr.mxu0 0.0
    %2924 = vmatpush1.msra.mxu0 0.0
    %2925 = vmatprep.subr.mxu0 0.0
    %2926 = vmatpush1.msra.mxu0 0.0
    %2927 = vmatprep.subr.mxu0 0.0
    %2928 = vmatpush1.msra.mxu0 0.0
    %2929 = vmatprep.subr.mxu0 0.0
    %2930 = vmatpush1.msra.mxu0 0.0
    %2931 = vmatprep.subr.mxu0 0.0
    %2932 = vmatpush1.msra.mxu0 0.0
    %2933 = vmatprep.subr.mxu0 0.0
    %2934 = vmatpush1.msra.mxu0 0.0
    %2935 = vmatprep.subr.mxu0 0.0
    %2936 = vmatpush1.msra.mxu0 0.0
    %2937 = vmatprep.subr.mxu0 0.0
    %2938 = vmatpush1.msra.mxu0 0.0
    %2939 = vmatprep.subr.mxu0 0.0
    %2940 = vmatpush1.msra.mxu0 0.0
    %2941 = vmatprep.subr.mxu0 0.0
    %2942 = vmatpush1.msra.mxu0 0.0
    %2943 = vmatprep.subr.mxu0 0.0
    %2944 = vmatpush1.msra.mxu0 0.0
    %2945 = vmatprep.subr.mxu0 0.0
    %2946 = vmatpush1.msra.mxu0 0.0
    %2947 = vmatprep.mubr.f32.mxu0 0.0
    %2948 = vmatmul.mubr.f32.gmra.mrb[0].mxu0 %v2881
    %v2949 = vpop.f32.mrb[0].mxu0
    %v2950 = vadd.f32 0.0, %v2949
    %v2951 = vpop.f32.mrb[0].mxu0
    %v2952 = vadd.f32 0.0, %v2951
    %2953 = vdwg.mxu0
    %v2954 = vadd.f32 %v2878, %v2950
    %v2955 = vadd.f32 %v2879, %v2952
    %v2956 = vxor.u32 %v2954, 2147483648
    %v2957 = vxor.u32 %v2955, 2147483648
    %v2958 = vmul.f32 %v2956, 1.442695
    %v2959 = vpow.pop %v2958
    %v2960 = vmul.f32 %v2957, 1.442695
    %v2961 = vpow.pop %v2960
    %v2962 = vadd.f32 %v2959, 1.0
    %v2963 = vadd.f32 %v2961, 1.0
    %v2964 = vrcp.pop %v2962
    %v2965 = vmul.f32 1.0, %v2964
    %v2966 = vrcp.pop %v2963
    %v2967 = vmul.f32 1.0, %v2966
    %v2968 = vtanh.pop %v2955
    %v2969 = vmul.f32 %v2965, %v2870
    %2971 = vrot.lane.b32.xlu0 %v2968, 64
    %v2972 = vpop.permute.xlu0 %2971
    %v2974 = vmul.f32 %v2965, %v2972
    %2976 = vrot.lane.b32.xlu0 %v2974, 64
    %v2977 = vpop.permute.xlu0 %2976
    %v2979 = vadd.f32 %v2969, %v2977
    %v2980 = vtanh.pop %v2979
    %2982 = vrot.lane.b32.xlu0 %v2980, 64
    %v2983 = vpop.permute.xlu0 %2982
    %v2985 = vmul.f32 %v2967, %v2983
    %2986 = vst.msk [vmem:[%s825] sm:$0xff] %vm60, %v2985
    %v2987 = vld [vmem:[%s827] sm:$0xff]
    %v2988 = vld [vmem:[%s827 + $0x8] sm:$0xff]
    %v2990 = vsel %vm60, %v2985, 0
    %2992 = vmatprep.subr.mxu0 %v2256
    %2993 = vmatpush1.msra.mxu0 %v2255
    %2994 = vmatprep.subr.mxu0 %v2258
    %2995 = vmatpush1.msra.mxu0 %v2257
    %2996 = vmatprep.subr.mxu0 %v2260
    %2997 = vmatpush1.msra.mxu0 %v2259
    %2998 = vmatprep.subr.mxu0 %v2262
    %2999 = vmatpush1.msra.mxu0 %v2261
    %3000 = vmatprep.subr.mxu0 %v2264
    %3001 = vmatpush1.msra.mxu0 %v2263
    %3002 = vmatprep.subr.mxu0 %v2266
    %3003 = vmatpush1.msra.mxu0 %v2265
    %3004 = vmatprep.subr.mxu0 %v2268
    %3005 = vmatpush1.msra.mxu0 %v2267
    %3006 = vmatprep.subr.mxu0 %v2270
    %3007 = vmatpush1.msra.mxu0 %v2269
    %3008 = vmatprep.subr.mxu0 0.0
    %3009 = vmatpush1.msra.mxu0 0.0
    %3010 = vmatprep.subr.mxu0 0.0
    %3011 = vmatpush1.msra.mxu0 0.0
    %3012 = vmatprep.subr.mxu0 0.0
    %3013 = vmatpush1.msra.mxu0 0.0
    %3014 = vmatprep.subr.mxu0 0.0
    %3015 = vmatpush1.msra.mxu0 0.0
    %3016 = vmatprep.subr.mxu0 0.0
    %3017 = vmatpush1.msra.mxu0 0.0
    %3018 = vmatprep.subr.mxu0 0.0
    %3019 = vmatpush1.msra.mxu0 0.0
    %3020 = vmatprep.subr.mxu0 0.0
    %3021 = vmatpush1.msra.mxu0 0.0
    %3022 = vmatprep.subr.mxu0 0.0
    %3023 = vmatpush1.msra.mxu0 0.0
    %3024 = vmatprep.subr.mxu0 0.0
    %3025 = vmatpush1.msra.mxu0 0.0
    %3026 = vmatprep.subr.mxu0 0.0
    %3027 = vmatpush1.msra.mxu0 0.0
    %3028 = vmatprep.subr.mxu0 0.0
    %3029 = vmatpush1.msra.mxu0 0.0
    %3030 = vmatprep.subr.mxu0 0.0
    %3031 = vmatpush1.msra.mxu0 0.0
    %3032 = vmatprep.subr.mxu0 0.0
    %3033 = vmatpush1.msra.mxu0 0.0
    %3034 = vmatprep.subr.mxu0 0.0
    %3035 = vmatpush1.msra.mxu0 0.0
    %3036 = vmatprep.subr.mxu0 0.0
    %3037 = vmatpush1.msra.mxu0 0.0
    %3038 = vmatprep.subr.mxu0 0.0
    %3039 = vmatpush1.msra.mxu0 0.0
    %3040 = vmatprep.subr.mxu0 0.0
    %3041 = vmatpush1.msra.mxu0 0.0
    %3042 = vmatprep.subr.mxu0 0.0
    %3043 = vmatpush1.msra.mxu0 0.0
    %3044 = vmatprep.subr.mxu0 0.0
    %3045 = vmatpush1.msra.mxu0 0.0
    %3046 = vmatprep.subr.mxu0 0.0
    %3047 = vmatpush1.msra.mxu0 0.0
    %3048 = vmatprep.subr.mxu0 0.0
    %3049 = vmatpush1.msra.mxu0 0.0
    %3050 = vmatprep.subr.mxu0 0.0
    %3051 = vmatpush1.msra.mxu0 0.0
    %3052 = vmatprep.subr.mxu0 0.0
    %3053 = vmatpush1.msra.mxu0 0.0
    %3054 = vmatprep.subr.mxu0 0.0
    %3055 = vmatpush1.msra.mxu0 0.0
    %3056 = vmatprep.mubr.f32.mxu0 0.0
    %3057 = vmatmul.mubr.f32.gmra.mrb[0].mxu0 %v2990
    %v3058 = vpop.f32.mrb[0].mxu0
    %v3059 = vadd.f32 0.0, %v3058
    %v3060 = vpop.f32.mrb[0].mxu0
    %v3061 = vadd.f32 0.0, %v3060
    %3062 = vdwg.mxu0
    %v3063 = vadd.f32 %v2987, %v3059
    %v3064 = vadd.f32 %v2988, %v3061
    %v3065 = vxor.u32 %v3063, 2147483648
    %v3066 = vxor.u32 %v3064, 2147483648
    %v3067 = vmul.f32 %v3065, 1.442695
    %v3068 = vpow.pop %v3067
    %v3069 = vmul.f32 %v3066, 1.442695
    %v3070 = vpow.pop %v3069
    %v3071 = vadd.f32 %v3068, 1.0
    %v3072 = vadd.f32 %v3070, 1.0
    %v3073 = vrcp.pop %v3071
    %v3074 = vmul.f32 1.0, %v3073
    %v3075 = vrcp.pop %v3072
    %v3076 = vmul.f32 1.0, %v3075
    %v3077 = vtanh.pop %v3064
    %v3078 = vmul.f32 %v3074, %v2979
    %3080 = vrot.lane.b32.xlu0 %v3077, 64
    %v3081 = vpop.permute.xlu0 %3080
    %v3083 = vmul.f32 %v3074, %v3081
    %3085 = vrot.lane.b32.xlu0 %v3083, 64
    %v3086 = vpop.permute.xlu0 %3085
    %v3088 = vadd.f32 %v3078, %v3086
    %v3089 = vtanh.pop %v3088
    %3091 = vrot.lane.b32.xlu0 %v3089, 64
    %v3092 = vpop.permute.xlu0 %3091
    %v3094 = vmul.f32 %v3076, %v3092
    %3095 = vst.msk [vmem:[%s936] sm:$0xff] %vm60, %v3094
    %v3096 = vld [vmem:[%s938] sm:$0xff]
    %v3097 = vld [vmem:[%s938 + $0x8] sm:$0xff]
    %v3099 = vsel %vm60, %v3094, 0
    %3101 = vmatprep.subr.mxu0 %v2256
    %3102 = vmatpush1.msra.mxu0 %v2255
    %3103 = vmatprep.subr.mxu0 %v2258
    %3104 = vmatpush1.msra.mxu0 %v2257
    %3105 = vmatprep.subr.mxu0 %v2260
    %3106 = vmatpush1.msra.mxu0 %v2259
    %3107 = vmatprep.subr.mxu0 %v2262
    %3108 = vmatpush1.msra.mxu0 %v2261
    %3109 = vmatprep.subr.mxu0 %v2264
    %3110 = vmatpush1.msra.mxu0 %v2263
    %3111 = vmatprep.subr.mxu0 %v2266
    %3112 = vmatpush1.msra.mxu0 %v2265
    %3113 = vmatprep.subr.mxu0 %v2268
    %3114 = vmatpush1.msra.mxu0 %v2267
    %3115 = vmatprep.subr.mxu0 %v2270
    %3116 = vmatpush1.msra.mxu0 %v2269
    %3117 = vmatprep.subr.mxu0 0.0
    %3118 = vmatpush1.msra.mxu0 0.0
    %3119 = vmatprep.subr.mxu0 0.0
    %3120 = vmatpush1.msra.mxu0 0.0
    %3121 = vmatprep.subr.mxu0 0.0
    %3122 = vmatpush1.msra.mxu0 0.0
    %3123 = vmatprep.subr.mxu0 0.0
    %3124 = vmatpush1.msra.mxu0 0.0
    %3125 = vmatprep.subr.mxu0 0.0
    %3126 = vmatpush1.msra.mxu0 0.0
    %3127 = vmatprep.subr.mxu0 0.0
    %3128 = vmatpush1.msra.mxu0 0.0
    %3129 = vmatprep.subr.mxu0 0.0
    %3130 = vmatpush1.msra.mxu0 0.0
    %3131 = vmatprep.subr.mxu0 0.0
    %3132 = vmatpush1.msra.mxu0 0.0
    %3133 = vmatprep.subr.mxu0 0.0
    %3134 = vmatpush1.msra.mxu0 0.0
    %3135 = vmatprep.subr.mxu0 0.0
    %3136 = vmatpush1.msra.mxu0 0.0
    %3137 = vmatprep.subr.mxu0 0.0
    %3138 = vmatpush1.msra.mxu0 0.0
    %3139 = vmatprep.subr.mxu0 0.0
    %3140 = vmatpush1.msra.mxu0 0.0
    %3141 = vmatprep.subr.mxu0 0.0
    %3142 = vmatpush1.msra.mxu0 0.0
    %3143 = vmatprep.subr.mxu0 0.0
    %3144 = vmatpush1.msra.mxu0 0.0
    %3145 = vmatprep.subr.mxu0 0.0
    %3146 = vmatpush1.msra.mxu0 0.0
    %3147 = vmatprep.subr.mxu0 0.0
    %3148 = vmatpush1.msra.mxu0 0.0
    %3149 = vmatprep.subr.mxu0 0.0
    %3150 = vmatpush1.msra.mxu0 0.0
    %3151 = vmatprep.subr.mxu0 0.0
    %3152 = vmatpush1.msra.mxu0 0.0
    %3153 = vmatprep.subr.mxu0 0.0
    %3154 = vmatpush1.msra.mxu0 0.0
    %3155 = vmatprep.subr.mxu0 0.0
    %3156 = vmatpush1.msra.mxu0 0.0
    %3157 = vmatprep.subr.mxu0 0.0
    %3158 = vmatpush1.msra.mxu0 0.0
    %3159 = vmatprep.subr.mxu0 0.0
    %3160 = vmatpush1.msra.mxu0 0.0
    %3161 = vmatprep.subr.mxu0 0.0
    %3162 = vmatpush1.msra.mxu0 0.0
    %3163 = vmatprep.subr.mxu0 0.0
    %3164 = vmatpush1.msra.mxu0 0.0
    %3165 = vmatprep.mubr.f32.mxu0 0.0
    %3166 = vmatmul.mubr.f32.gmra.mrb[0].mxu0 %v3099
    %v3167 = vpop.f32.mrb[0].mxu0
    %v3168 = vadd.f32 0.0, %v3167
    %v3169 = vpop.f32.mrb[0].mxu0
    %v3170 = vadd.f32 0.0, %v3169
    %3171 = vdwg.mxu0
    %v3172 = vadd.f32 %v3096, %v3168
    %v3173 = vadd.f32 %v3097, %v3170
    %v3174 = vxor.u32 %v3172, 2147483648
    %v3175 = vxor.u32 %v3173, 2147483648
    %v3176 = vmul.f32 %v3174, 1.442695
    %v3177 = vpow.pop %v3176
    %v3178 = vmul.f32 %v3175, 1.442695
    %v3179 = vpow.pop %v3178
    %v3180 = vadd.f32 %v3177, 1.0
    %v3181 = vadd.f32 %v3179, 1.0
    %v3182 = vrcp.pop %v3180
    %v3183 = vmul.f32 1.0, %v3182
    %v3184 = vrcp.pop %v3181
    %v3185 = vmul.f32 1.0, %v3184
    %v3186 = vtanh.pop %v3173
    %v3187 = vmul.f32 %v3183, %v3088
    %3189 = vrot.lane.b32.xlu0 %v3186, 64
    %v3190 = vpop.permute.xlu0 %3189
    %v3192 = vmul.f32 %v3183, %v3190
    %3194 = vrot.lane.b32.xlu0 %v3192, 64
    %v3195 = vpop.permute.xlu0 %3194
    %v3197 = vadd.f32 %v3187, %v3195
    %v3198 = vtanh.pop %v3197
    %3200 = vrot.lane.b32.xlu0 %v3198, 64
    %v3201 = vpop.permute.xlu0 %3200
    %v3203 = vmul.f32 %v3185, %v3201
    %3204 = vst.msk [vmem:[%s1047] sm:$0xff] %vm60, %v3203
    %v3205 = vld [vmem:[%s1049] sm:$0xff]
    %v3206 = vld [vmem:[%s1049 + $0x8] sm:$0xff]
    %v3208 = vsel %vm60, %v3203, 0
    %3210 = vmatprep.subr.mxu0 %v2256
    %3211 = vmatpush1.msra.mxu0 %v2255
    %3212 = vmatprep.subr.mxu0 %v2258
    %3213 = vmatpush1.msra.mxu0 %v2257
    %3214 = vmatprep.subr.mxu0 %v2260
    %3215 = vmatpush1.msra.mxu0 %v2259
    %3216 = vmatprep.subr.mxu0 %v2262
    %3217 = vmatpush1.msra.mxu0 %v2261
    %3218 = vmatprep.subr.mxu0 %v2264
    %3219 = vmatpush1.msra.mxu0 %v2263
    %3220 = vmatprep.subr.mxu0 %v2266
    %3221 = vmatpush1.msra.mxu0 %v2265
    %3222 = vmatprep.subr.mxu0 %v2268
    %3223 = vmatpush1.msra.mxu0 %v2267
    %3224 = vmatprep.subr.mxu0 %v2270
    %3225 = vmatpush1.msra.mxu0 %v2269
    %3226 = vmatprep.subr.mxu0 0.0
    %3227 = vmatpush1.msra.mxu0 0.0
    %3228 = vmatprep.subr.mxu0 0.0
    %3229 = vmatpush1.msra.mxu0 0.0
    %3230 = vmatprep.subr.mxu0 0.0
    %3231 = vmatpush1.msra.mxu0 0.0
    %3232 = vmatprep.subr.mxu0 0.0
    %3233 = vmatpush1.msra.mxu0 0.0
    %3234 = vmatprep.subr.mxu0 0.0
    %3235 = vmatpush1.msra.mxu0 0.0
    %3236 = vmatprep.subr.mxu0 0.0
    %3237 = vmatpush1.msra.mxu0 0.0
    %3238 = vmatprep.subr.mxu0 0.0
    %3239 = vmatpush1.msra.mxu0 0.0
    %3240 = vmatprep.subr.mxu0 0.0
    %3241 = vmatpush1.msra.mxu0 0.0
    %3242 = vmatprep.subr.mxu0 0.0
    %3243 = vmatpush1.msra.mxu0 0.0
    %3244 = vmatprep.subr.mxu0 0.0
    %3245 = vmatpush1.msra.mxu0 0.0
    %3246 = vmatprep.subr.mxu0 0.0
    %3247 = vmatpush1.msra.mxu0 0.0
    %3248 = vmatprep.subr.mxu0 0.0
    %3249 = vmatpush1.msra.mxu0 0.0
    %3250 = vmatprep.subr.mxu0 0.0
    %3251 = vmatpush1.msra.mxu0 0.0
    %3252 = vmatprep.subr.mxu0 0.0
    %3253 = vmatpush1.msra.mxu0 0.0
    %3254 = vmatprep.subr.mxu0 0.0
    %3255 = vmatpush1.msra.mxu0 0.0
    %3256 = vmatprep.subr.mxu0 0.0
    %3257 = vmatpush1.msra.mxu0 0.0
    %3258 = vmatprep.subr.mxu0 0.0
    %3259 = vmatpush1.msra.mxu0 0.0
    %3260 = vmatprep.subr.mxu0 0.0
    %3261 = vmatpush1.msra.mxu0 0.0
    %3262 = vmatprep.subr.mxu0 0.0
    %3263 = vmatpush1.msra.mxu0 0.0
    %3264 = vmatprep.subr.mxu0 0.0
    %3265 = vmatpush1.msra.mxu0 0.0
    %3266 = vmatprep.subr.mxu0 0.0
    %3267 = vmatpush1.msra.mxu0 0.0
    %3268 = vmatprep.subr.mxu0 0.0
    %3269 = vmatpush1.msra.mxu0 0.0
    %3270 = vmatprep.subr.mxu0 0.0
    %3271 = vmatpush1.msra.mxu0 0.0
    %3272 = vmatprep.subr.mxu0 0.0
    %3273 = vmatpush1.msra.mxu0 0.0
    %3274 = vmatprep.mubr.f32.mxu0 0.0
    %3275 = vmatmul.mubr.f32.gmra.mrb[0].mxu0 %v3208
    %v3276 = vpop.f32.mrb[0].mxu0
    %v3277 = vadd.f32 0.0, %v3276
    %v3278 = vpop.f32.mrb[0].mxu0
    %v3279 = vadd.f32 0.0, %v3278
    %3280 = vdwg.mxu0
    %v3281 = vadd.f32 %v3205, %v3277
    %v3282 = vadd.f32 %v3206, %v3279
    %v3283 = vxor.u32 %v3281, 2147483648
    %v3284 = vxor.u32 %v3282, 2147483648
    %v3285 = vmul.f32 %v3283, 1.442695
    %v3286 = vpow.pop %v3285
    %v3287 = vmul.f32 %v3284, 1.442695
    %v3288 = vpow.pop %v3287
    %v3289 = vadd.f32 %v3286, 1.0
    %v3290 = vadd.f32 %v3288, 1.0
    %v3291 = vrcp.pop %v3289
    %v3292 = vmul.f32 1.0, %v3291
    %v3293 = vrcp.pop %v3290
    %v3294 = vmul.f32 1.0, %v3293
    %v3295 = vtanh.pop %v3282
    %v3296 = vmul.f32 %v3292, %v3197
    %3298 = vrot.lane.b32.xlu0 %v3295, 64
    %v3299 = vpop.permute.xlu0 %3298
    %v3301 = vmul.f32 %v3292, %v3299
    %3303 = vrot.lane.b32.xlu0 %v3301, 64
    %v3304 = vpop.permute.xlu0 %3303
    %v3306 = vadd.f32 %v3296, %v3304
    %v3307 = vtanh.pop %v3306
    %3309 = vrot.lane.b32.xlu0 %v3307, 64
    %v3310 = vpop.permute.xlu0 %3309
    %v3312 = vmul.f32 %v3294, %v3310
    %3313 = vst.msk [vmem:[%s1158] sm:$0xff] %vm60, %v3312
    %s3314 = scalar_lea.vmem [#allocation4], 384
    %v3315 = vld [vmem:[%s3314] sm:$0xff]
    %v3316 = vld [vmem:[%s3314 + $0x8] sm:$0xff]
    %v3317 = vld [vmem:[%s3314 + $0x10] sm:$0xff]
    %v3318 = vld [vmem:[%s3314 + $0x18] sm:$0xff]
    %v3319 = vld [vmem:[%s3314 + $0x20] sm:$0xff]
    %v3320 = vld [vmem:[%s3314 + $0x28] sm:$0xff]
    %v3321 = vld [vmem:[%s3314 + $0x30] sm:$0xff]
    %v3322 = vld [vmem:[%s3314 + $0x38] sm:$0xff]
    %v3323 = vld [vmem:[%s3314 + $0x40] sm:$0xff]
    %v3324 = vld [vmem:[%s3314 + $0x48] sm:$0xff]
    %v3325 = vld [vmem:[%s3314 + $0x50] sm:$0xff]
    %v3326 = vld [vmem:[%s3314 + $0x58] sm:$0xff]
    %v3327 = vld [vmem:[%s3314 + $0x60] sm:$0xff]
    %v3328 = vld [vmem:[%s3314 + $0x68] sm:$0xff]
    %v3329 = vld [vmem:[%s3314 + $0x70] sm:$0xff]
    %v3330 = vld [vmem:[%s3314 + $0x78] sm:$0xff]
    %s3331 = scalar_lea.vmem [#allocation7], 384
    %v3332 = vld [vmem:[%s3331] sm:$0xff]
    %v3333 = vld [vmem:[%s3331 + $0x8] sm:$0xff]
    %v3334 = vld [vmem:[%s3331 + $0x10] sm:$0xff]
    %v3335 = vld [vmem:[%s3331 + $0x18] sm:$0xff]
    %v3336 = vld [vmem:[%s3331 + $0x20] sm:$0xff]
    %v3337 = vld [vmem:[%s3331 + $0x28] sm:$0xff]
    %v3338 = vld [vmem:[%s3331 + $0x30] sm:$0xff]
    %v3339 = vld [vmem:[%s3331 + $0x38] sm:$0xff]
    %v3340 = vld [vmem:[%s3331 + $0x40] sm:$0xff]
    %v3341 = vld [vmem:[%s3331 + $0x48] sm:$0xff]
    %v3342 = vld [vmem:[%s3331 + $0x50] sm:$0xff]
    %v3343 = vld [vmem:[%s3331 + $0x58] sm:$0xff]
    %v3344 = vld [vmem:[%s3331 + $0x60] sm:$0xff]
    %v3345 = vld [vmem:[%s3331 + $0x68] sm:$0xff]
    %v3346 = vld [vmem:[%s3331 + $0x70] sm:$0xff]
    %v3347 = vld [vmem:[%s3331 + $0x78] sm:$0xff]
    %s3348 = scalar_lea.vmem %s3, 6
    %v3349 = vld [vmem:[%s3348] sm:$0x3]
    %v3350 = vld [vmem:[#allocation2] sm:$0xff]
    %v3351 = vld [vmem:[#allocation2 + $0x8] sm:$0xff]
    %v3352 = vld [vmem:[#allocation2 + $0x10] sm:$0xff]
    %v3353 = vld [vmem:[#allocation2 + $0x18] sm:$0xff]
    %v3354 = vld [vmem:[#allocation2 + $0x20] sm:$0xff]
    %v3355 = vld [vmem:[#allocation2 + $0x28] sm:$0xff]
    %v3356 = vld [vmem:[#allocation2 + $0x30] sm:$0xff]
    %v3357 = vld [vmem:[#allocation2 + $0x38] sm:$0xff]
    %v3359 = vlaneseq
    %v3360 = vshrl.u32 %v3359, 7
    %v3361 = vsub.s32 0, %v3360
    %v3362 = vrot.slane %v3349, %v3361
    %v3363 = vlaneseq
    %v3364 = vshrl.u32 %v3363, 7
    %v3365 = vsub.s32 1, %v3364
    %v3366 = vrot.slane %v3349, %v3365
    %v3370 = vsel %vm60, %v3350, 0
    %v3373 = vsel %vm60, %v3351, 0
    %v3376 = vsel %vm60, %v3352, 0
    %v3379 = vsel %vm60, %v3353, 0
    %v3382 = vsel %vm60, %v3354, 0
    %v3385 = vsel %vm60, %v3355, 0
    %v3388 = vsel %vm60, %v3356, 0
    %v3391 = vsel %vm60, %v3357, 0
    %3393 = vmatprep.subr.mxu0 %v3316
    %3394 = vmatpush1.msra.mxu0 %v3315
    %3395 = vmatprep.subr.mxu0 %v3318
    %3396 = vmatpush1.msra.mxu0 %v3317
    %3397 = vmatprep.subr.mxu0 %v3320
    %3398 = vmatpush1.msra.mxu0 %v3319
    %3399 = vmatprep.subr.mxu0 %v3322
    %3400 = vmatpush1.msra.mxu0 %v3321
    %3401 = vmatprep.subr.mxu0 %v3324
    %3402 = vmatpush1.msra.mxu0 %v3323
    %3403 = vmatprep.subr.mxu0 %v3326
    %3404 = vmatpush1.msra.mxu0 %v3325
    %3405 = vmatprep.subr.mxu0 %v3328
    %3406 = vmatpush1.msra.mxu0 %v3327
    %3407 = vmatprep.subr.mxu0 %v3330
    %3408 = vmatpush1.msra.mxu0 %v3329
    %3409 = vmatprep.subr.mxu0 0.0
    %3410 = vmatpush1.msra.mxu0 0.0
    %3411 = vmatprep.subr.mxu0 0.0
    %3412 = vmatpush1.msra.mxu0 0.0
    %3413 = vmatprep.subr.mxu0 0.0
    %3414 = vmatpush1.msra.mxu0 0.0
    %3415 = vmatprep.subr.mxu0 0.0
    %3416 = vmatpush1.msra.mxu0 0.0
    %3417 = vmatprep.subr.mxu0 0.0
    %3418 = vmatpush1.msra.mxu0 0.0
    %3419 = vmatprep.subr.mxu0 0.0
    %3420 = vmatpush1.msra.mxu0 0.0
    %3421 = vmatprep.subr.mxu0 0.0
    %3422 = vmatpush1.msra.mxu0 0.0
    %3423 = vmatprep.subr.mxu0 0.0
    %3424 = vmatpush1.msra.mxu0 0.0
    %3425 = vmatprep.subr.mxu0 0.0
    %3426 = vmatpush1.msra.mxu0 0.0
    %3427 = vmatprep.subr.mxu0 0.0
    %3428 = vmatpush1.msra.mxu0 0.0
    %3429 = vmatprep.subr.mxu0 0.0
    %3430 = vmatpush1.msra.mxu0 0.0
    %3431 = vmatprep.subr.mxu0 0.0
    %3432 = vmatpush1.msra.mxu0 0.0
    %3433 = vmatprep.subr.mxu0 0.0
    %3434 = vmatpush1.msra.mxu0 0.0
    %3435 = vmatprep.subr.mxu0 0.0
    %3436 = vmatpush1.msra.mxu0 0.0
    %3437 = vmatprep.subr.mxu0 0.0
    %3438 = vmatpush1.msra.mxu0 0.0
    %3439 = vmatprep.subr.mxu0 0.0
    %3440 = vmatpush1.msra.mxu0 0.0
    %3441 = vmatprep.subr.mxu0 0.0
    %3442 = vmatpush1.msra.mxu0 0.0
    %3443 = vmatprep.subr.mxu0 0.0
    %3444 = vmatpush1.msra.mxu0 0.0
    %3445 = vmatprep.subr.mxu0 0.0
    %3446 = vmatpush1.msra.mxu0 0.0
    %3447 = vmatprep.subr.mxu0 0.0
    %3448 = vmatpush1.msra.mxu0 0.0
    %3449 = vmatprep.subr.mxu0 0.0
    %3450 = vmatpush1.msra.mxu0 0.0
    %3451 = vmatprep.subr.mxu0 0.0
    %3452 = vmatpush1.msra.mxu0 0.0
    %3453 = vmatprep.subr.mxu0 0.0
    %3454 = vmatpush1.msra.mxu0 0.0
    %3455 = vmatprep.subr.mxu0 0.0
    %3456 = vmatpush1.msra.mxu0 0.0
    %3457 = vmatprep.mubr.f32.mxu0 0.0
    %3458 = vmatmul.mubr.f32.gmra.mrb[0].mxu0 %v3370
    %v3459 = vpop.f32.mrb[0].mxu0
    %v3460 = vadd.f32 %v3362, %v3459
    %v3461 = vpop.f32.mrb[0].mxu0
    %v3462 = vadd.f32 %v3366, %v3461
    %3463 = vmatprep.mubr.f32.mxu0 0.0
    %3464 = vmatmul.mubr.f32.gmra.mrb[0].mxu0 %v3373
    %v3465 = vpop.f32.mrb[0].mxu0
    %v3466 = vadd.f32 %v3362, %v3465
    %v3467 = vpop.f32.mrb[0].mxu0
    %v3468 = vadd.f32 %v3366, %v3467
    %3469 = vmatprep.mubr.f32.mxu0 0.0
    %3470 = vmatmul.mubr.f32.gmra.mrb[0].mxu0 %v3376
    %v3471 = vpop.f32.mrb[0].mxu0
    %v3472 = vadd.f32 %v3362, %v3471
    %v3473 = vpop.f32.mrb[0].mxu0
    %v3474 = vadd.f32 %v3366, %v3473
    %3475 = vmatprep.mubr.f32.mxu0 0.0
    %3476 = vmatmul.mubr.f32.gmra.mrb[0].mxu0 %v3379
    %v3477 = vpop.f32.mrb[0].mxu0
    %v3478 = vadd.f32 %v3362, %v3477
    %v3479 = vpop.f32.mrb[0].mxu0
    %v3480 = vadd.f32 %v3366, %v3479
    %3481 = vmatprep.mubr.f32.mxu0 0.0
    %3482 = vmatmul.mubr.f32.gmra.mrb[0].mxu0 %v3382
    %v3483 = vpop.f32.mrb[0].mxu0
    %v3484 = vadd.f32 %v3362, %v3483
    %v3485 = vpop.f32.mrb[0].mxu0
    %v3486 = vadd.f32 %v3366, %v3485
    %3487 = vmatprep.mubr.f32.mxu0 0.0
    %3488 = vmatmul.mubr.f32.gmra.mrb[0].mxu0 %v3385
    %v3489 = vpop.f32.mrb[0].mxu0
    %v3490 = vadd.f32 %v3362, %v3489
    %v3491 = vpop.f32.mrb[0].mxu0
    %v3492 = vadd.f32 %v3366, %v3491
    %3493 = vmatprep.mubr.f32.mxu0 0.0
    %3494 = vmatmul.mubr.f32.gmra.mrb[0].mxu0 %v3388
    %v3495 = vpop.f32.mrb[0].mxu0
    %v3496 = vadd.f32 %v3362, %v3495
    %v3497 = vpop.f32.mrb[0].mxu0
    %v3498 = vadd.f32 %v3366, %v3497
    %3499 = vmatprep.mubr.f32.mxu0 0.0
    %3500 = vmatmul.mubr.f32.gmra.mrb[0].mxu0 %v3391
    %v3501 = vpop.f32.mrb[0].mxu0
    %v3502 = vadd.f32 %v3362, %v3501
    %v3503 = vpop.f32.mrb[0].mxu0
    %v3504 = vadd.f32 %v3366, %v3503
    %3505 = vdwg.mxu0
    %3506 = vst [vmem:[#allocation3] sm:$0xff] %v3460
    %3507 = vst [vmem:[#allocation3 + $0x8] sm:$0xff] %v3462
    %3508 = vst [vmem:[#allocation3 + $0x10] sm:$0xff] %v3466
    %3509 = vst [vmem:[#allocation3 + $0x18] sm:$0xff] %v3468
    %3510 = vst [vmem:[#allocation3 + $0x20] sm:$0xff] %v3472
    %3511 = vst [vmem:[#allocation3 + $0x28] sm:$0xff] %v3474
    %3512 = vst [vmem:[#allocation3 + $0x30] sm:$0xff] %v3478
    %3513 = vst [vmem:[#allocation3 + $0x38] sm:$0xff] %v3480
    %3514 = vst [vmem:[#allocation3 + $0x40] sm:$0xff] %v3484
    %3515 = vst [vmem:[#allocation3 + $0x48] sm:$0xff] %v3486
    %3516 = vst [vmem:[#allocation3 + $0x50] sm:$0xff] %v3490
    %3517 = vst [vmem:[#allocation3 + $0x58] sm:$0xff] %v3492
    %3518 = vst [vmem:[#allocation3 + $0x60] sm:$0xff] %v3496
    %3519 = vst [vmem:[#allocation3 + $0x68] sm:$0xff] %v3498
    %3520 = vst [vmem:[#allocation3 + $0x70] sm:$0xff] %v3502
    %3521 = vst [vmem:[#allocation3 + $0x78] sm:$0xff] %v3504
    %v3522 = vld [vmem:[#allocation3] sm:$0xff]
    %v3523 = vld [vmem:[#allocation3 + $0x8] sm:$0xff]
    %3524 = vmatprep.subr.mxu0 %v3333
    %3525 = vmatpush1.msra.mxu0 %v3332
    %3526 = vmatprep.subr.mxu0 %v3335
    %3527 = vmatpush1.msra.mxu0 %v3334
    %3528 = vmatprep.subr.mxu0 %v3337
    %3529 = vmatpush1.msra.mxu0 %v3336
    %3530 = vmatprep.subr.mxu0 %v3339
    %3531 = vmatpush1.msra.mxu0 %v3338
    %3532 = vmatprep.subr.mxu0 %v3341
    %3533 = vmatpush1.msra.mxu0 %v3340
    %3534 = vmatprep.subr.mxu0 %v3343
    %3535 = vmatpush1.msra.mxu0 %v3342
    %3536 = vmatprep.subr.mxu0 %v3345
    %3537 = vmatpush1.msra.mxu0 %v3344
    %3538 = vmatprep.subr.mxu0 %v3347
    %3539 = vmatpush1.msra.mxu0 %v3346
    %3540 = vmatprep.subr.mxu0 0.0
    %3541 = vmatpush1.msra.mxu0 0.0
    %3542 = vmatprep.subr.mxu0 0.0
    %3543 = vmatpush1.msra.mxu0 0.0
    %3544 = vmatprep.subr.mxu0 0.0
    %3545 = vmatpush1.msra.mxu0 0.0
    %3546 = vmatprep.subr.mxu0 0.0
    %3547 = vmatpush1.msra.mxu0 0.0
    %3548 = vmatprep.subr.mxu0 0.0
    %3549 = vmatpush1.msra.mxu0 0.0
    %3550 = vmatprep.subr.mxu0 0.0
    %3551 = vmatpush1.msra.mxu0 0.0
    %3552 = vmatprep.subr.mxu0 0.0
    %3553 = vmatpush1.msra.mxu0 0.0
    %3554 = vmatprep.subr.mxu0 0.0
    %3555 = vmatpush1.msra.mxu0 0.0
    %3556 = vmatprep.subr.mxu0 0.0
    %3557 = vmatpush1.msra.mxu0 0.0
    %3558 = vmatprep.subr.mxu0 0.0
    %3559 = vmatpush1.msra.mxu0 0.0
    %3560 = vmatprep.subr.mxu0 0.0
    %3561 = vmatpush1.msra.mxu0 0.0
    %3562 = vmatprep.subr.mxu0 0.0
    %3563 = vmatpush1.msra.mxu0 0.0
    %3564 = vmatprep.subr.mxu0 0.0
    %3565 = vmatpush1.msra.mxu0 0.0
    %3566 = vmatprep.subr.mxu0 0.0
    %3567 = vmatpush1.msra.mxu0 0.0
    %3568 = vmatprep.subr.mxu0 0.0
    %3569 = vmatpush1.msra.mxu0 0.0
    %3570 = vmatprep.subr.mxu0 0.0
    %3571 = vmatpush1.msra.mxu0 0.0
    %3572 = vmatprep.subr.mxu0 0.0
    %3573 = vmatpush1.msra.mxu0 0.0
    %3574 = vmatprep.subr.mxu0 0.0
    %3575 = vmatpush1.msra.mxu0 0.0
    %3576 = vmatprep.subr.mxu0 0.0
    %3577 = vmatpush1.msra.mxu0 0.0
    %3578 = vmatprep.subr.mxu0 0.0
    %3579 = vmatpush1.msra.mxu0 0.0
    %3580 = vmatprep.subr.mxu0 0.0
    %3581 = vmatpush1.msra.mxu0 0.0
    %3582 = vmatprep.subr.mxu0 0.0
    %3583 = vmatpush1.msra.mxu0 0.0
    %3584 = vmatprep.subr.mxu0 0.0
    %3585 = vmatpush1.msra.mxu0 0.0
    %3586 = vmatprep.subr.mxu0 0.0
    %3587 = vmatpush1.msra.mxu0 0.0
    %3588 = vmatprep.mubr.f32.mxu0 0.0
    %3589 = vmatmul.mubr.f32.gmra.mrb[0].mxu0 %v277
    %v3590 = vpop.f32.mrb[0].mxu0
    %v3591 = vadd.f32 0.0, %v3590
    %v3592 = vpop.f32.mrb[0].mxu0
    %v3593 = vadd.f32 0.0, %v3592
    %3594 = vdwg.mxu0
    %v3595 = vadd.f32 %v3522, %v3591
    %v3596 = vadd.f32 %v3523, %v3593
    %v3597 = vxor.u32 %v3595, 2147483648
    %v3598 = vxor.u32 %v3596, 2147483648
    %v3599 = vmul.f32 %v3597, 1.442695
    %v3600 = vpow.pop %v3599
    %v3601 = vmul.f32 %v3598, 1.442695
    %v3602 = vpow.pop %v3601
    %v3603 = vadd.f32 %v3600, 1.0
    %v3604 = vadd.f32 %v3602, 1.0
    %v3605 = vrcp.pop %v3603
    %v3606 = vmul.f32 1.0, %v3605
    %v3607 = vrcp.pop %v3604
    %v3608 = vmul.f32 1.0, %v3607
    %v3609 = vtanh.pop %v3596
    %v3610 = vmul.f32 %v3606, 0.0
    %3612 = vrot.lane.b32.xlu0 %v3609, 64
    %v3613 = vpop.permute.xlu0 %3612
    %v3615 = vmul.f32 %v3606, %v3613
    %3617 = vrot.lane.b32.xlu0 %v3615, 64
    %v3618 = vpop.permute.xlu0 %3617
    %v3620 = vadd.f32 %v3610, %v3618
    %v3621 = vtanh.pop %v3620
    %3623 = vrot.lane.b32.xlu0 %v3621, 64
    %v3624 = vpop.permute.xlu0 %3623
    %v3626 = vmul.f32 %v3608, %v3624
    %3627 = vst.msk [vmem:[#allocation2] sm:$0xff] %vm60, %v3626
    %v3628 = vld [vmem:[%s383] sm:$0xff]
    %v3629 = vld [vmem:[%s383 + $0x8] sm:$0xff]
    %v3631 = vsel %vm60, %v3626, 0
    %3633 = vmatprep.subr.mxu0 %v3333
    %3634 = vmatpush1.msra.mxu0 %v3332
    %3635 = vmatprep.subr.mxu0 %v3335
    %3636 = vmatpush1.msra.mxu0 %v3334
    %3637 = vmatprep.subr.mxu0 %v3337
    %3638 = vmatpush1.msra.mxu0 %v3336
    %3639 = vmatprep.subr.mxu0 %v3339
    %3640 = vmatpush1.msra.mxu0 %v3338
    %3641 = vmatprep.subr.mxu0 %v3341
    %3642 = vmatpush1.msra.mxu0 %v3340
    %3643 = vmatprep.subr.mxu0 %v3343
    %3644 = vmatpush1.msra.mxu0 %v3342
    %3645 = vmatprep.subr.mxu0 %v3345
    %3646 = vmatpush1.msra.mxu0 %v3344
    %3647 = vmatprep.subr.mxu0 %v3347
    %3648 = vmatpush1.msra.mxu0 %v3346
    %3649 = vmatprep.subr.mxu0 0.0
    %3650 = vmatpush1.msra.mxu0 0.0
    %3651 = vmatprep.subr.mxu0 0.0
    %3652 = vmatpush1.msra.mxu0 0.0
    %3653 = vmatprep.subr.mxu0 0.0
    %3654 = vmatpush1.msra.mxu0 0.0
    %3655 = vmatprep.subr.mxu0 0.0
    %3656 = vmatpush1.msra.mxu0 0.0
    %3657 = vmatprep.subr.mxu0 0.0
    %3658 = vmatpush1.msra.mxu0 0.0
    %3659 = vmatprep.subr.mxu0 0.0
    %3660 = vmatpush1.msra.mxu0 0.0
    %3661 = vmatprep.subr.mxu0 0.0
    %3662 = vmatpush1.msra.mxu0 0.0
    %3663 = vmatprep.subr.mxu0 0.0
    %3664 = vmatpush1.msra.mxu0 0.0
    %3665 = vmatprep.subr.mxu0 0.0
    %3666 = vmatpush1.msra.mxu0 0.0
    %3667 = vmatprep.subr.mxu0 0.0
    %3668 = vmatpush1.msra.mxu0 0.0
    %3669 = vmatprep.subr.mxu0 0.0
    %3670 = vmatpush1.msra.mxu0 0.0
    %3671 = vmatprep.subr.mxu0 0.0
    %3672 = vmatpush1.msra.mxu0 0.0
    %3673 = vmatprep.subr.mxu0 0.0
    %3674 = vmatpush1.msra.mxu0 0.0
    %3675 = vmatprep.subr.mxu0 0.0
    %3676 = vmatpush1.msra.mxu0 0.0
    %3677 = vmatprep.subr.mxu0 0.0
    %3678 = vmatpush1.msra.mxu0 0.0
    %3679 = vmatprep.subr.mxu0 0.0
    %3680 = vmatpush1.msra.mxu0 0.0
    %3681 = vmatprep.subr.mxu0 0.0
    %3682 = vmatpush1.msra.mxu0 0.0
    %3683 = vmatprep.subr.mxu0 0.0
    %3684 = vmatpush1.msra.mxu0 0.0
    %3685 = vmatprep.subr.mxu0 0.0
    %3686 = vmatpush1.msra.mxu0 0.0
    %3687 = vmatprep.subr.mxu0 0.0
    %3688 = vmatpush1.msra.mxu0 0.0
    %3689 = vmatprep.subr.mxu0 0.0
    %3690 = vmatpush1.msra.mxu0 0.0
    %3691 = vmatprep.subr.mxu0 0.0
    %3692 = vmatpush1.msra.mxu0 0.0
    %3693 = vmatprep.subr.mxu0 0.0
    %3694 = vmatpush1.msra.mxu0 0.0
    %3695 = vmatprep.subr.mxu0 0.0
    %3696 = vmatpush1.msra.mxu0 0.0
    %3697 = vmatprep.mubr.f32.mxu0 0.0
    %3698 = vmatmul.mubr.f32.gmra.mrb[0].mxu0 %v3631
    %v3699 = vpop.f32.mrb[0].mxu0
    %v3700 = vadd.f32 0.0, %v3699
    %v3701 = vpop.f32.mrb[0].mxu0
    %v3702 = vadd.f32 0.0, %v3701
    %3703 = vdwg.mxu0
    %v3704 = vadd.f32 %v3628, %v3700
    %v3705 = vadd.f32 %v3629, %v3702
    %v3706 = vxor.u32 %v3704, 2147483648
    %v3707 = vxor.u32 %v3705, 2147483648
    %v3708 = vmul.f32 %v3706, 1.442695
    %v3709 = vpow.pop %v3708
    %v3710 = vmul.f32 %v3707, 1.442695
    %v3711 = vpow.pop %v3710
    %v3712 = vadd.f32 %v3709, 1.0
    %v3713 = vadd.f32 %v3711, 1.0
    %v3714 = vrcp.pop %v3712
    %v3715 = vmul.f32 1.0, %v3714
    %v3716 = vrcp.pop %v3713
    %v3717 = vmul.f32 1.0, %v3716
    %v3718 = vtanh.pop %v3705
    %v3719 = vmul.f32 %v3715, %v3620
    %3721 = vrot.lane.b32.xlu0 %v3718, 64
    %v3722 = vpop.permute.xlu0 %3721
    %v3724 = vmul.f32 %v3715, %v3722
    %3726 = vrot.lane.b32.xlu0 %v3724, 64
    %v3727 = vpop.permute.xlu0 %3726
    %v3729 = vadd.f32 %v3719, %v3727
    %v3730 = vtanh.pop %v3729
    %3732 = vrot.lane.b32.xlu0 %v3730, 64
    %v3733 = vpop.permute.xlu0 %3732
    %v3735 = vmul.f32 %v3717, %v3733
    %3736 = vst.msk [vmem:[%s492] sm:$0xff] %vm60, %v3735
    %v3737 = vld [vmem:[%s494] sm:$0xff]
    %v3738 = vld [vmem:[%s494 + $0x8] sm:$0xff]
    %v3740 = vsel %vm60, %v3735, 0
    %3742 = vmatprep.subr.mxu0 %v3333
    %3743 = vmatpush1.msra.mxu0 %v3332
    %3744 = vmatprep.subr.mxu0 %v3335
    %3745 = vmatpush1.msra.mxu0 %v3334
    %3746 = vmatprep.subr.mxu0 %v3337
    %3747 = vmatpush1.msra.mxu0 %v3336
    %3748 = vmatprep.subr.mxu0 %v3339
    %3749 = vmatpush1.msra.mxu0 %v3338
    %3750 = vmatprep.subr.mxu0 %v3341
    %3751 = vmatpush1.msra.mxu0 %v3340
    %3752 = vmatprep.subr.mxu0 %v3343
    %3753 = vmatpush1.msra.mxu0 %v3342
    %3754 = vmatprep.subr.mxu0 %v3345
    %3755 = vmatpush1.msra.mxu0 %v3344
    %3756 = vmatprep.subr.mxu0 %v3347
    %3757 = vmatpush1.msra.mxu0 %v3346
    %3758 = vmatprep.subr.mxu0 0.0
    %3759 = vmatpush1.msra.mxu0 0.0
    %3760 = vmatprep.subr.mxu0 0.0
    %3761 = vmatpush1.msra.mxu0 0.0
    %3762 = vmatprep.subr.mxu0 0.0
    %3763 = vmatpush1.msra.mxu0 0.0
    %3764 = vmatprep.subr.mxu0 0.0
    %3765 = vmatpush1.msra.mxu0 0.0
    %3766 = vmatprep.subr.mxu0 0.0
    %3767 = vmatpush1.msra.mxu0 0.0
    %3768 = vmatprep.subr.mxu0 0.0
    %3769 = vmatpush1.msra.mxu0 0.0
    %3770 = vmatprep.subr.mxu0 0.0
    %3771 = vmatpush1.msra.mxu0 0.0
    %3772 = vmatprep.subr.mxu0 0.0
    %3773 = vmatpush1.msra.mxu0 0.0
    %3774 = vmatprep.subr.mxu0 0.0
    %3775 = vmatpush1.msra.mxu0 0.0
    %3776 = vmatprep.subr.mxu0 0.0
    %3777 = vmatpush1.msra.mxu0 0.0
    %3778 = vmatprep.subr.mxu0 0.0
    %3779 = vmatpush1.msra.mxu0 0.0
    %3780 = vmatprep.subr.mxu0 0.0
    %3781 = vmatpush1.msra.mxu0 0.0
    %3782 = vmatprep.subr.mxu0 0.0
    %3783 = vmatpush1.msra.mxu0 0.0
    %3784 = vmatprep.subr.mxu0 0.0
    %3785 = vmatpush1.msra.mxu0 0.0
    %3786 = vmatprep.subr.mxu0 0.0
    %3787 = vmatpush1.msra.mxu0 0.0
    %3788 = vmatprep.subr.mxu0 0.0
    %3789 = vmatpush1.msra.mxu0 0.0
    %3790 = vmatprep.subr.mxu0 0.0
    %3791 = vmatpush1.msra.mxu0 0.0
    %3792 = vmatprep.subr.mxu0 0.0
    %3793 = vmatpush1.msra.mxu0 0.0
    %3794 = vmatprep.subr.mxu0 0.0
    %3795 = vmatpush1.msra.mxu0 0.0
    %3796 = vmatprep.subr.mxu0 0.0
    %3797 = vmatpush1.msra.mxu0 0.0
    %3798 = vmatprep.subr.mxu0 0.0
    %3799 = vmatpush1.msra.mxu0 0.0
    %3800 = vmatprep.subr.mxu0 0.0
    %3801 = vmatpush1.msra.mxu0 0.0
    %3802 = vmatprep.subr.mxu0 0.0
    %3803 = vmatpush1.msra.mxu0 0.0
    %3804 = vmatprep.subr.mxu0 0.0
    %3805 = vmatpush1.msra.mxu0 0.0
    %3806 = vmatprep.mubr.f32.mxu0 0.0
    %3807 = vmatmul.mubr.f32.gmra.mrb[0].mxu0 %v3740
    %v3808 = vpop.f32.mrb[0].mxu0
    %v3809 = vadd.f32 0.0, %v3808
    %v3810 = vpop.f32.mrb[0].mxu0
    %v3811 = vadd.f32 0.0, %v3810
    %3812 = vdwg.mxu0
    %v3813 = vadd.f32 %v3737, %v3809
    %v3814 = vadd.f32 %v3738, %v3811
    %v3815 = vxor.u32 %v3813, 2147483648
    %v3816 = vxor.u32 %v3814, 2147483648
    %v3817 = vmul.f32 %v3815, 1.442695
    %v3818 = vpow.pop %v3817
    %v3819 = vmul.f32 %v3816, 1.442695
    %v3820 = vpow.pop %v3819
    %v3821 = vadd.f32 %v3818, 1.0
    %v3822 = vadd.f32 %v3820, 1.0
    %v3823 = vrcp.pop %v3821
    %v3824 = vmul.f32 1.0, %v3823
    %v3825 = vrcp.pop %v3822
    %v3826 = vmul.f32 1.0, %v3825
    %v3827 = vtanh.pop %v3814
    %v3828 = vmul.f32 %v3824, %v3729
    %3830 = vrot.lane.b32.xlu0 %v3827, 64
    %v3831 = vpop.permute.xlu0 %3830
    %v3833 = vmul.f32 %v3824, %v3831
    %3835 = vrot.lane.b32.xlu0 %v3833, 64
    %v3836 = vpop.permute.xlu0 %3835
    %v3838 = vadd.f32 %v3828, %v3836
    %v3839 = vtanh.pop %v3838
    %3841 = vrot.lane.b32.xlu0 %v3839, 64
    %v3842 = vpop.permute.xlu0 %3841
    %v3844 = vmul.f32 %v3826, %v3842
    %3845 = vst.msk [vmem:[%s603] sm:$0xff] %vm60, %v3844
    %v3846 = vld [vmem:[%s605] sm:$0xff]
    %v3847 = vld [vmem:[%s605 + $0x8] sm:$0xff]
    %v3849 = vsel %vm60, %v3844, 0
    %3851 = vmatprep.subr.mxu0 %v3333
    %3852 = vmatpush1.msra.mxu0 %v3332
    %3853 = vmatprep.subr.mxu0 %v3335
    %3854 = vmatpush1.msra.mxu0 %v3334
    %3855 = vmatprep.subr.mxu0 %v3337
    %3856 = vmatpush1.msra.mxu0 %v3336
    %3857 = vmatprep.subr.mxu0 %v3339
    %3858 = vmatpush1.msra.mxu0 %v3338
    %3859 = vmatprep.subr.mxu0 %v3341
    %3860 = vmatpush1.msra.mxu0 %v3340
    %3861 = vmatprep.subr.mxu0 %v3343
    %3862 = vmatpush1.msra.mxu0 %v3342
    %3863 = vmatprep.subr.mxu0 %v3345
    %3864 = vmatpush1.msra.mxu0 %v3344
    %3865 = vmatprep.subr.mxu0 %v3347
    %3866 = vmatpush1.msra.mxu0 %v3346
    %3867 = vmatprep.subr.mxu0 0.0
    %3868 = vmatpush1.msra.mxu0 0.0
    %3869 = vmatprep.subr.mxu0 0.0
    %3870 = vmatpush1.msra.mxu0 0.0
    %3871 = vmatprep.subr.mxu0 0.0
    %3872 = vmatpush1.msra.mxu0 0.0
    %3873 = vmatprep.subr.mxu0 0.0
    %3874 = vmatpush1.msra.mxu0 0.0
    %3875 = vmatprep.subr.mxu0 0.0
    %3876 = vmatpush1.msra.mxu0 0.0
    %3877 = vmatprep.subr.mxu0 0.0
    %3878 = vmatpush1.msra.mxu0 0.0
    %3879 = vmatprep.subr.mxu0 0.0
    %3880 = vmatpush1.msra.mxu0 0.0
    %3881 = vmatprep.subr.mxu0 0.0
    %3882 = vmatpush1.msra.mxu0 0.0
    %3883 = vmatprep.subr.mxu0 0.0
    %3884 = vmatpush1.msra.mxu0 0.0
    %3885 = vmatprep.subr.mxu0 0.0
    %3886 = vmatpush1.msra.mxu0 0.0
    %3887 = vmatprep.subr.mxu0 0.0
    %3888 = vmatpush1.msra.mxu0 0.0
    %3889 = vmatprep.subr.mxu0 0.0
    %3890 = vmatpush1.msra.mxu0 0.0
    %3891 = vmatprep.subr.mxu0 0.0
    %3892 = vmatpush1.msra.mxu0 0.0
    %3893 = vmatprep.subr.mxu0 0.0
    %3894 = vmatpush1.msra.mxu0 0.0
    %3895 = vmatprep.subr.mxu0 0.0
    %3896 = vmatpush1.msra.mxu0 0.0
    %3897 = vmatprep.subr.mxu0 0.0
    %3898 = vmatpush1.msra.mxu0 0.0
    %3899 = vmatprep.subr.mxu0 0.0
    %3900 = vmatpush1.msra.mxu0 0.0
    %3901 = vmatprep.subr.mxu0 0.0
    %3902 = vmatpush1.msra.mxu0 0.0
    %3903 = vmatprep.subr.mxu0 0.0
    %3904 = vmatpush1.msra.mxu0 0.0
    %3905 = vmatprep.subr.mxu0 0.0
    %3906 = vmatpush1.msra.mxu0 0.0
    %3907 = vmatprep.subr.mxu0 0.0
    %3908 = vmatpush1.msra.mxu0 0.0
    %3909 = vmatprep.subr.mxu0 0.0
    %3910 = vmatpush1.msra.mxu0 0.0
    %3911 = vmatprep.subr.mxu0 0.0
    %3912 = vmatpush1.msra.mxu0 0.0
    %3913 = vmatprep.subr.mxu0 0.0
    %3914 = vmatpush1.msra.mxu0 0.0
    %3915 = vmatprep.mubr.f32.mxu0 0.0
    %3916 = vmatmul.mubr.f32.gmra.mrb[0].mxu0 %v3849
    %v3917 = vpop.f32.mrb[0].mxu0
    %v3918 = vadd.f32 0.0, %v3917
    %v3919 = vpop.f32.mrb[0].mxu0
    %v3920 = vadd.f32 0.0, %v3919
    %3921 = vdwg.mxu0
    %v3922 = vadd.f32 %v3846, %v3918
    %v3923 = vadd.f32 %v3847, %v3920
    %v3924 = vxor.u32 %v3922, 2147483648
    %v3925 = vxor.u32 %v3923, 2147483648
    %v3926 = vmul.f32 %v3924, 1.442695
    %v3927 = vpow.pop %v3926
    %v3928 = vmul.f32 %v3925, 1.442695
    %v3929 = vpow.pop %v3928
    %v3930 = vadd.f32 %v3927, 1.0
    %v3931 = vadd.f32 %v3929, 1.0
    %v3932 = vrcp.pop %v3930
    %v3933 = vmul.f32 1.0, %v3932
    %v3934 = vrcp.pop %v3931
    %v3935 = vmul.f32 1.0, %v3934
    %v3936 = vtanh.pop %v3923
    %v3937 = vmul.f32 %v3933, %v3838
    %3939 = vrot.lane.b32.xlu0 %v3936, 64
    %v3940 = vpop.permute.xlu0 %3939
    %v3942 = vmul.f32 %v3933, %v3940
    %3944 = vrot.lane.b32.xlu0 %v3942, 64
    %v3945 = vpop.permute.xlu0 %3944
    %v3947 = vadd.f32 %v3937, %v3945
    %v3948 = vtanh.pop %v3947
    %3950 = vrot.lane.b32.xlu0 %v3948, 64
    %v3951 = vpop.permute.xlu0 %3950
    %v3953 = vmul.f32 %v3935, %v3951
    %3954 = vst.msk [vmem:[%s714] sm:$0xff] %vm60, %v3953
    %v3955 = vld [vmem:[%s716] sm:$0xff]
    %v3956 = vld [vmem:[%s716 + $0x8] sm:$0xff]
    %v3958 = vsel %vm60, %v3953, 0
    %3960 = vmatprep.subr.mxu0 %v3333
    %3961 = vmatpush1.msra.mxu0 %v3332
    %3962 = vmatprep.subr.mxu0 %v3335
    %3963 = vmatpush1.msra.mxu0 %v3334
    %3964 = vmatprep.subr.mxu0 %v3337
    %3965 = vmatpush1.msra.mxu0 %v3336
    %3966 = vmatprep.subr.mxu0 %v3339
    %3967 = vmatpush1.msra.mxu0 %v3338
    %3968 = vmatprep.subr.mxu0 %v3341
    %3969 = vmatpush1.msra.mxu0 %v3340
    %3970 = vmatprep.subr.mxu0 %v3343
    %3971 = vmatpush1.msra.mxu0 %v3342
    %3972 = vmatprep.subr.mxu0 %v3345
    %3973 = vmatpush1.msra.mxu0 %v3344
    %3974 = vmatprep.subr.mxu0 %v3347
    %3975 = vmatpush1.msra.mxu0 %v3346
    %3976 = vmatprep.subr.mxu0 0.0
    %3977 = vmatpush1.msra.mxu0 0.0
    %3978 = vmatprep.subr.mxu0 0.0
    %3979 = vmatpush1.msra.mxu0 0.0
    %3980 = vmatprep.subr.mxu0 0.0
    %3981 = vmatpush1.msra.mxu0 0.0
    %3982 = vmatprep.subr.mxu0 0.0
    %3983 = vmatpush1.msra.mxu0 0.0
    %3984 = vmatprep.subr.mxu0 0.0
    %3985 = vmatpush1.msra.mxu0 0.0
    %3986 = vmatprep.subr.mxu0 0.0
    %3987 = vmatpush1.msra.mxu0 0.0
    %3988 = vmatprep.subr.mxu0 0.0
    %3989 = vmatpush1.msra.mxu0 0.0
    %3990 = vmatprep.subr.mxu0 0.0
    %3991 = vmatpush1.msra.mxu0 0.0
    %3992 = vmatprep.subr.mxu0 0.0
    %3993 = vmatpush1.msra.mxu0 0.0
    %3994 = vmatprep.subr.mxu0 0.0
    %3995 = vmatpush1.msra.mxu0 0.0
    %3996 = vmatprep.subr.mxu0 0.0
    %3997 = vmatpush1.msra.mxu0 0.0
    %3998 = vmatprep.subr.mxu0 0.0
    %3999 = vmatpush1.msra.mxu0 0.0
    %4000 = vmatprep.subr.mxu0 0.0
    %4001 = vmatpush1.msra.mxu0 0.0
    %4002 = vmatprep.subr.mxu0 0.0
    %4003 = vmatpush1.msra.mxu0 0.0
    %4004 = vmatprep.subr.mxu0 0.0
    %4005 = vmatpush1.msra.mxu0 0.0
    %4006 = vmatprep.subr.mxu0 0.0
    %4007 = vmatpush1.msra.mxu0 0.0
    %4008 = vmatprep.subr.mxu0 0.0
    %4009 = vmatpush1.msra.mxu0 0.0
    %4010 = vmatprep.subr.mxu0 0.0
    %4011 = vmatpush1.msra.mxu0 0.0
    %4012 = vmatprep.subr.mxu0 0.0
    %4013 = vmatpush1.msra.mxu0 0.0
    %4014 = vmatprep.subr.mxu0 0.0
    %4015 = vmatpush1.msra.mxu0 0.0
    %4016 = vmatprep.subr.mxu0 0.0
    %4017 = vmatpush1.msra.mxu0 0.0
    %4018 = vmatprep.subr.mxu0 0.0
    %4019 = vmatpush1.msra.mxu0 0.0
    %4020 = vmatprep.subr.mxu0 0.0
    %4021 = vmatpush1.msra.mxu0 0.0
    %4022 = vmatprep.subr.mxu0 0.0
    %4023 = vmatpush1.msra.mxu0 0.0
    %4024 = vmatprep.mubr.f32.mxu0 0.0
    %4025 = vmatmul.mubr.f32.gmra.mrb[0].mxu0 %v3958
    %v4026 = vpop.f32.mrb[0].mxu0
    %v4027 = vadd.f32 0.0, %v4026
    %v4028 = vpop.f32.mrb[0].mxu0
    %v4029 = vadd.f32 0.0, %v4028
    %4030 = vdwg.mxu0
    %v4031 = vadd.f32 %v3955, %v4027
    %v4032 = vadd.f32 %v3956, %v4029
    %v4033 = vxor.u32 %v4031, 2147483648
    %v4034 = vxor.u32 %v4032, 2147483648
    %v4035 = vmul.f32 %v4033, 1.442695
    %v4036 = vpow.pop %v4035
    %v4037 = vmul.f32 %v4034, 1.442695
    %v4038 = vpow.pop %v4037
    %v4039 = vadd.f32 %v4036, 1.0
    %v4040 = vadd.f32 %v4038, 1.0
    %v4041 = vrcp.pop %v4039
    %v4042 = vmul.f32 1.0, %v4041
    %v4043 = vrcp.pop %v4040
    %v4044 = vmul.f32 1.0, %v4043
    %v4045 = vtanh.pop %v4032
    %v4046 = vmul.f32 %v4042, %v3947
    %4048 = vrot.lane.b32.xlu0 %v4045, 64
    %v4049 = vpop.permute.xlu0 %4048
    %v4051 = vmul.f32 %v4042, %v4049
    %4053 = vrot.lane.b32.xlu0 %v4051, 64
    %v4054 = vpop.permute.xlu0 %4053
    %v4056 = vadd.f32 %v4046, %v4054
    %v4057 = vtanh.pop %v4056
    %4059 = vrot.lane.b32.xlu0 %v4057, 64
    %v4060 = vpop.permute.xlu0 %4059
    %v4062 = vmul.f32 %v4044, %v4060
    %4063 = vst.msk [vmem:[%s825] sm:$0xff] %vm60, %v4062
    %v4064 = vld [vmem:[%s827] sm:$0xff]
    %v4065 = vld [vmem:[%s827 + $0x8] sm:$0xff]
    %v4067 = vsel %vm60, %v4062, 0
    %4069 = vmatprep.subr.mxu0 %v3333
    %4070 = vmatpush1.msra.mxu0 %v3332
    %4071 = vmatprep.subr.mxu0 %v3335
    %4072 = vmatpush1.msra.mxu0 %v3334
    %4073 = vmatprep.subr.mxu0 %v3337
    %4074 = vmatpush1.msra.mxu0 %v3336
    %4075 = vmatprep.subr.mxu0 %v3339
    %4076 = vmatpush1.msra.mxu0 %v3338
    %4077 = vmatprep.subr.mxu0 %v3341
    %4078 = vmatpush1.msra.mxu0 %v3340
    %4079 = vmatprep.subr.mxu0 %v3343
    %4080 = vmatpush1.msra.mxu0 %v3342
    %4081 = vmatprep.subr.mxu0 %v3345
    %4082 = vmatpush1.msra.mxu0 %v3344
    %4083 = vmatprep.subr.mxu0 %v3347
    %4084 = vmatpush1.msra.mxu0 %v3346
    %4085 = vmatprep.subr.mxu0 0.0
    %4086 = vmatpush1.msra.mxu0 0.0
    %4087 = vmatprep.subr.mxu0 0.0
    %4088 = vmatpush1.msra.mxu0 0.0
    %4089 = vmatprep.subr.mxu0 0.0
    %4090 = vmatpush1.msra.mxu0 0.0
    %4091 = vmatprep.subr.mxu0 0.0
    %4092 = vmatpush1.msra.mxu0 0.0
    %4093 = vmatprep.subr.mxu0 0.0
    %4094 = vmatpush1.msra.mxu0 0.0
    %4095 = vmatprep.subr.mxu0 0.0
    %4096 = vmatpush1.msra.mxu0 0.0
    %4097 = vmatprep.subr.mxu0 0.0
    %4098 = vmatpush1.msra.mxu0 0.0
    %4099 = vmatprep.subr.mxu0 0.0
    %4100 = vmatpush1.msra.mxu0 0.0
    %4101 = vmatprep.subr.mxu0 0.0
    %4102 = vmatpush1.msra.mxu0 0.0
    %4103 = vmatprep.subr.mxu0 0.0
    %4104 = vmatpush1.msra.mxu0 0.0
    %4105 = vmatprep.subr.mxu0 0.0
    %4106 = vmatpush1.msra.mxu0 0.0
    %4107 = vmatprep.subr.mxu0 0.0
    %4108 = vmatpush1.msra.mxu0 0.0
    %4109 = vmatprep.subr.mxu0 0.0
    %4110 = vmatpush1.msra.mxu0 0.0
    %4111 = vmatprep.subr.mxu0 0.0
    %4112 = vmatpush1.msra.mxu0 0.0
    %4113 = vmatprep.subr.mxu0 0.0
    %4114 = vmatpush1.msra.mxu0 0.0
    %4115 = vmatprep.subr.mxu0 0.0
    %4116 = vmatpush1.msra.mxu0 0.0
    %4117 = vmatprep.subr.mxu0 0.0
    %4118 = vmatpush1.msra.mxu0 0.0
    %4119 = vmatprep.subr.mxu0 0.0
    %4120 = vmatpush1.msra.mxu0 0.0
    %4121 = vmatprep.subr.mxu0 0.0
    %4122 = vmatpush1.msra.mxu0 0.0
    %4123 = vmatprep.subr.mxu0 0.0
    %4124 = vmatpush1.msra.mxu0 0.0
    %4125 = vmatprep.subr.mxu0 0.0
    %4126 = vmatpush1.msra.mxu0 0.0
    %4127 = vmatprep.subr.mxu0 0.0
    %4128 = vmatpush1.msra.mxu0 0.0
    %4129 = vmatprep.subr.mxu0 0.0
    %4130 = vmatpush1.msra.mxu0 0.0
    %4131 = vmatprep.subr.mxu0 0.0
    %4132 = vmatpush1.msra.mxu0 0.0
    %4133 = vmatprep.mubr.f32.mxu0 0.0
    %4134 = vmatmul.mubr.f32.gmra.mrb[0].mxu0 %v4067
    %v4135 = vpop.f32.mrb[0].mxu0
    %v4136 = vadd.f32 0.0, %v4135
    %v4137 = vpop.f32.mrb[0].mxu0
    %v4138 = vadd.f32 0.0, %v4137
    %4139 = vdwg.mxu0
    %v4140 = vadd.f32 %v4064, %v4136
    %v4141 = vadd.f32 %v4065, %v4138
    %v4142 = vxor.u32 %v4140, 2147483648
    %v4143 = vxor.u32 %v4141, 2147483648
    %v4144 = vmul.f32 %v4142, 1.442695
    %v4145 = vpow.pop %v4144
    %v4146 = vmul.f32 %v4143, 1.442695
    %v4147 = vpow.pop %v4146
    %v4148 = vadd.f32 %v4145, 1.0
    %v4149 = vadd.f32 %v4147, 1.0
    %v4150 = vrcp.pop %v4148
    %v4151 = vmul.f32 1.0, %v4150
    %v4152 = vrcp.pop %v4149
    %v4153 = vmul.f32 1.0, %v4152
    %v4154 = vtanh.pop %v4141
    %v4155 = vmul.f32 %v4151, %v4056
    %4157 = vrot.lane.b32.xlu0 %v4154, 64
    %v4158 = vpop.permute.xlu0 %4157
    %v4160 = vmul.f32 %v4151, %v4158
    %4162 = vrot.lane.b32.xlu0 %v4160, 64
    %v4163 = vpop.permute.xlu0 %4162
    %v4165 = vadd.f32 %v4155, %v4163
    %v4166 = vtanh.pop %v4165
    %4168 = vrot.lane.b32.xlu0 %v4166, 64
    %v4169 = vpop.permute.xlu0 %4168
    %v4171 = vmul.f32 %v4153, %v4169
    %4172 = vst.msk [vmem:[%s936] sm:$0xff] %vm60, %v4171
    %v4173 = vld [vmem:[%s938] sm:$0xff]
    %v4174 = vld [vmem:[%s938 + $0x8] sm:$0xff]
    %v4176 = vsel %vm60, %v4171, 0
    %4178 = vmatprep.subr.mxu0 %v3333
    %4179 = vmatpush1.msra.mxu0 %v3332
    %4180 = vmatprep.subr.mxu0 %v3335
    %4181 = vmatpush1.msra.mxu0 %v3334
    %4182 = vmatprep.subr.mxu0 %v3337
    %4183 = vmatpush1.msra.mxu0 %v3336
    %4184 = vmatprep.subr.mxu0 %v3339
    %4185 = vmatpush1.msra.mxu0 %v3338
    %4186 = vmatprep.subr.mxu0 %v3341
    %4187 = vmatpush1.msra.mxu0 %v3340
    %4188 = vmatprep.subr.mxu0 %v3343
    %4189 = vmatpush1.msra.mxu0 %v3342
    %4190 = vmatprep.subr.mxu0 %v3345
    %4191 = vmatpush1.msra.mxu0 %v3344
    %4192 = vmatprep.subr.mxu0 %v3347
    %4193 = vmatpush1.msra.mxu0 %v3346
    %4194 = vmatprep.subr.mxu0 0.0
    %4195 = vmatpush1.msra.mxu0 0.0
    %4196 = vmatprep.subr.mxu0 0.0
    %4197 = vmatpush1.msra.mxu0 0.0
    %4198 = vmatprep.subr.mxu0 0.0
    %4199 = vmatpush1.msra.mxu0 0.0
    %4200 = vmatprep.subr.mxu0 0.0
    %4201 = vmatpush1.msra.mxu0 0.0
    %4202 = vmatprep.subr.mxu0 0.0
    %4203 = vmatpush1.msra.mxu0 0.0
    %4204 = vmatprep.subr.mxu0 0.0
    %4205 = vmatpush1.msra.mxu0 0.0
    %4206 = vmatprep.subr.mxu0 0.0
    %4207 = vmatpush1.msra.mxu0 0.0
    %4208 = vmatprep.subr.mxu0 0.0
    %4209 = vmatpush1.msra.mxu0 0.0
    %4210 = vmatprep.subr.mxu0 0.0
    %4211 = vmatpush1.msra.mxu0 0.0
    %4212 = vmatprep.subr.mxu0 0.0
    %4213 = vmatpush1.msra.mxu0 0.0
    %4214 = vmatprep.subr.mxu0 0.0
    %4215 = vmatpush1.msra.mxu0 0.0
    %4216 = vmatprep.subr.mxu0 0.0
    %4217 = vmatpush1.msra.mxu0 0.0
    %4218 = vmatprep.subr.mxu0 0.0
    %4219 = vmatpush1.msra.mxu0 0.0
    %4220 = vmatprep.subr.mxu0 0.0
    %4221 = vmatpush1.msra.mxu0 0.0
    %4222 = vmatprep.subr.mxu0 0.0
    %4223 = vmatpush1.msra.mxu0 0.0
    %4224 = vmatprep.subr.mxu0 0.0
    %4225 = vmatpush1.msra.mxu0 0.0
    %4226 = vmatprep.subr.mxu0 0.0
    %4227 = vmatpush1.msra.mxu0 0.0
    %4228 = vmatprep.subr.mxu0 0.0
    %4229 = vmatpush1.msra.mxu0 0.0
    %4230 = vmatprep.subr.mxu0 0.0
    %4231 = vmatpush1.msra.mxu0 0.0
    %4232 = vmatprep.subr.mxu0 0.0
    %4233 = vmatpush1.msra.mxu0 0.0
    %4234 = vmatprep.subr.mxu0 0.0
    %4235 = vmatpush1.msra.mxu0 0.0
    %4236 = vmatprep.subr.mxu0 0.0
    %4237 = vmatpush1.msra.mxu0 0.0
    %4238 = vmatprep.subr.mxu0 0.0
    %4239 = vmatpush1.msra.mxu0 0.0
    %4240 = vmatprep.subr.mxu0 0.0
    %4241 = vmatpush1.msra.mxu0 0.0
    %4242 = vmatprep.mubr.f32.mxu0 0.0
    %4243 = vmatmul.mubr.f32.gmra.mrb[0].mxu0 %v4176
    %v4244 = vpop.f32.mrb[0].mxu0
    %v4245 = vadd.f32 0.0, %v4244
    %v4246 = vpop.f32.mrb[0].mxu0
    %v4247 = vadd.f32 0.0, %v4246
    %4248 = vdwg.mxu0
    %v4249 = vadd.f32 %v4173, %v4245
    %v4250 = vadd.f32 %v4174, %v4247
    %v4251 = vxor.u32 %v4249, 2147483648
    %v4252 = vxor.u32 %v4250, 2147483648
    %v4253 = vmul.f32 %v4251, 1.442695
    %v4254 = vpow.pop %v4253
    %v4255 = vmul.f32 %v4252, 1.442695
    %v4256 = vpow.pop %v4255
    %v4257 = vadd.f32 %v4254, 1.0
    %v4258 = vadd.f32 %v4256, 1.0
    %v4259 = vrcp.pop %v4257
    %v4260 = vmul.f32 1.0, %v4259
    %v4261 = vrcp.pop %v4258
    %v4262 = vmul.f32 1.0, %v4261
    %v4263 = vtanh.pop %v4250
    %v4264 = vmul.f32 %v4260, %v4165
    %4266 = vrot.lane.b32.xlu0 %v4263, 64
    %v4267 = vpop.permute.xlu0 %4266
    %v4269 = vmul.f32 %v4260, %v4267
    %4271 = vrot.lane.b32.xlu0 %v4269, 64
    %v4272 = vpop.permute.xlu0 %4271
    %v4274 = vadd.f32 %v4264, %v4272
    %v4275 = vtanh.pop %v4274
    %4277 = vrot.lane.b32.xlu0 %v4275, 64
    %v4278 = vpop.permute.xlu0 %4277
    %v4280 = vmul.f32 %v4262, %v4278
    %4281 = vst.msk [vmem:[%s1047] sm:$0xff] %vm60, %v4280
    %v4282 = vld [vmem:[%s1049] sm:$0xff]
    %v4283 = vld [vmem:[%s1049 + $0x8] sm:$0xff]
    %v4285 = vsel %vm60, %v4280, 0
    %4287 = vmatprep.subr.mxu0 %v3333
    %4288 = vmatpush1.msra.mxu0 %v3332
    %4289 = vmatprep.subr.mxu0 %v3335
    %4290 = vmatpush1.msra.mxu0 %v3334
    %4291 = vmatprep.subr.mxu0 %v3337
    %4292 = vmatpush1.msra.mxu0 %v3336
    %4293 = vmatprep.subr.mxu0 %v3339
    %4294 = vmatpush1.msra.mxu0 %v3338
    %4295 = vmatprep.subr.mxu0 %v3341
    %4296 = vmatpush1.msra.mxu0 %v3340
    %4297 = vmatprep.subr.mxu0 %v3343
    %4298 = vmatpush1.msra.mxu0 %v3342
    %4299 = vmatprep.subr.mxu0 %v3345
    %4300 = vmatpush1.msra.mxu0 %v3344
    %4301 = vmatprep.subr.mxu0 %v3347
    %4302 = vmatpush1.msra.mxu0 %v3346
    %4303 = vmatprep.subr.mxu0 0.0
    %4304 = vmatpush1.msra.mxu0 0.0
    %4305 = vmatprep.subr.mxu0 0.0
    %4306 = vmatpush1.msra.mxu0 0.0
    %4307 = vmatprep.subr.mxu0 0.0
    %4308 = vmatpush1.msra.mxu0 0.0
    %4309 = vmatprep.subr.mxu0 0.0
    %4310 = vmatpush1.msra.mxu0 0.0
    %4311 = vmatprep.subr.mxu0 0.0
    %4312 = vmatpush1.msra.mxu0 0.0
    %4313 = vmatprep.subr.mxu0 0.0
    %4314 = vmatpush1.msra.mxu0 0.0
    %4315 = vmatprep.subr.mxu0 0.0
    %4316 = vmatpush1.msra.mxu0 0.0
    %4317 = vmatprep.subr.mxu0 0.0
    %4318 = vmatpush1.msra.mxu0 0.0
    %4319 = vmatprep.subr.mxu0 0.0
    %4320 = vmatpush1.msra.mxu0 0.0
    %4321 = vmatprep.subr.mxu0 0.0
    %4322 = vmatpush1.msra.mxu0 0.0
    %4323 = vmatprep.subr.mxu0 0.0
    %4324 = vmatpush1.msra.mxu0 0.0
    %4325 = vmatprep.subr.mxu0 0.0
    %4326 = vmatpush1.msra.mxu0 0.0
    %4327 = vmatprep.subr.mxu0 0.0
    %4328 = vmatpush1.msra.mxu0 0.0
    %4329 = vmatprep.subr.mxu0 0.0
    %4330 = vmatpush1.msra.mxu0 0.0
    %4331 = vmatprep.subr.mxu0 0.0
    %4332 = vmatpush1.msra.mxu0 0.0
    %4333 = vmatprep.subr.mxu0 0.0
    %4334 = vmatpush1.msra.mxu0 0.0
    %4335 = vmatprep.subr.mxu0 0.0
    %4336 = vmatpush1.msra.mxu0 0.0
    %4337 = vmatprep.subr.mxu0 0.0
    %4338 = vmatpush1.msra.mxu0 0.0
    %4339 = vmatprep.subr.mxu0 0.0
    %4340 = vmatpush1.msra.mxu0 0.0
    %4341 = vmatprep.subr.mxu0 0.0
    %4342 = vmatpush1.msra.mxu0 0.0
    %4343 = vmatprep.subr.mxu0 0.0
    %4344 = vmatpush1.msra.mxu0 0.0
    %4345 = vmatprep.subr.mxu0 0.0
    %4346 = vmatpush1.msra.mxu0 0.0
    %4347 = vmatprep.subr.mxu0 0.0
    %4348 = vmatpush1.msra.mxu0 0.0
    %4349 = vmatprep.subr.mxu0 0.0
    %4350 = vmatpush1.msra.mxu0 0.0
    %4351 = vmatprep.mubr.f32.mxu0 0.0
    %4352 = vmatmul.mubr.f32.gmra.mrb[0].mxu0 %v4285
    %v4353 = vpop.f32.mrb[0].mxu0
    %v4354 = vadd.f32 0.0, %v4353
    %v4355 = vpop.f32.mrb[0].mxu0
    %v4356 = vadd.f32 0.0, %v4355
    %4357 = vdwg.mxu0
    %v4358 = vadd.f32 %v4282, %v4354
    %v4359 = vadd.f32 %v4283, %v4356
    %v4360 = vxor.u32 %v4358, 2147483648
    %v4361 = vxor.u32 %v4359, 2147483648
    %v4362 = vmul.f32 %v4360, 1.442695
    %v4363 = vpow.pop %v4362
    %v4364 = vmul.f32 %v4361, 1.442695
    %v4365 = vpow.pop %v4364
    %v4366 = vadd.f32 %v4363, 1.0
    %v4367 = vadd.f32 %v4365, 1.0
    %v4368 = vrcp.pop %v4366
    %v4369 = vmul.f32 1.0, %v4368
    %v4370 = vrcp.pop %v4367
    %v4371 = vmul.f32 1.0, %v4370
    %v4372 = vtanh.pop %v4359
    %v4373 = vmul.f32 %v4369, %v4274
    %4375 = vrot.lane.b32.xlu0 %v4372, 64
    %v4376 = vpop.permute.xlu0 %4375
    %v4378 = vmul.f32 %v4369, %v4376
    %4380 = vrot.lane.b32.xlu0 %v4378, 64
    %v4381 = vpop.permute.xlu0 %4380
    %v4383 = vadd.f32 %v4373, %v4381
    %v4384 = vtanh.pop %v4383
    %4386 = vrot.lane.b32.xlu0 %v4384, 64
    %v4387 = vpop.permute.xlu0 %4386
    %v4389 = vmul.f32 %v4371, %v4387
    %4390 = vst.msk [vmem:[%s1158] sm:$0xff] %vm60, %v4389
    %v4391 = vld [vmem:[%s1158] sm:$0xff]
    %v4392 = vld [vmem:[%s4] sm:$0xff]
    %v4393 = vld [vmem:[%s4 + $0x8] sm:$0xff]
    %v4394 = vld [vmem:[%s4 + $0x10] sm:$0xff]
    %v4395 = vld [vmem:[%s4 + $0x18] sm:$0xff]
    %v4396 = vld [vmem:[%s4 + $0x20] sm:$0xff]
    %v4397 = vld [vmem:[%s4 + $0x28] sm:$0xff]
    %v4398 = vld [vmem:[%s4 + $0x30] sm:$0xff]
    %v4399 = vld [vmem:[%s4 + $0x38] sm:$0xff]
    %v4400 = vld [vmem:[%s5] sm:$0x1]
    %v4402 = vlaneseq
    %v4403 = vshrl.u32 %v4402, 7
    %v4404 = vsub.s32 0, %v4403
    %v4405 = vrot.slane %v4400, %v4404
    %v4408 = vsel %vm60, %v4391, 0
    %4410 = vmatprep.subr.mxu0 0.0
    %4411 = vmatpush1.msra.mxu0 %v4392
    %4412 = vmatprep.subr.mxu0 0.0
    %4413 = vmatpush1.msra.mxu0 %v4393
    %4414 = vmatprep.subr.mxu0 0.0
    %4415 = vmatpush1.msra.mxu0 %v4394
    %4416 = vmatprep.subr.mxu0 0.0
    %4417 = vmatpush1.msra.mxu0 %v4395
    %4418 = vmatprep.subr.mxu0 0.0
    %4419 = vmatpush1.msra.mxu0 %v4396
    %4420 = vmatprep.subr.mxu0 0.0
    %4421 = vmatpush1.msra.mxu0 %v4397
    %4422 = vmatprep.subr.mxu0 0.0
    %4423 = vmatpush1.msra.mxu0 %v4398
    %4424 = vmatprep.subr.mxu0 0.0
    %4425 = vmatpush1.msra.mxu0 %v4399
    %4426 = vmatprep.subr.mxu0 0.0
    %4427 = vmatpush1.msra.mxu0 0.0
    %4428 = vmatprep.subr.mxu0 0.0
    %4429 = vmatpush1.msra.mxu0 0.0
    %4430 = vmatprep.subr.mxu0 0.0
    %4431 = vmatpush1.msra.mxu0 0.0
    %4432 = vmatprep.subr.mxu0 0.0
    %4433 = vmatpush1.msra.mxu0 0.0
    %4434 = vmatprep.subr.mxu0 0.0
    %4435 = vmatpush1.msra.mxu0 0.0
    %4436 = vmatprep.subr.mxu0 0.0
    %4437 = vmatpush1.msra.mxu0 0.0
    %4438 = vmatprep.subr.mxu0 0.0
    %4439 = vmatpush1.msra.mxu0 0.0
    %4440 = vmatprep.subr.mxu0 0.0
    %4441 = vmatpush1.msra.mxu0 0.0
    %4442 = vmatprep.subr.mxu0 0.0
    %4443 = vmatpush1.msra.mxu0 0.0
    %4444 = vmatprep.subr.mxu0 0.0
    %4445 = vmatpush1.msra.mxu0 0.0
    %4446 = vmatprep.subr.mxu0 0.0
    %4447 = vmatpush1.msra.mxu0 0.0
    %4448 = vmatprep.subr.mxu0 0.0
    %4449 = vmatpush1.msra.mxu0 0.0
    %4450 = vmatprep.subr.mxu0 0.0
    %4451 = vmatpush1.msra.mxu0 0.0
    %4452 = vmatprep.subr.mxu0 0.0
    %4453 = vmatpush1.msra.mxu0 0.0
    %4454 = vmatprep.subr.mxu0 0.0
    %4455 = vmatpush1.msra.mxu0 0.0
    %4456 = vmatprep.subr.mxu0 0.0
    %4457 = vmatpush1.msra.mxu0 0.0
    %4458 = vmatprep.subr.mxu0 0.0
    %4459 = vmatpush1.msra.mxu0 0.0
    %4460 = vmatprep.subr.mxu0 0.0
    %4461 = vmatpush1.msra.mxu0 0.0
    %4462 = vmatprep.subr.mxu0 0.0
    %4463 = vmatpush1.msra.mxu0 0.0
    %4464 = vmatprep.subr.mxu0 0.0
    %4465 = vmatpush1.msra.mxu0 0.0
    %4466 = vmatprep.subr.mxu0 0.0
    %4467 = vmatpush1.msra.mxu0 0.0
    %4468 = vmatprep.subr.mxu0 0.0
    %4469 = vmatpush1.msra.mxu0 0.0
    %4470 = vmatprep.subr.mxu0 0.0
    %4471 = vmatpush1.msra.mxu0 0.0
    %4472 = vmatprep.subr.mxu0 0.0
    %4473 = vmatpush1.msra.mxu0 0.0
    %4474 = vmatprep.mubr.f32.mxu0 0.0
    %4475 = vmatmul.mubr.f32.gmra.mrb[0].mxu0 %v4408
    %v4476 = vpop.f32.mrb[0].mxu0
    %v4477 = vadd.f32 %v4405, %v4476
    %v4478 = vpop.f32.mrb[0].mxu0
    %4479 = vdwg.mxu0
    %vm4480 = vcmask 80896
    %4481 = vst.msk [vmem:[#allocation9] sm:$0xff] %vm4480, %v4477
    // Predicated region
    $region34: #{tpu_custom_call.1} parent=1 // pred_check
      _
    $region35: #{tpu_custom_call.1} parent=1 // pred_check_branch
      %4483 = sbr.rel (0) target = $region37
    $region36: #{tpu_custom_call.1} parent=1 // pred_region
      %s4485 = ssub.s32 128, 128
      %4486 = vsyncadd [#allocation6], %s4485
      %s4488 = sshll.u32 [#allocation9], 4
      %s4489 = int_to_ptr.vmem [resolvable:$true] %s4488
      %4491 = dma.vmem_to_hbm [thread:$0]  %s4489, 128, %s6, [#allocation6]
    $region37: #{tpu_custom_call.1} parent=1 // pred_fallthru
      _
    // Predicated region
    $region38: #{tpu_custom_call.1} parent=1 // pred_check
      _
    $region39: #{tpu_custom_call.1} parent=1 // pred_check_branch
      %4493 = sbr.rel (0) target = $region41
    $region40: #{tpu_custom_call.1} parent=1 // pred_region
      %4494 = dma.done [#allocation6], 128
    $region41: #{tpu_custom_call.1} parent=1 // pred_fallthru
      _
    %4495 = vsyncpa [#allocation5], 1
    %4496 = vsyncpa [#allocation8], 1
    %4497 = vsyncpa [#allocation6], 1

</llo_original>
